<compile_context>
chip_gen: v7x
topology: tpu7x:2x2x1
jax: 0.10.0
libtpu: 0.0.40
codegen_flags: <defaults>
</compile_context>

<pallas_src>
import math
from functools import partial

import jax
import jax.numpy as jnp
from jax.experimental import pallas as pl
from jax.experimental.pallas import tpu as pltpu


def _vmem_limit(block_bytes):
    # double-buffered blocks + headroom for in-kernel intermediates, clamped so the
    # request stays sane on v5e (16 MiB default scoped) .. v7x (64 MiB physical).
    return int(min(max(2 * block_bytes + (8 << 20), 32 << 20), 64 << 20))


# ----------------------------------------------------------------------------
# Kernel 1: fused  Q-proj + KV-proj + batched multi-head attention + residual + MLP
# ----------------------------------------------------------------------------
def _attn_mlp_kernel(qg_ref, kg_ref, x1_ref, qw_ref, qb_ref, kvw_ref, kvb_ref,
                     fc1w_ref, fc1b_ref, fc2w_ref, fc2b_ref, o_ref, *, nhead):
    f32, bf16 = jnp.float32, jnp.bfloat16
    qg = qg_ref[0]                       # (Nq, C) f32  pooled x1 tokens + pos enc
    kg = kg_ref[0]                       # (Nk, C) f32  pooled x2 tokens + pos enc
    x1 = x1_ref[0]                       # (Nq, C) f32  pooled x1 tokens (no pos enc)

    # Projections: bf16 MXU operands, f32 accumulation. K and V fused into one (C, 2C) matmul.
    q = jnp.dot(qg.astype(bf16), qw_ref[...], preferred_element_type=f32) + qb_ref[...]
    kv = jnp.dot(kg.astype(bf16), kvw_ref[...], preferred_element_type=f32) + kvb_ref[...]

    Nq, C = q.shape
    Nk = kv.shape[0]
    Dh = C // nhead
    k = kv[:, :C]
    v = kv[:, C:]

    # Heads as a leading batch dim -> ONE batched MXU contraction per matmul
    # (no per-head loop, no lane-width-Dh concatenate).
    q3 = jnp.transpose(q.reshape(Nq, nhead, Dh), (1, 0, 2)).astype(bf16)   # (h, Nq, Dh)
    k3 = jnp.transpose(k.reshape(Nk, nhead, Dh), (1, 0, 2)).astype(bf16)   # (h, Nk, Dh)
    v3 = jnp.transpose(v.reshape(Nk, nhead, Dh), (1, 0, 2)).astype(bf16)   # (h, Nk, Dh)

    # scores (no 1/sqrt(Dh) scaling -- matches the PyTorch module), softmax in f32
    s = jnp.einsum("hqd,hkd->hqk", q3, k3, preferred_element_type=f32)     # (h, Nq, Nk)
    m = jnp.max(s, axis=-1, keepdims=True)
    p = jnp.exp(s - m)
    p = p * pl.reciprocal(jnp.sum(p, axis=-1, keepdims=True), approx=True)
    o3 = jnp.einsum("hqk,hkd->hqd", p.astype(bf16), v3,
                    preferred_element_type=f32)                            # (h, Nq, Dh)
    attn = jnp.transpose(o3, (1, 0, 2)).reshape(Nq, C)   # head-major channels (PyTorch layout)

    # attention residual + MLP (1x1 convs == per-token Linear) + MLP residual
    x = x1 + attn
    h1 = jnp.dot(x.astype(bf16), fc1w_ref[...], preferred_element_type=f32) + fc1b_ref[...]
    h1 = jnp.maximum(h1, 0.0)
    x = x + jnp.dot(h1.astype(bf16), fc2w_ref[...], preferred_element_type=f32) + fc2b_ref[...]
    # TODO(synk): Dropout layers are identity here (inference / eval semantics).

    o_ref[0] = x.astype(o_ref.dtype)


def attn_mlp(qg, kg, x1_tok, params, *, nhead):
    B, Nq, C = qg.shape
    Nk = kg.shape[1]
    F = params["fc1_w"].shape[1]
    bf16 = jnp.bfloat16

    blk_bytes = (4 * (2 * Nq * C + Nk * C + Nq * C)                 # qg, x1, kg, out (f32)
                 + 2 * (C * C + C * 2 * C + C * F + F * C)          # bf16 weights
                 + 4 * (C + 2 * C + F + C))                         # f32 biases

    return pl.pallas_call(
        partial(_attn_mlp_kernel, nhead=nhead),
        out_shape=jax.ShapeDtypeStruct((B, Nq, C), jnp.float32),
        grid=(B,),
        in_specs=[
            pl.BlockSpec((1, Nq, C), lambda i: (i, 0, 0)),     # qg
            pl.BlockSpec((1, Nk, C), lambda i: (i, 0, 0)),     # kg
            pl.BlockSpec((1, Nq, C), lambda i: (i, 0, 0)),     # x1 tokens
            pl.BlockSpec((C, C), lambda i: (0, 0)),            # q_w (bf16)
            pl.BlockSpec((1, C), lambda i: (0, 0)),            # q_b
            pl.BlockSpec((C, 2 * C), lambda i: (0, 0)),        # kv_w (K|V fused, bf16)
            pl.BlockSpec((1, 2 * C), lambda i: (0, 0)),        # kv_b
            pl.BlockSpec((C, F), lambda i: (0, 0)),            # fc1_w (bf16)
            pl.BlockSpec((1, F), lambda i: (0, 0)),            # fc1_b
            pl.BlockSpec((F, C), lambda i: (0, 0)),            # fc2_w (bf16)
            pl.BlockSpec((1, C), lambda i: (0, 0)),            # fc2_b
        ],
        out_specs=pl.BlockSpec((1, Nq, C), lambda i: (i, 0, 0)),
        compiler_params=pltpu.CompilerParams(
            dimension_semantics=("parallel",),
            vmem_limit_bytes=_vmem_limit(blk_bytes)),
    )(qg, kg, x1_tok,
      params["q_w"].astype(bf16), params["q_b"].reshape(1, C),
      params["kv_w"].astype(bf16), params["kv_b"].reshape(1, 2 * C),
      params["fc1_w"].astype(bf16), params["fc1_b"].reshape(1, F),
      params["fc2_w"].astype(bf16), params["fc2_b"].reshape(1, C))


# ----------------------------------------------------------------------------
# Kernel 2: fused  split concat-conv + residual + GroupNorm(8, C)
#                  + token bilinear upsample (P @ tok) + out_conv + residual
# ----------------------------------------------------------------------------
def _shortcut_out_kernel(x1u_ref, x2_ref, tok_ref, p_ref, wa_ref, wb_ref, bcat_ref,
                         mg_ref, gamma_ref, beta_ref, ow_ref, ob_ref, o_ref, *, eps):
    f32, bf16 = jnp.float32, jnp.bfloat16
    x1u = x1u_ref[0]                      # (HW, C) f32   bilinear(x1 -> H2,W2)
    x2 = x2_ref[0]                        # (HW, C) f32

    # shortcut = x2 + concat_conv([interp(x1), x2])  with concat_w split into W_a|W_b
    # (no HBM-materialized channel concat).
    s = (x2
         + jnp.dot(x1u.astype(bf16), wa_ref[...], preferred_element_type=f32)
         + jnp.dot(x2.astype(bf16), wb_ref[...], preferred_element_type=f32)
         + bcat_ref[...])                                                   # (HW, C)

    # GroupNorm(8, C): row-reduce FIRST (XLU slot), then a tiny (1,C)x(C,C) group-mix
    # matmul with the precomputed membership matrix (includes the 1/(Cg*HW) factor).
    mean = jnp.dot(jnp.sum(s, axis=0, keepdims=True), mg_ref[...],
                   preferred_element_type=f32)                              # (1, C)
    d = s - mean
    var = jnp.dot(jnp.sum(d * d, axis=0, keepdims=True), mg_ref[...],
                  preferred_element_type=f32)                               # (1, C)
    shortcut = d * jax.lax.rsqrt(var + eps) * gamma_ref[...] + beta_ref[...]

    # bilinear upsample of attention tokens (precomputed P), 1x1 out_conv, residual add
    up = jnp.dot(p_ref[...], tok_ref[0].astype(bf16), preferred_element_type=f32)  # (HW, C)
    out = jnp.dot(up.astype(bf16), ow_ref[...], preferred_element_type=f32)

    o_ref[0] = (shortcut + out + ob_ref[...]).astype(o_ref.dtype)


def shortcut_out(x1_up, x2_flat, x1_tok, P, params, *, groups=8, eps=1e-5):
    B, HW, C = x2_flat.shape
    Nq = x1_tok.shape[1]
    bf16 = jnp.bfloat16

    # Group-membership averaging matrix (precomputed once in the wrapper, not per grid step).
    Cg = C // groups
    gi = jnp.arange(C)[:, None] // Cg
    gj = jnp.arange(C)[None, :] // Cg
    Mg = jnp.where(gi == gj, 1.0 / float(Cg * HW), 0.0).astype(jnp.float32)   # (C, C)

    blk_bytes = (4 * (2 * HW * C + Nq * C + HW * C)        # x1_up, x2, tok, out (f32)
                 + 2 * (HW * Nq + 3 * C * C)               # P, wa, wb, out_w (bf16)
                 + 4 * (C * C + 4 * C))                    # Mg + biases/affine (f32)

    return pl.pallas_call(
        partial(_shortcut_out_kernel, eps=eps),
        out_shape=jax.ShapeDtypeStruct((B, HW, C), jnp.float32),
        grid=(B,),
        in_specs=[
            pl.BlockSpec((1, HW, C), lambda i: (i, 0, 0)),   # x1_up
            pl.BlockSpec((1, HW, C), lambda i: (i, 0, 0)),   # x2 (flat)
            pl.BlockSpec((1, Nq, C), lambda i: (i, 0, 0)),   # attention tokens
            pl.BlockSpec((HW, Nq), lambda i: (0, 0)),        # P = kron(Mh, Mw) (bf16)
            pl.BlockSpec((C, C), lambda i: (0, 0)),          # concat W_a (bf16)
            pl.BlockSpec((C, C), lambda i: (0, 0)),          # concat W_b (bf16)
            pl.BlockSpec((1, C), lambda i: (0, 0)),          # concat bias
            pl.BlockSpec((C, C), lambda i: (0, 0)),          # group-membership matrix
            pl.BlockSpec((1, C), lambda i: (0, 0)),          # gn gamma
            pl.BlockSpec((1, C), lambda i: (0, 0)),          # gn beta
            pl.BlockSpec((C, C), lambda i: (0, 0)),          # out_w (bf16)
            pl.BlockSpec((1, C), lambda i: (0, 0)),          # out_b
        ],
        out_specs=pl.BlockSpec((1, HW, C), lambda i: (i, 0, 0)),
        compiler_params=pltpu.CompilerParams(
            dimension_semantics=("parallel",),
            vmem_limit_bytes=_vmem_limit(blk_bytes)),
    )(x1_up, x2_flat, x1_tok, P.astype(bf16),
      params["concat_wa"].astype(bf16), params["concat_wb"].astype(bf16),
      params["concat_b"].reshape(1, C),
      Mg, params["gn_gamma"].reshape(1, C), params["gn_beta"].reshape(1, C),
      params["out_w"].astype(bf16), params["out_b"].reshape(1, C))


# ----------------------------------------------------------------------------
# Plain-JAX glue (position encoding, bilinear matrices, pooling reshapes)
# ----------------------------------------------------------------------------
def pos_embedding_sine(h, w, d, temperature=10000.0):
    """PositionEmbeddingSine (normalize=False) for a (h, w, d) channels-last grid."""
    npf = d // 2
    y_embed = jnp.broadcast_to(jnp.arange(1, h + 1, dtype=jnp.float32)[:, None], (h, w))
    x_embed = jnp.broadcast_to(jnp.arange(1, w + 1, dtype=jnp.float32)[None, :], (h, w))
    dim_t = jnp.arange(npf, dtype=jnp.float32)
    dim_t = temperature ** (2.0 * jnp.floor(dim_t / 2.0) / npf)
    pos_x = x_embed[:, :, None] / dim_t           # (h, w, npf)
    pos_y = y_embed[:, :, None] / dim_t
    pos_x = jnp.stack([jnp.sin(pos_x[..., 0::2]), jnp.cos(pos_x[..., 1::2])],
                      axis=3).reshape(h, w, -1)
    pos_y = jnp.stack([jnp.sin(pos_y[..., 0::2]), jnp.cos(pos_y[..., 1::2])],
                      axis=3).reshape(h, w, -1)
    return jnp.concatenate([pos_y, pos_x], axis=-1)   # (h, w, d)


def _bilinear_matrix(in_size, out_size):
    # F.interpolate(mode='bilinear', align_corners=True) sampling matrix (out_size, in_size)
    if out_size == 1:
        idx = jnp.zeros((1,), jnp.float32)
    else:
        scale = (in_size - 1) / (out_size - 1)
        idx = jnp.arange(out_size, dtype=jnp.float32) * scale
    i0 = jnp.clip(jnp.floor(idx).astype(jnp.int32), 0, in_size - 1)
    i1 = jnp.clip(i0 + 1, 0, in_size - 1)
    w1 = idx - i0.astype(jnp.float32)
    w0 = 1.0 - w1
    M = jnp.zeros((out_size, in_size), jnp.float32)
    M = M.at[jnp.arange(out_size), i0].add(w0)
    M = M.at[jnp.arange(out_size), i1].add(w1)
    return M


def interpolate_bilinear_ac_cl(x, out_h, out_w):
    # bilinear align_corners=True on channels-last (B, H, W, C)
    B, H, W, C = x.shape
    Mh = _bilinear_matrix(H, out_h)
    Mw = _bilinear_matrix(W, out_w)
    return jnp.einsum("oh,bhwc,pw->bopc", Mh, x, Mw)


# ----------------------------------------------------------------------------
# Parameters (deterministic synthetic init; shapes follow the module __init__)
# ----------------------------------------------------------------------------
def init_params(key, embed_dim, ffn_dim):
    C, F = embed_dim, ffn_dim
    ks = jax.random.split(key, 8)

    def xavier(k, fan_in, fan_out):
        std = math.sqrt(2.0 / (fan_in + fan_out))
        return std * jax.random.normal(k, (fan_in, fan_out), jnp.float32)

    def kaiming(k, fan_in, fan_out):
        std = math.sqrt(2.0 / fan_in)
        return std * jax.random.normal(k, (fan_in, fan_out), jnp.float32)

    k_w = xavier(ks[1], C, C)
    v_w = xavier(ks[2], C, C)
    concat_w = kaiming(ks[5], 2 * C, C)
    return dict(
        q_w=xavier(ks[0], C, C), q_b=jnp.zeros((C,), jnp.float32),
        kv_w=jnp.concatenate([k_w, v_w], axis=1),           # (C, 2C) fused K|V
        kv_b=jnp.zeros((2 * C,), jnp.float32),
        fc1_w=kaiming(ks[3], C, F), fc1_b=jnp.zeros((F,), jnp.float32),
        fc2_w=kaiming(ks[4], F, C), fc2_b=jnp.zeros((C,), jnp.float32),
        concat_wa=concat_w[:C],                              # acts on interp(x1) channels
        concat_wb=concat_w[C:],                              # acts on x2 channels
        concat_b=jnp.zeros((C,), jnp.float32),
        out_w=kaiming(ks[6], C, C), out_b=jnp.zeros((C,), jnp.float32),
        gn_gamma=jnp.ones((C,), jnp.float32), gn_beta=jnp.zeros((C,), jnp.float32),
    )


# ----------------------------------------------------------------------------
# Forward pass (matches BasicAttetnionLayer.forward, eval semantics)
# ----------------------------------------------------------------------------
def basic_attention_layer(params, x1, x2, *, nhead, window_size1=(4, 4), window_size2=(1, 1)):
    B, C, H1, W1 = x1.shape
    _, _, H2, W2 = x2.shape
    G = 8

    # one layout change at the top: NCHW -> channels-last
    x1_cl = jnp.transpose(x1, (0, 2, 3, 1))              # (B, H1, W1, C)
    x2_cl = jnp.transpose(x2, (0, 2, 3, 1))              # (B, H2, W2, C)

    # bilinear(x1 -> (H2, W2)) for the shortcut path (sparse gather; kept in plain JAX)
    x1_up = interpolate_bilinear_ac_cl(x1_cl, H2, W2).reshape(B, H2 * W2, C)
    x2_flat = x2_cl.reshape(B, H2 * W2, C)

    # pad to window multiples, average-pool into tokens (pad-then-pool == AvgPool2d on padded input)
    ws1h, ws1w = window_size1
    ws2h, ws2w = window_size2
    pad_b1 = (ws1h - H1 % ws1h) % ws1h
    pad_r1 = (ws1w - W1 % ws1w) % ws1w
    x1p = jnp.pad(x1_cl, ((0, 0), (0, pad_b1), (0, pad_r1), (0, 0)))
    H1p, W1p = x1p.shape[1], x1p.shape[2]
    pad_b2 = (ws2h - H2 % ws2h) % ws2h
    pad_r2 = (ws2w - W2 % ws2w) % ws2w
    x2p = jnp.pad(x2_cl, ((0, 0), (0, pad_b2), (0, pad_r2), (0, 0)))
    H2p, W2p = x2p.shape[1], x2p.shape[2]

    Hq, Wq = H1p // ws1h, W1p // ws1w
    Hk, Wk = H2p // ws2h, W2p // ws2w
    x1_s = x1p.reshape(B, Hq, ws1h, Wq, ws1w, C).mean(axis=(2, 4))    # (B, Hq, Wq, C)
    x2_s = x2p.reshape(B, Hk, ws2h, Wk, ws2w, C).mean(axis=(2, 4))    # (B, Hk, Wk, C)

    Nq, Nk = Hq * Wq, Hk * Wk
    qg = (x1_s + pos_embedding_sine(Hq, Wq, C)[None]).reshape(B, Nq, C)
    kg = (x2_s + pos_embedding_sine(Hk, Wk, C)[None]).reshape(B, Nk, C)
    x1_tok = x1_s.reshape(B, Nq, C)

    # Kernel 1: Q/KV projection + batched-head attention + residual + MLP
    x1_tok = attn_mlp(qg, kg, x1_tok, params, nhead=nhead)            # (B, Nq, C)

    # Kernel 2: shortcut conv + GroupNorm + token upsample (P) + out_conv + residual
    P = jnp.kron(_bilinear_matrix(Hq, H2), _bilinear_matrix(Wq, W2))  # (H2*W2, Nq)
    out_flat = shortcut_out(x1_up, x2_flat, x1_tok, P, params, groups=G)   # (B, HW2, C)

    # back to NCHW once at the end
    return out_flat.reshape(B, H2, W2, C).transpose(0, 3, 1, 2)


# ----------------------------------------------------------------------------
if __name__ == "__main__":
    # Small shapes consistent with the module: embed_dim=32, nhead=4, ffn_dim=64,
    # window_size1=[4,4], window_size2=[1,1].
    embed_dim, nhead, ffn_dim = 32, 4, 64
    B, H1, W1, H2, W2 = 2, 16, 16, 8, 8

    key = jax.random.PRNGKey(0)
    k1, k2, kp = jax.random.split(key, 3)
    x1 = jax.random.normal(k1, (B, embed_dim, H1, W1), jnp.float32)
    x2 = jax.random.normal(k2, (B, embed_dim, H2, W2), jnp.float32)
    params = init_params(kp, embed_dim, ffn_dim)

    fwd = jax.jit(partial(basic_attention_layer, nhead=nhead,
                          window_size1=(4, 4), window_size2=(1, 1)))
    out = jax.block_until_ready(fwd(params, x1, x2))

    assert out.shape == (B, embed_dim, H2, W2)
    assert bool(jnp.all(jnp.isfinite(out)))
    print("KERNEL_OK")
</pallas_src>

<mosaic_0001>
module attributes {stable_mosaic.version = 11 : i64} {
  func.func @_attn_mlp_kernel(%arg0: i32, %arg1: memref<1x16x32xf32, #tpu.memory_space<vmem>>, %arg2: memref<1x64x32xf32, #tpu.memory_space<vmem>>, %arg3: memref<1x16x32xf32, #tpu.memory_space<vmem>>, %arg4: memref<32x32xbf16, #tpu.memory_space<vmem>>, %arg5: memref<1x32xf32, #tpu.memory_space<vmem>>, %arg6: memref<32x64xbf16, #tpu.memory_space<vmem>>, %arg7: memref<1x64xf32, #tpu.memory_space<vmem>>, %arg8: memref<32x64xbf16, #tpu.memory_space<vmem>>, %arg9: memref<1x64xf32, #tpu.memory_space<vmem>>, %arg10: memref<64x32xbf16, #tpu.memory_space<vmem>>, %arg11: memref<1x32xf32, #tpu.memory_space<vmem>>, %arg12: memref<1x16x32xf32, #tpu.memory_space<vmem>>) attributes {dimension_semantics = [#tpu.dimension_semantics<parallel>], iteration_bounds = array<i64: 2>, scalar_prefetch = 0 : i64, scratch_operands = 0 : i64, tpu.core_type = #tpu.core_type<tc>, window_params = [{transform_indices = @transform_0, window_bounds = array<i64: 1, 16, 32>}, {transform_indices = @transform_1, window_bounds = array<i64: 1, 64, 32>}, {transform_indices = @transform_2, window_bounds = array<i64: 1, 16, 32>}, {pipeline_mode = #tpu.pipeline_mode<synchronous>, transform_indices = @transform_3, window_bounds = array<i64: 32, 32>}, {pipeline_mode = #tpu.pipeline_mode<synchronous>, transform_indices = @transform_4, window_bounds = array<i64: 1, 32>}, {pipeline_mode = #tpu.pipeline_mode<synchronous>, transform_indices = @transform_5, window_bounds = array<i64: 32, 64>}, {pipeline_mode = #tpu.pipeline_mode<synchronous>, transform_indices = @transform_6, window_bounds = array<i64: 1, 64>}, {pipeline_mode = #tpu.pipeline_mode<synchronous>, transform_indices = @transform_7, window_bounds = array<i64: 32, 64>}, {pipeline_mode = #tpu.pipeline_mode<synchronous>, transform_indices = @transform_8, window_bounds = array<i64: 1, 64>}, {pipeline_mode = #tpu.pipeline_mode<synchronous>, transform_indices = @transform_9, window_bounds = array<i64: 64, 32>}, {pipeline_mode = #tpu.pipeline_mode<synchronous>, transform_indices = @transform_10, window_bounds = array<i64: 1, 32>}, {transform_indices = @transform_11, window_bounds = array<i64: 1, 16, 32>}]} {
    %c0 = arith.constant 0 : index
    %c0_0 = arith.constant 0 : index
    %c0_1 = arith.constant 0 : index
    %0 = vector.load %arg1[%c0, %c0_0, %c0_1] : memref<1x16x32xf32, #tpu.memory_space<vmem>>, vector<1x16x32xf32>
    %1 = vector.shape_cast %0 : vector<1x16x32xf32> to vector<16x32xf32>
    %c0_2 = arith.constant 0 : index
    %c0_3 = arith.constant 0 : index
    %c0_4 = arith.constant 0 : index
    %2 = vector.load %arg2[%c0_2, %c0_3, %c0_4] : memref<1x64x32xf32, #tpu.memory_space<vmem>>, vector<1x64x32xf32>
    %3 = vector.shape_cast %2 : vector<1x64x32xf32> to vector<64x32xf32>
    %c0_5 = arith.constant 0 : index
    %c0_6 = arith.constant 0 : index
    %c0_7 = arith.constant 0 : index
    %4 = vector.load %arg3[%c0_5, %c0_6, %c0_7] : memref<1x16x32xf32, #tpu.memory_space<vmem>>, vector<1x16x32xf32>
    %5 = vector.shape_cast %4 : vector<1x16x32xf32> to vector<16x32xf32>
    %6 = arith.truncf %1 : vector<16x32xf32> to vector<16x32xbf16>
    %c0_8 = arith.constant 0 : index
    %c0_9 = arith.constant 0 : index
    %7 = vector.load %arg4[%c0_8, %c0_9] : memref<32x32xbf16, #tpu.memory_space<vmem>>, vector<32x32xbf16>
    %cst = arith.constant dense<0.000000e+00> : vector<16x32xf32>
    %8 = tpu.matmul %6, %7, %cst {dimension_numbers = #tpu.dot_dimension_numbers<[1], [0], [0], [1], [0, 0, 1, 1], [], []>} : vector<16x32xbf16>, vector<32x32xbf16>, vector<16x32xf32> -> vector<16x32xf32>
    %c0_10 = arith.constant 0 : index
    %c0_11 = arith.constant 0 : index
    %9 = vector.load %arg5[%c0_10, %c0_11] : memref<1x32xf32, #tpu.memory_space<vmem>>, vector<1x32xf32>
    %10 = vector.broadcast %9 : vector<1x32xf32> to vector<16x32xf32>
    %11 = arith.addf %8, %10 : vector<16x32xf32>
    %12 = arith.truncf %3 : vector<64x32xf32> to vector<64x32xbf16>
    %c0_12 = arith.constant 0 : index
    %c0_13 = arith.constant 0 : index
    %13 = vector.load %arg6[%c0_12, %c0_13] : memref<32x64xbf16, #tpu.memory_space<vmem>>, vector<32x64xbf16>
    %cst_14 = arith.constant dense<0.000000e+00> : vector<64x64xf32>
    %14 = tpu.matmul %12, %13, %cst_14 {dimension_numbers = #tpu.dot_dimension_numbers<[1], [0], [0], [1], [0, 0, 1, 1], [], []>} : vector<64x32xbf16>, vector<32x64xbf16>, vector<64x64xf32> -> vector<64x64xf32>
    %c0_15 = arith.constant 0 : index
    %c0_16 = arith.constant 0 : index
    %15 = vector.load %arg7[%c0_15, %c0_16] : memref<1x64xf32, #tpu.memory_space<vmem>>, vector<1x64xf32>
    %16 = vector.broadcast %15 : vector<1x64xf32> to vector<64x64xf32>
    %17 = arith.addf %14, %16 : vector<64x64xf32>
    %18 = vector.extract_strided_slice %17 {offsets = [0, 0], sizes = [64, 32], strides = [1, 1]} : vector<64x64xf32> to vector<64x32xf32>
    %19 = vector.extract_strided_slice %17 {offsets = [0, 32], sizes = [64, 32], strides = [1, 1]} : vector<64x64xf32> to vector<64x32xf32>
    %20 = vector.shape_cast %11 : vector<16x32xf32> to vector<16x4x8xf32>
    %21 = tpu.transpose %20, [1, 0, 2] : vector<16x4x8xf32> -> vector<4x16x8xf32>
    %22 = arith.truncf %21 : vector<4x16x8xf32> to vector<4x16x8xbf16>
    %23 = vector.shape_cast %18 : vector<64x32xf32> to vector<64x4x8xf32>
    %24 = tpu.transpose %23, [1, 0, 2] : vector<64x4x8xf32> -> vector<4x64x8xf32>
    %25 = arith.truncf %24 : vector<4x64x8xf32> to vector<4x64x8xbf16>
    %26 = vector.shape_cast %19 : vector<64x32xf32> to vector<64x4x8xf32>
    %27 = tpu.transpose %26, [1, 0, 2] : vector<64x4x8xf32> -> vector<4x64x8xf32>
    %28 = arith.truncf %27 : vector<4x64x8xf32> to vector<4x64x8xbf16>
    "tpu.trace_start"() <{level = 10 : i32, message = "hqd,hkd->hqk"}> : () -> ()
    %cst_17 = arith.constant dense<0.000000e+00> : vector<4x16x64xf32>
    %29 = tpu.matmul %22, %25, %cst_17 {dimension_numbers = #tpu.dot_dimension_numbers<[2], [2], [1], [1], [0, 0, 0, 1, 1, 1], [0], [0]>} : vector<4x16x8xbf16>, vector<4x64x8xbf16>, vector<4x16x64xf32> -> vector<4x16x64xf32>
    "tpu.trace_stop"() : () -> ()
    %cst_18 = arith.constant dense<0xFF800000> : vector<4x16xf32>
    %30 = vector.multi_reduction <maximumf>, %29, %cst_18 [2] : vector<4x16x64xf32> to vector<4x16xf32>
    %31 = vector.shape_cast %30 : vector<4x16xf32> to vector<4x16x1xf32>
    %32 = vector.broadcast %31 : vector<4x16x1xf32> to vector<4x16x64xf32>
    %33 = arith.subf %29, %32 : vector<4x16x64xf32>
    %34 = math.exp %33 : vector<4x16x64xf32>
    %cst_19 = arith.constant dense<0.000000e+00> : vector<4x16xf32>
    %35 = vector.multi_reduction <add>, %34, %cst_19 [2] : vector<4x16x64xf32> to vector<4x16xf32>
    %36 = vector.shape_cast %35 : vector<4x16xf32> to vector<4x16x1xf32>
    %37 = tpu.reciprocal %36 {approx = true} : vector<4x16x1xf32> -> vector<4x16x1xf32>
    %38 = vector.broadcast %37 : vector<4x16x1xf32> to vector<4x16x64xf32>
    %39 = arith.mulf %34, %38 : vector<4x16x64xf32>
    %40 = arith.truncf %39 : vector<4x16x64xf32> to vector<4x16x64xbf16>
    "tpu.trace_start"() <{level = 10 : i32, message = "hqk,hkd->hqd"}> : () -> ()
    %cst_20 = arith.constant dense<0.000000e+00> : vector<4x16x8xf32>
    %41 = tpu.matmul %40, %28, %cst_20 {dimension_numbers = #tpu.dot_dimension_numbers<[2], [1], [1], [2], [0, 0, 0, 1, 1, 2], [0], [0]>} : vector<4x16x64xbf16>, vector<4x64x8xbf16>, vector<4x16x8xf32> -> vector<4x16x8xf32>
    "tpu.trace_stop"() : () -> ()
    %42 = tpu.transpose %41, [1, 0, 2] : vector<4x16x8xf32> -> vector<16x4x8xf32>
    %43 = vector.shape_cast %42 : vector<16x4x8xf32> to vector<16x32xf32>
    %44 = arith.addf %5, %43 : vector<16x32xf32>
    %45 = arith.truncf %44 : vector<16x32xf32> to vector<16x32xbf16>
    %c0_21 = arith.constant 0 : index
    %c0_22 = arith.constant 0 : index
    %46 = vector.load %arg8[%c0_21, %c0_22] : memref<32x64xbf16, #tpu.memory_space<vmem>>, vector<32x64xbf16>
    %cst_23 = arith.constant dense<0.000000e+00> : vector<16x64xf32>
    %47 = tpu.matmul %45, %46, %cst_23 {dimension_numbers = #tpu.dot_dimension_numbers<[1], [0], [0], [1], [0, 0, 1, 1], [], []>} : vector<16x32xbf16>, vector<32x64xbf16>, vector<16x64xf32> -> vector<16x64xf32>
    %c0_24 = arith.constant 0 : index
    %c0_25 = arith.constant 0 : index
    %48 = vector.load %arg9[%c0_24, %c0_25] : memref<1x64xf32, #tpu.memory_space<vmem>>, vector<1x64xf32>
    %49 = vector.broadcast %48 : vector<1x64xf32> to vector<16x64xf32>
    %50 = arith.addf %47, %49 : vector<16x64xf32>
    %cst_26 = arith.constant 0.000000e+00 : f32
    %51 = vector.broadcast %cst_26 : f32 to vector<16x64xf32>
    %52 = arith.maximumf %50, %51 : vector<16x64xf32>
    %53 = arith.truncf %52 : vector<16x64xf32> to vector<16x64xbf16>
    %c0_27 = arith.constant 0 : index
    %c0_28 = arith.constant 0 : index
    %54 = vector.load %arg10[%c0_27, %c0_28] : memref<64x32xbf16, #tpu.memory_space<vmem>>, vector<64x32xbf16>
    %cst_29 = arith.constant dense<0.000000e+00> : vector<16x32xf32>
    %55 = tpu.matmul %53, %54, %cst_29 {dimension_numbers = #tpu.dot_dimension_numbers<[1], [0], [0], [1], [0, 0, 1, 1], [], []>} : vector<16x64xbf16>, vector<64x32xbf16>, vector<16x32xf32> -> vector<16x32xf32>
    %56 = arith.addf %44, %55 : vector<16x32xf32>
    %c0_30 = arith.constant 0 : index
    %c0_31 = arith.constant 0 : index
    %57 = vector.load %arg11[%c0_30, %c0_31] : memref<1x32xf32, #tpu.memory_space<vmem>>, vector<1x32xf32>
    %58 = vector.broadcast %57 : vector<1x32xf32> to vector<16x32xf32>
    %59 = arith.addf %56, %58 : vector<16x32xf32>
    %c0_32 = arith.constant 0 : index
    %c0_33 = arith.constant 0 : index
    %c0_34 = arith.constant 0 : index
    %60 = vector.load %arg12[%c0_32, %c0_33, %c0_34] : memref<1x16x32xf32, #tpu.memory_space<vmem>>, vector<1x16x32xf32>
    %61 = vector.shape_cast %60 : vector<1x16x32xf32> to vector<16x32xf32>
    %62 = vector.shape_cast %59 : vector<16x32xf32> to vector<1x16x32xf32>
    tpu.vector_store %arg12[%c0_32, %c0_33, %c0_34], %62 {strides = array<i32>} : memref<1x16x32xf32, #tpu.memory_space<vmem>>, vector<1x16x32xf32>,
    return
  }
  func.func @transform_0(%arg0: i32) -> (i32, i32, i32) {
    %c0_i32 = arith.constant 0 : i32
    %c0_i32_0 = arith.constant 0 : i32
    %c0_i32_1 = arith.constant 0 : i32
    return %arg0, %c0_i32, %c0_i32_0 : i32, i32, i32
  }
  func.func @transform_1(%arg0: i32) -> (i32, i32, i32) {
    %c0_i32 = arith.constant 0 : i32
    %c0_i32_0 = arith.constant 0 : i32
    %c0_i32_1 = arith.constant 0 : i32
    return %arg0, %c0_i32, %c0_i32_0 : i32, i32, i32
  }
  func.func @transform_2(%arg0: i32) -> (i32, i32, i32) {
    %c0_i32 = arith.constant 0 : i32
    %c0_i32_0 = arith.constant 0 : i32
    %c0_i32_1 = arith.constant 0 : i32
    return %arg0, %c0_i32, %c0_i32_0 : i32, i32, i32
  }
  func.func @transform_3(%arg0: i32) -> (i32, i32) {
    %c0_i32 = arith.constant 0 : i32
    %c0_i32_0 = arith.constant 0 : i32
    %c0_i32_1 = arith.constant 0 : i32
    return %c0_i32, %c0_i32_0 : i32, i32
  }
  func.func @transform_4(%arg0: i32) -> (i32, i32) {
    %c0_i32 = arith.constant 0 : i32
    %c0_i32_0 = arith.constant 0 : i32
    %c0_i32_1 = arith.constant 0 : i32
    return %c0_i32, %c0_i32_0 : i32, i32
  }
  func.func @transform_5(%arg0: i32) -> (i32, i32) {
    %c0_i32 = arith.constant 0 : i32
    %c0_i32_0 = arith.constant 0 : i32
    %c0_i32_1 = arith.constant 0 : i32
    return %c0_i32, %c0_i32_0 : i32, i32
  }
  func.func @transform_6(%arg0: i32) -> (i32, i32) {
    %c0_i32 = arith.constant 0 : i32
    %c0_i32_0 = arith.constant 0 : i32
    %c0_i32_1 = arith.constant 0 : i32
    return %c0_i32, %c0_i32_0 : i32, i32
  }
  func.func @transform_7(%arg0: i32) -> (i32, i32) {
    %c0_i32 = arith.constant 0 : i32
    %c0_i32_0 = arith.constant 0 : i32
    %c0_i32_1 = arith.constant 0 : i32
    return %c0_i32, %c0_i32_0 : i32, i32
  }
  func.func @transform_8(%arg0: i32) -> (i32, i32) {
    %c0_i32 = arith.constant 0 : i32
    %c0_i32_0 = arith.constant 0 : i32
    %c0_i32_1 = arith.constant 0 : i32
    return %c0_i32, %c0_i32_0 : i32, i32
  }
  func.func @transform_9(%arg0: i32) -> (i32, i32) {
    %c0_i32 = arith.constant 0 : i32
    %c0_i32_0 = arith.constant 0 : i32
    %c0_i32_1 = arith.constant 0 : i32
    return %c0_i32, %c0_i32_0 : i32, i32
  }
  func.func @transform_10(%arg0: i32) -> (i32, i32) {
    %c0_i32 = arith.constant 0 : i32
    %c0_i32_0 = arith.constant 0 : i32
    %c0_i32_1 = arith.constant 0 : i32
    return %c0_i32, %c0_i32_0 : i32, i32
  }
  func.func @transform_11(%arg0: i32) -> (i32, i32, i32) {
    %c0_i32 = arith.constant 0 : i32
    %c0_i32_0 = arith.constant 0 : i32
    %c0_i32_1 = arith.constant 0 : i32
    return %arg0, %c0_i32, %c0_i32_0 : i32, i32, i32
  }
}

module attributes {stable_mosaic.version = 11 : i64} {
  func.func @_shortcut_out_kernel(%arg0: i32, %arg1: memref<1x64x32xf32, #tpu.memory_space<vmem>>, %arg2: memref<1x64x32xf32, #tpu.memory_space<vmem>>, %arg3: memref<1x16x32xf32, #tpu.memory_space<vmem>>, %arg4: memref<64x16xbf16, #tpu.memory_space<vmem>>, %arg5: memref<32x32xbf16, #tpu.memory_space<vmem>>, %arg6: memref<32x32xbf16, #tpu.memory_space<vmem>>, %arg7: memref<1x32xf32, #tpu.memory_space<vmem>>, %arg8: memref<32x32xf32, #tpu.memory_space<vmem>>, %arg9: memref<1x32xf32, #tpu.memory_space<vmem>>, %arg10: memref<1x32xf32, #tpu.memory_space<vmem>>, %arg11: memref<32x32xbf16, #tpu.memory_space<vmem>>, %arg12: memref<1x32xf32, #tpu.memory_space<vmem>>, %arg13: memref<1x64x32xf32, #tpu.memory_space<vmem>>) attributes {dimension_semantics = [#tpu.dimension_semantics<parallel>], iteration_bounds = array<i64: 2>, scalar_prefetch = 0 : i64, scratch_operands = 0 : i64, tpu.core_type = #tpu.core_type<tc>, window_params = [{transform_indices = @transform_0, window_bounds = array<i64: 1, 64, 32>}, {transform_indices = @transform_1, window_bounds = array<i64: 1, 64, 32>}, {transform_indices = @transform_2, window_bounds = array<i64: 1, 16, 32>}, {pipeline_mode = #tpu.pipeline_mode<synchronous>, transform_indices = @transform_3, window_bounds = array<i64: 64, 16>}, {pipeline_mode = #tpu.pipeline_mode<synchronous>, transform_indices = @transform_4, window_bounds = array<i64: 32, 32>}, {pipeline_mode = #tpu.pipeline_mode<synchronous>, transform_indices = @transform_5, window_bounds = array<i64: 32, 32>}, {pipeline_mode = #tpu.pipeline_mode<synchronous>, transform_indices = @transform_6, window_bounds = array<i64: 1, 32>}, {pipeline_mode = #tpu.pipeline_mode<synchronous>, transform_indices = @transform_7, window_bounds = array<i64: 32, 32>}, {pipeline_mode = #tpu.pipeline_mode<synchronous>, transform_indices = @transform_8, window_bounds = array<i64: 1, 32>}, {pipeline_mode = #tpu.pipeline_mode<synchronous>, transform_indices = @transform_9, window_bounds = array<i64: 1, 32>}, {pipeline_mode = #tpu.pipeline_mode<synchronous>, transform_indices = @transform_10, window_bounds = array<i64: 32, 32>}, {pipeline_mode = #tpu.pipeline_mode<synchronous>, transform_indices = @transform_11, window_bounds = array<i64: 1, 32>}, {transform_indices = @transform_12, window_bounds = array<i64: 1, 64, 32>}]} {
    %c0 = arith.constant 0 : index
    %c0_0 = arith.constant 0 : index
    %c0_1 = arith.constant 0 : index
    %0 = vector.load %arg1[%c0, %c0_0, %c0_1] : memref<1x64x32xf32, #tpu.memory_space<vmem>>, vector<1x64x32xf32>
    %1 = vector.shape_cast %0 : vector<1x64x32xf32> to vector<64x32xf32>
    %c0_2 = arith.constant 0 : index
    %c0_3 = arith.constant 0 : index
    %c0_4 = arith.constant 0 : index
    %2 = vector.load %arg2[%c0_2, %c0_3, %c0_4] : memref<1x64x32xf32, #tpu.memory_space<vmem>>, vector<1x64x32xf32>
    %3 = vector.shape_cast %2 : vector<1x64x32xf32> to vector<64x32xf32>
    %4 = arith.truncf %1 : vector<64x32xf32> to vector<64x32xbf16>
    %c0_5 = arith.constant 0 : index
    %c0_6 = arith.constant 0 : index
    %5 = vector.load %arg5[%c0_5, %c0_6] : memref<32x32xbf16, #tpu.memory_space<vmem>>, vector<32x32xbf16>
    %cst = arith.constant dense<0.000000e+00> : vector<64x32xf32>
    %6 = tpu.matmul %4, %5, %cst {dimension_numbers = #tpu.dot_dimension_numbers<[1], [0], [0], [1], [0, 0, 1, 1], [], []>} : vector<64x32xbf16>, vector<32x32xbf16>, vector<64x32xf32> -> vector<64x32xf32>
    %7 = arith.addf %3, %6 : vector<64x32xf32>
    %8 = arith.truncf %3 : vector<64x32xf32> to vector<64x32xbf16>
    %c0_7 = arith.constant 0 : index
    %c0_8 = arith.constant 0 : index
    %9 = vector.load %arg6[%c0_7, %c0_8] : memref<32x32xbf16, #tpu.memory_space<vmem>>, vector<32x32xbf16>
    %cst_9 = arith.constant dense<0.000000e+00> : vector<64x32xf32>
    %10 = tpu.matmul %8, %9, %cst_9 {dimension_numbers = #tpu.dot_dimension_numbers<[1], [0], [0], [1], [0, 0, 1, 1], [], []>} : vector<64x32xbf16>, vector<32x32xbf16>, vector<64x32xf32> -> vector<64x32xf32>
    %11 = arith.addf %7, %10 : vector<64x32xf32>
    %c0_10 = arith.constant 0 : index
    %c0_11 = arith.constant 0 : index
    %12 = vector.load %arg7[%c0_10, %c0_11] : memref<1x32xf32, #tpu.memory_space<vmem>>, vector<1x32xf32>
    %13 = vector.broadcast %12 : vector<1x32xf32> to vector<64x32xf32>
    %14 = arith.addf %11, %13 : vector<64x32xf32>
    %cst_12 = arith.constant dense<0.000000e+00> : vector<32xf32>
    %15 = vector.multi_reduction <add>, %14, %cst_12 [0] : vector<64x32xf32> to vector<32xf32>
    %16 = vector.shape_cast %15 : vector<32xf32> to vector<1x32xf32>
    %c0_13 = arith.constant 0 : index
    %c0_14 = arith.constant 0 : index
    %17 = vector.load %arg8[%c0_13, %c0_14] : memref<32x32xf32, #tpu.memory_space<vmem>>, vector<32x32xf32>
    %cst_15 = arith.constant dense<0.000000e+00> : vector<1x32xf32>
    %18 = tpu.matmul %16, %17, %cst_15 {dimension_numbers = #tpu.dot_dimension_numbers<[1], [0], [0], [1], [0, 0, 1, 1], [], []>} : vector<1x32xf32>, vector<32x32xf32>, vector<1x32xf32> -> vector<1x32xf32>
    %19 = vector.broadcast %18 : vector<1x32xf32> to vector<64x32xf32>
    %20 = arith.subf %14, %19 : vector<64x32xf32>
    %21 = arith.mulf %20, %20 : vector<64x32xf32>
    %cst_16 = arith.constant dense<0.000000e+00> : vector<32xf32>
    %22 = vector.multi_reduction <add>, %21, %cst_16 [0] : vector<64x32xf32> to vector<32xf32>
    %23 = vector.shape_cast %22 : vector<32xf32> to vector<1x32xf32>
    %c0_17 = arith.constant 0 : index
    %c0_18 = arith.constant 0 : index
    %24 = vector.load %arg8[%c0_17, %c0_18] : memref<32x32xf32, #tpu.memory_space<vmem>>, vector<32x32xf32>
    %cst_19 = arith.constant dense<0.000000e+00> : vector<1x32xf32>
    %25 = tpu.matmul %23, %24, %cst_19 {dimension_numbers = #tpu.dot_dimension_numbers<[1], [0], [0], [1], [0, 0, 1, 1], [], []>} : vector<1x32xf32>, vector<32x32xf32>, vector<1x32xf32> -> vector<1x32xf32>
    %cst_20 = arith.constant 9.99999974E-6 : f32
    %26 = vector.broadcast %cst_20 : f32 to vector<1x32xf32>
    %27 = arith.addf %25, %26 : vector<1x32xf32>
    %28 = math.rsqrt %27 : vector<1x32xf32>
    %29 = vector.broadcast %28 : vector<1x32xf32> to vector<64x32xf32>
    %30 = arith.mulf %20, %29 : vector<64x32xf32>
    %c0_21 = arith.constant 0 : index
    %c0_22 = arith.constant 0 : index
    %31 = vector.load %arg9[%c0_21, %c0_22] : memref<1x32xf32, #tpu.memory_space<vmem>>, vector<1x32xf32>
    %32 = vector.broadcast %31 : vector<1x32xf32> to vector<64x32xf32>
    %33 = arith.mulf %30, %32 : vector<64x32xf32>
    %c0_23 = arith.constant 0 : index
    %c0_24 = arith.constant 0 : index
    %34 = vector.load %arg10[%c0_23, %c0_24] : memref<1x32xf32, #tpu.memory_space<vmem>>, vector<1x32xf32>
    %35 = vector.broadcast %34 : vector<1x32xf32> to vector<64x32xf32>
    %36 = arith.addf %33, %35 : vector<64x32xf32>
    %c0_25 = arith.constant 0 : index
    %c0_26 = arith.constant 0 : index
    %37 = vector.load %arg4[%c0_25, %c0_26] : memref<64x16xbf16, #tpu.memory_space<vmem>>, vector<64x16xbf16>
    %c0_27 = arith.constant 0 : index
    %c0_28 = arith.constant 0 : index
    %c0_29 = arith.constant 0 : index
    %38 = vector.load %arg3[%c0_27, %c0_28, %c0_29] : memref<1x16x32xf32, #tpu.memory_space<vmem>>, vector<1x16x32xf32>
    %39 = vector.shape_cast %38 : vector<1x16x32xf32> to vector<16x32xf32>
    %40 = arith.truncf %39 : vector<16x32xf32> to vector<16x32xbf16>
    %cst_30 = arith.constant dense<0.000000e+00> : vector<64x32xf32>
    %41 = tpu.matmul %37, %40, %cst_30 {dimension_numbers = #tpu.dot_dimension_numbers<[1], [0], [0], [1], [0, 0, 1, 1], [], []>} : vector<64x16xbf16>, vector<16x32xbf16>, vector<64x32xf32> -> vector<64x32xf32>
    %42 = arith.truncf %41 : vector<64x32xf32> to vector<64x32xbf16>
    %c0_31 = arith.constant 0 : index
    %c0_32 = arith.constant 0 : index
    %43 = vector.load %arg11[%c0_31, %c0_32] : memref<32x32xbf16, #tpu.memory_space<vmem>>, vector<32x32xbf16>
    %cst_33 = arith.constant dense<0.000000e+00> : vector<64x32xf32>
    %44 = tpu.matmul %42, %43, %cst_33 {dimension_numbers = #tpu.dot_dimension_numbers<[1], [0], [0], [1], [0, 0, 1, 1], [], []>} : vector<64x32xbf16>, vector<32x32xbf16>, vector<64x32xf32> -> vector<64x32xf32>
    %45 = arith.addf %36, %44 : vector<64x32xf32>
    %c0_34 = arith.constant 0 : index
    %c0_35 = arith.constant 0 : index
    %46 = vector.load %arg12[%c0_34, %c0_35] : memref<1x32xf32, #tpu.memory_space<vmem>>, vector<1x32xf32>
    %47 = vector.broadcast %46 : vector<1x32xf32> to vector<64x32xf32>
    %48 = arith.addf %45, %47 : vector<64x32xf32>
    %c0_36 = arith.constant 0 : index
    %c0_37 = arith.constant 0 : index
    %c0_38 = arith.constant 0 : index
    %49 = vector.load %arg13[%c0_36, %c0_37, %c0_38] : memref<1x64x32xf32, #tpu.memory_space<vmem>>, vector<1x64x32xf32>
    %50 = vector.shape_cast %49 : vector<1x64x32xf32> to vector<64x32xf32>
    %51 = vector.shape_cast %48 : vector<64x32xf32> to vector<1x64x32xf32>
    tpu.vector_store %arg13[%c0_36, %c0_37, %c0_38], %51 {strides = array<i32>} : memref<1x64x32xf32, #tpu.memory_space<vmem>>, vector<1x64x32xf32>,
    return
  }
  func.func @transform_0(%arg0: i32) -> (i32, i32, i32) {
    %c0_i32 = arith.constant 0 : i32
    %c0_i32_0 = arith.constant 0 : i32
    %c0_i32_1 = arith.constant 0 : i32
    return %arg0, %c0_i32, %c0_i32_0 : i32, i32, i32
  }
  func.func @transform_1(%arg0: i32) -> (i32, i32, i32) {
    %c0_i32 = arith.constant 0 : i32
    %c0_i32_0 = arith.constant 0 : i32
    %c0_i32_1 = arith.constant 0 : i32
    return %arg0, %c0_i32, %c0_i32_0 : i32, i32, i32
  }
  func.func @transform_2(%arg0: i32) -> (i32, i32, i32) {
    %c0_i32 = arith.constant 0 : i32
    %c0_i32_0 = arith.constant 0 : i32
    %c0_i32_1 = arith.constant 0 : i32
    return %arg0, %c0_i32, %c0_i32_0 : i32, i32, i32
  }
  func.func @transform_3(%arg0: i32) -> (i32, i32) {
    %c0_i32 = arith.constant 0 : i32
    %c0_i32_0 = arith.constant 0 : i32
    %c0_i32_1 = arith.constant 0 : i32
    return %c0_i32, %c0_i32_0 : i32, i32
  }
  func.func @transform_4(%arg0: i32) -> (i32, i32) {
    %c0_i32 = arith.constant 0 : i32
    %c0_i32_0 = arith.constant 0 : i32
    %c0_i32_1 = arith.constant 0 : i32
    return %c0_i32, %c0_i32_0 : i32, i32
  }
  func.func @transform_5(%arg0: i32) -> (i32, i32) {
    %c0_i32 = arith.constant 0 : i32
    %c0_i32_0 = arith.constant 0 : i32
    %c0_i32_1 = arith.constant 0 : i32
    return %c0_i32, %c0_i32_0 : i32, i32
  }
  func.func @transform_6(%arg0: i32) -> (i32, i32) {
    %c0_i32 = arith.constant 0 : i32
    %c0_i32_0 = arith.constant 0 : i32
    %c0_i32_1 = arith.constant 0 : i32
    return %c0_i32, %c0_i32_0 : i32, i32
  }
  func.func @transform_7(%arg0: i32) -> (i32, i32) {
    %c0_i32 = arith.constant 0 : i32
    %c0_i32_0 = arith.constant 0 : i32
    %c0_i32_1 = arith.constant 0 : i32
    return %c0_i32, %c0_i32_0 : i32, i32
  }
  func.func @transform_8(%arg0: i32) -> (i32, i32) {
    %c0_i32 = arith.constant 0 : i32
    %c0_i32_0 = arith.constant 0 : i32
    %c0_i32_1 = arith.constant 0 : i32
    return %c0_i32, %c0_i32_0 : i32, i32
  }
  func.func @transform_9(%arg0: i32) -> (i32, i32) {
    %c0_i32 = arith.constant 0 : i32
    %c0_i32_0 = arith.constant 0 : i32
    %c0_i32_1 = arith.constant 0 : i32
    return %c0_i32, %c0_i32_0 : i32, i32
  }
  func.func @transform_10(%arg0: i32) -> (i32, i32) {
    %c0_i32 = arith.constant 0 : i32
    %c0_i32_0 = arith.constant 0 : i32
    %c0_i32_1 = arith.constant 0 : i32
    return %c0_i32, %c0_i32_0 : i32, i32
  }
  func.func @transform_11(%arg0: i32) -> (i32, i32) {
    %c0_i32 = arith.constant 0 : i32
    %c0_i32_0 = arith.constant 0 : i32
    %c0_i32_1 = arith.constant 0 : i32
    return %c0_i32, %c0_i32_0 : i32, i32
  }
  func.func @transform_12(%arg0: i32) -> (i32, i32, i32) {
    %c0_i32 = arith.constant 0 : i32
    %c0_i32_0 = arith.constant 0 : i32
    %c0_i32_1 = arith.constant 0 : i32
    return %arg0, %c0_i32, %c0_i32_0 : i32, i32, i32
  }
}

</mosaic_0001>

<llo_original>
// kernel: basic_attention_layer.2
$region0: #{basic_attention_layer.2}
  #allocation0 [shape = 'u32[]', space=smem, size = 0x4, offset = 0x4, fixed_abs, tag = 'smem constant byte address 0x4 - core index']
  #allocation1 [shape = 'u32[144,128]{1,0:T(1,128)}', space=vmem, size = 0x12000, scoped, tag = 'internal scratch']
  %s0 = inlined_call_operand.vmem [shape: f32[2,16,32], index: 0, kind: input, shape index: {}]
  %s1 = inlined_call_operand.vmem [shape: f32[2,64,32], index: 1, kind: input, shape index: {}]
  %s2 = inlined_call_operand.vmem [shape: f32[2,16,32], index: 2, kind: input, shape index: {}]
  %s3 = inlined_call_operand.vmem [shape: bf16[32,32], index: 3, kind: input, shape index: {}]
  %s4 = inlined_call_operand.vmem [shape: f32[1,32], index: 4, kind: input, shape index: {}]
  %s5 = inlined_call_operand.vmem [shape: bf16[32,64], index: 5, kind: input, shape index: {}]
  %s6 = inlined_call_operand.vmem [shape: f32[1,64], index: 6, kind: input, shape index: {}]
  %s7 = inlined_call_operand.vmem [shape: bf16[32,64], index: 7, kind: input, shape index: {}]
  %s8 = inlined_call_operand.vmem [shape: f32[1,64], index: 8, kind: input, shape index: {}]
  %s9 = inlined_call_operand.vmem [shape: bf16[64,32], index: 9, kind: input, shape index: {}]
  %s10 = inlined_call_operand.vmem [shape: f32[1,32], index: 10, kind: input, shape index: {}]
  %s11 = inlined_call_operand.vmem [shape: f32[2,16,32], index: 11, kind: output, shape index: {}]
  %s12 = sld [smem:[#allocation0]]
  $region77: #{basic_attention_layer.2} parent=0
    _
  %s14 = ssub.s32 1, %s12
  %s15 = scalar_select 0, %s14, %s12
  loop: start=0, step=1, limit=4
  $region2: #{basic_attention_layer.2} parent=0 // loop_pre_header
    _
  $region3: #{basic_attention_layer.2} parent=0 // loop_header
    %s17 = sphi 0, %s21
    %p18 = scmp.ge.s32.totalorder %s17, 4
    %s27 = sphi 0, %s29
    %s30 = sphi 0, %s27
    %s31 = sphi 0, %s30
    %s47 = sphi 0, %s31
    %s53 = sphi 0, %s55
    %s56 = sphi 0, %s53
    %s57 = sphi 0, %s56
    %s73 = sphi 0, %s57
    %s79 = sphi 0, %s81
    %s82 = sphi 0, %s79
    %s83 = sphi 0, %s82
    %s99 = sphi 0, %s83
    %s103 = sphi 0, %s103
    %s105 = sphi 0, %s103
    %s106 = sphi 0, %s105
    %s120 = sphi 0, %s106
    %s124 = sphi 0, %s124
    %s126 = sphi 0, %s124
    %s127 = sphi 0, %s126
    %s141 = sphi 0, %s127
    %s145 = sphi 0, %s145
    %s147 = sphi 0, %s145
    %s148 = sphi 0, %s147
    %s162 = sphi 0, %s148
    %s166 = sphi 0, %s166
    %s168 = sphi 0, %s166
    %s169 = sphi 0, %s168
    %s183 = sphi 0, %s169
    %s187 = sphi 0, %s187
    %s189 = sphi 0, %s187
    %s190 = sphi 0, %s189
    %s204 = sphi 0, %s190
    %s208 = sphi 0, %s208
    %s210 = sphi 0, %s208
    %s211 = sphi 0, %s210
    %s225 = sphi 0, %s211
    %s229 = sphi 0, %s229
    %s231 = sphi 0, %s229
    %s232 = sphi 0, %s231
    %s246 = sphi 0, %s232
    %s250 = sphi 0, %s250
    %s252 = sphi 0, %s250
    %s253 = sphi 0, %s252
    %s267 = sphi 0, %s253
    %s273 = sphi 0, %s275
    %s276 = sphi 0, %s273
    %s277 = sphi 0, %s276
    %s293 = sphi 0, %s277
  $region4: #{basic_attention_layer.2} parent=0 // loop_header_branch
    %20 = sbr.rel (%p18) target = $region8
  $region5: #{basic_attention_layer.2} parent=0 // loop_body
    %s22 = ssub.s32 %s17, 1
    %s23 = ssub.s32 %s17, 2
    %s24 = sadd.s32 %s17, 1
    %s25 = ssub.s32 %s17, %s24
    %p26 = scmp.eq.s32.totalorder %s25, 0
    %s28 = sadd.s32 %s27, 1
    %s29 = scalar_select %p26, %s27, %s28
    %p32 = pneg %p26
    %p33 = scmp.eq.s32.totalorder %s17, 1
    %p34 = por %p32, %p33
    %p35 = scmp.ne.s32.totalorder %s27, %s30
    %p36 = scmp.eq.s32.totalorder %s17, 0
    %p37 = por %p35, %p36
    %p38 = scmp.ne.s32.totalorder %s27, %s30
    %p39 = scmp.eq.s32.totalorder %s22, 1
    %p40 = por %p38, %p39
    %p41 = scmp.ne.s32.totalorder %s30, %s31
    %p42 = scmp.eq.s32.totalorder %s22, 0
    %p43 = por %p41, %p42
    %p44 = scmp.ne.s32.totalorder %s30, %s31
    %p45 = scmp.eq.s32.totalorder %s23, 1
    %p46 = por %p44, %p45
    %p48 = scmp.ne.s32.totalorder %s31, %s47
    %p49 = scmp.eq.s32.totalorder %s23, 0
    %p50 = por %p48, %p49
    %s51 = ssub.s32 %s17, %s24
    %p52 = scmp.eq.s32.totalorder %s51, 0
    %s54 = sadd.s32 %s53, 1
    %s55 = scalar_select %p52, %s53, %s54
    %p58 = pneg %p52
    %p59 = scmp.eq.s32.totalorder %s17, 1
    %p60 = por %p58, %p59
    %p61 = scmp.ne.s32.totalorder %s53, %s56
    %p62 = scmp.eq.s32.totalorder %s17, 0
    %p63 = por %p61, %p62
    %p64 = scmp.ne.s32.totalorder %s53, %s56
    %p65 = scmp.eq.s32.totalorder %s22, 1
    %p66 = por %p64, %p65
    %p67 = scmp.ne.s32.totalorder %s56, %s57
    %p68 = scmp.eq.s32.totalorder %s22, 0
    %p69 = por %p67, %p68
    %p70 = scmp.ne.s32.totalorder %s56, %s57
    %p71 = scmp.eq.s32.totalorder %s23, 1
    %p72 = por %p70, %p71
    %p74 = scmp.ne.s32.totalorder %s57, %s73
    %p75 = scmp.eq.s32.totalorder %s23, 0
    %p76 = por %p74, %p75
    %s77 = ssub.s32 %s17, %s24
    %p78 = scmp.eq.s32.totalorder %s77, 0
    %s80 = sadd.s32 %s79, 1
    %s81 = scalar_select %p78, %s79, %s80
    %p84 = pneg %p78
    %p85 = scmp.eq.s32.totalorder %s17, 1
    %p86 = por %p84, %p85
    %p87 = scmp.ne.s32.totalorder %s79, %s82
    %p88 = scmp.eq.s32.totalorder %s17, 0
    %p89 = por %p87, %p88
    %p90 = scmp.ne.s32.totalorder %s79, %s82
    %p91 = scmp.eq.s32.totalorder %s22, 1
    %p92 = por %p90, %p91
    %p93 = scmp.ne.s32.totalorder %s82, %s83
    %p94 = scmp.eq.s32.totalorder %s22, 0
    %p95 = por %p93, %p94
    %p96 = scmp.ne.s32.totalorder %s82, %s83
    %p97 = scmp.eq.s32.totalorder %s23, 1
    %p98 = por %p96, %p97
    %p100 = scmp.ne.s32.totalorder %s83, %s99
    %p101 = scmp.eq.s32.totalorder %s23, 0
    %p102 = por %p100, %p101
    %s104 = sadd.s32 %s103, 1
    %p107 = scmp.eq.s32.totalorder %s17, 1
    %p108 = scmp.ne.s32.totalorder %s103, %s105
    %p109 = scmp.eq.s32.totalorder %s17, 0
    %p110 = por %p108, %p109
    %p111 = scmp.ne.s32.totalorder %s103, %s105
    %p112 = scmp.eq.s32.totalorder %s22, 1
    %p113 = por %p111, %p112
    %p114 = scmp.ne.s32.totalorder %s105, %s106
    %p115 = scmp.eq.s32.totalorder %s22, 0
    %p116 = por %p114, %p115
    %p117 = scmp.ne.s32.totalorder %s105, %s106
    %p118 = scmp.eq.s32.totalorder %s23, 1
    %p119 = por %p117, %p118
    %p121 = scmp.ne.s32.totalorder %s106, %s120
    %p122 = scmp.eq.s32.totalorder %s23, 0
    %p123 = por %p121, %p122
    %s125 = sadd.s32 %s124, 1
    %p128 = scmp.eq.s32.totalorder %s17, 1
    %p129 = scmp.ne.s32.totalorder %s124, %s126
    %p130 = scmp.eq.s32.totalorder %s17, 0
    %p131 = por %p129, %p130
    %p132 = scmp.ne.s32.totalorder %s124, %s126
    %p133 = scmp.eq.s32.totalorder %s22, 1
    %p134 = por %p132, %p133
    %p135 = scmp.ne.s32.totalorder %s126, %s127
    %p136 = scmp.eq.s32.totalorder %s22, 0
    %p137 = por %p135, %p136
    %p138 = scmp.ne.s32.totalorder %s126, %s127
    %p139 = scmp.eq.s32.totalorder %s23, 1
    %p140 = por %p138, %p139
    %p142 = scmp.ne.s32.totalorder %s127, %s141
    %p143 = scmp.eq.s32.totalorder %s23, 0
    %p144 = por %p142, %p143
    %s146 = sadd.s32 %s145, 1
    %p149 = scmp.eq.s32.totalorder %s17, 1
    %p150 = scmp.ne.s32.totalorder %s145, %s147
    %p151 = scmp.eq.s32.totalorder %s17, 0
    %p152 = por %p150, %p151
    %p153 = scmp.ne.s32.totalorder %s145, %s147
    %p154 = scmp.eq.s32.totalorder %s22, 1
    %p155 = por %p153, %p154
    %p156 = scmp.ne.s32.totalorder %s147, %s148
    %p157 = scmp.eq.s32.totalorder %s22, 0
    %p158 = por %p156, %p157
    %p159 = scmp.ne.s32.totalorder %s147, %s148
    %p160 = scmp.eq.s32.totalorder %s23, 1
    %p161 = por %p159, %p160
    %p163 = scmp.ne.s32.totalorder %s148, %s162
    %p164 = scmp.eq.s32.totalorder %s23, 0
    %p165 = por %p163, %p164
    %s167 = sadd.s32 %s166, 1
    %p170 = scmp.eq.s32.totalorder %s17, 1
    %p171 = scmp.ne.s32.totalorder %s166, %s168
    %p172 = scmp.eq.s32.totalorder %s17, 0
    %p173 = por %p171, %p172
    %p174 = scmp.ne.s32.totalorder %s166, %s168
    %p175 = scmp.eq.s32.totalorder %s22, 1
    %p176 = por %p174, %p175
    %p177 = scmp.ne.s32.totalorder %s168, %s169
    %p178 = scmp.eq.s32.totalorder %s22, 0
    %p179 = por %p177, %p178
    %p180 = scmp.ne.s32.totalorder %s168, %s169
    %p181 = scmp.eq.s32.totalorder %s23, 1
    %p182 = por %p180, %p181
    %p184 = scmp.ne.s32.totalorder %s169, %s183
    %p185 = scmp.eq.s32.totalorder %s23, 0
    %p186 = por %p184, %p185
    %s188 = sadd.s32 %s187, 1
    %p191 = scmp.eq.s32.totalorder %s17, 1
    %p192 = scmp.ne.s32.totalorder %s187, %s189
    %p193 = scmp.eq.s32.totalorder %s17, 0
    %p194 = por %p192, %p193
    %p195 = scmp.ne.s32.totalorder %s187, %s189
    %p196 = scmp.eq.s32.totalorder %s22, 1
    %p197 = por %p195, %p196
    %p198 = scmp.ne.s32.totalorder %s189, %s190
    %p199 = scmp.eq.s32.totalorder %s22, 0
    %p200 = por %p198, %p199
    %p201 = scmp.ne.s32.totalorder %s189, %s190
    %p202 = scmp.eq.s32.totalorder %s23, 1
    %p203 = por %p201, %p202
    %p205 = scmp.ne.s32.totalorder %s190, %s204
    %p206 = scmp.eq.s32.totalorder %s23, 0
    %p207 = por %p205, %p206
    %s209 = sadd.s32 %s208, 1
    %p212 = scmp.eq.s32.totalorder %s17, 1
    %p213 = scmp.ne.s32.totalorder %s208, %s210
    %p214 = scmp.eq.s32.totalorder %s17, 0
    %p215 = por %p213, %p214
    %p216 = scmp.ne.s32.totalorder %s208, %s210
    %p217 = scmp.eq.s32.totalorder %s22, 1
    %p218 = por %p216, %p217
    %p219 = scmp.ne.s32.totalorder %s210, %s211
    %p220 = scmp.eq.s32.totalorder %s22, 0
    %p221 = por %p219, %p220
    %p222 = scmp.ne.s32.totalorder %s210, %s211
    %p223 = scmp.eq.s32.totalorder %s23, 1
    %p224 = por %p222, %p223
    %p226 = scmp.ne.s32.totalorder %s211, %s225
    %p227 = scmp.eq.s32.totalorder %s23, 0
    %p228 = por %p226, %p227
    %s230 = sadd.s32 %s229, 1
    %p233 = scmp.eq.s32.totalorder %s17, 1
    %p234 = scmp.ne.s32.totalorder %s229, %s231
    %p235 = scmp.eq.s32.totalorder %s17, 0
    %p236 = por %p234, %p235
    %p237 = scmp.ne.s32.totalorder %s229, %s231
    %p238 = scmp.eq.s32.totalorder %s22, 1
    %p239 = por %p237, %p238
    %p240 = scmp.ne.s32.totalorder %s231, %s232
    %p241 = scmp.eq.s32.totalorder %s22, 0
    %p242 = por %p240, %p241
    %p243 = scmp.ne.s32.totalorder %s231, %s232
    %p244 = scmp.eq.s32.totalorder %s23, 1
    %p245 = por %p243, %p244
    %p247 = scmp.ne.s32.totalorder %s232, %s246
    %p248 = scmp.eq.s32.totalorder %s23, 0
    %p249 = por %p247, %p248
    %s251 = sadd.s32 %s250, 1
    %p254 = scmp.eq.s32.totalorder %s17, 1
    %p255 = scmp.ne.s32.totalorder %s250, %s252
    %p256 = scmp.eq.s32.totalorder %s17, 0
    %p257 = por %p255, %p256
    %p258 = scmp.ne.s32.totalorder %s250, %s252
    %p259 = scmp.eq.s32.totalorder %s22, 1
    %p260 = por %p258, %p259
    %p261 = scmp.ne.s32.totalorder %s252, %s253
    %p262 = scmp.eq.s32.totalorder %s22, 0
    %p263 = por %p261, %p262
    %p264 = scmp.ne.s32.totalorder %s252, %s253
    %p265 = scmp.eq.s32.totalorder %s23, 1
    %p266 = por %p264, %p265
    %p268 = scmp.ne.s32.totalorder %s253, %s267
    %p269 = scmp.eq.s32.totalorder %s23, 0
    %p270 = por %p268, %p269
    %s271 = ssub.s32 %s17, %s24
    %p272 = scmp.eq.s32.totalorder %s271, 0
    %s274 = sadd.s32 %s273, 1
    %s275 = scalar_select %p272, %s273, %s274
    %p278 = pneg %p272
    %p279 = scmp.eq.s32.totalorder %s17, 1
    %p280 = por %p278, %p279
    %p281 = scmp.ne.s32.totalorder %s273, %s276
    %p282 = scmp.eq.s32.totalorder %s17, 0
    %p283 = por %p281, %p282
    %p284 = scmp.ne.s32.totalorder %s273, %s276
    %p285 = scmp.eq.s32.totalorder %s22, 1
    %p286 = por %p284, %p285
    %p287 = scmp.ne.s32.totalorder %s276, %s277
    %p288 = scmp.eq.s32.totalorder %s22, 0
    %p289 = por %p287, %p288
    %p290 = scmp.ne.s32.totalorder %s276, %s277
    %p291 = scmp.eq.s32.totalorder %s23, 1
    %p292 = por %p290, %p291
    %p294 = scmp.ne.s32.totalorder %s277, %s293
    %p295 = scmp.eq.s32.totalorder %s23, 0
    %p296 = por %p294, %p295
    %p297 = scmp.le.s32.totalorder 1, %s17
    %p298 = scmp.lt.s32.totalorder %s17, 3
    %p299 = pnand %p297, %p298
    %p300 = pneg %p299
    // Predicated region
    $region9: #{basic_attention_layer.2} parent=5 // pred_check
      _
    $region10: #{basic_attention_layer.2} parent=5 // pred_check_branch
      %302 = sbr.rel (%p299) target = $region12
    $region11: #{basic_attention_layer.2} parent=5 // pred_region
      %s303 = ssub.s32 %s17, 1
      // Predicated region
      $region13: #{basic_attention_layer.2} parent=11 // pred_check
        %p304 = pneg %p116
      $region14: #{basic_attention_layer.2} parent=11 // pred_check_branch
        %306 = sbr.rel (%p304) target = $region16
      $region15: #{basic_attention_layer.2} parent=11 // pred_region
        _
      $region16: #{basic_attention_layer.2} parent=11 // pred_fallthru
        _
      // Predicated region
      $region17: #{basic_attention_layer.2} parent=11 // pred_check
        %p307 = pneg %p137
      $region18: #{basic_attention_layer.2} parent=11 // pred_check_branch
        %309 = sbr.rel (%p307) target = $region20
      $region19: #{basic_attention_layer.2} parent=11 // pred_region
        _
      $region20: #{basic_attention_layer.2} parent=11 // pred_fallthru
        _
      // Predicated region
      $region21: #{basic_attention_layer.2} parent=11 // pred_check
        %p310 = pneg %p158
      $region22: #{basic_attention_layer.2} parent=11 // pred_check_branch
        %312 = sbr.rel (%p310) target = $region24
      $region23: #{basic_attention_layer.2} parent=11 // pred_region
        _
      $region24: #{basic_attention_layer.2} parent=11 // pred_fallthru
        _
      // Predicated region
      $region25: #{basic_attention_layer.2} parent=11 // pred_check
        %p313 = pneg %p179
      $region26: #{basic_attention_layer.2} parent=11 // pred_check_branch
        %315 = sbr.rel (%p313) target = $region28
      $region27: #{basic_attention_layer.2} parent=11 // pred_region
        _
      $region28: #{basic_attention_layer.2} parent=11 // pred_fallthru
        _
      // Predicated region
      $region29: #{basic_attention_layer.2} parent=11 // pred_check
        %p316 = pneg %p200
      $region30: #{basic_attention_layer.2} parent=11 // pred_check_branch
        %318 = sbr.rel (%p316) target = $region32
      $region31: #{basic_attention_layer.2} parent=11 // pred_region
        _
      $region32: #{basic_attention_layer.2} parent=11 // pred_fallthru
        _
      // Predicated region
      $region33: #{basic_attention_layer.2} parent=11 // pred_check
        %p319 = pneg %p221
      $region34: #{basic_attention_layer.2} parent=11 // pred_check_branch
        %321 = sbr.rel (%p319) target = $region36
      $region35: #{basic_attention_layer.2} parent=11 // pred_region
        _
      $region36: #{basic_attention_layer.2} parent=11 // pred_fallthru
        _
      // Predicated region
      $region37: #{basic_attention_layer.2} parent=11 // pred_check
        %p322 = pneg %p242
      $region38: #{basic_attention_layer.2} parent=11 // pred_check_branch
        %324 = sbr.rel (%p322) target = $region40
      $region39: #{basic_attention_layer.2} parent=11 // pred_region
        _
      $region40: #{basic_attention_layer.2} parent=11 // pred_fallthru
        _
      // Predicated region
      $region41: #{basic_attention_layer.2} parent=11 // pred_check
        %p325 = pneg %p263
      $region42: #{basic_attention_layer.2} parent=11 // pred_check_branch
        %327 = sbr.rel (%p325) target = $region44
      $region43: #{basic_attention_layer.2} parent=11 // pred_region
        _
      $region44: #{basic_attention_layer.2} parent=11 // pred_fallthru
        _
    $region12: #{basic_attention_layer.2} parent=5 // pred_fallthru
      _
    %p328 = scmp.lt.s32.totalorder %s17, 2
    // Predicated region
    $region45: #{basic_attention_layer.2} parent=5 // pred_check
      %p329 = pneg %p328
    $region46: #{basic_attention_layer.2} parent=5 // pred_check_branch
      %331 = sbr.rel (%p329) target = $region48
    $region47: #{basic_attention_layer.2} parent=5 // pred_region
      // Predicated region
      $region49: #{basic_attention_layer.2} parent=47 // pred_check
        %p332 = pneg %p37
      $region50: #{basic_attention_layer.2} parent=47 // pred_check_branch
        %334 = sbr.rel (%p332) target = $region52
      $region51: #{basic_attention_layer.2} parent=47 // pred_region
        %p335 = scmp.lt.s32.totalorder %s17, 1
        %s336 = scalar_select %p335, %s17, 1
        %s337 = smul.addr %s336, 2
        %s338 = smul.addr %s337, 8
        %s339 = scalar_lea.vmem %s0, %s338
      $region52: #{basic_attention_layer.2} parent=47 // pred_fallthru
        _
      // Predicated region
      $region53: #{basic_attention_layer.2} parent=47 // pred_check
        %p340 = pneg %p63
      $region54: #{basic_attention_layer.2} parent=47 // pred_check_branch
        %342 = sbr.rel (%p340) target = $region56
      $region55: #{basic_attention_layer.2} parent=47 // pred_region
        %p343 = scmp.lt.s32.totalorder %s17, 1
        %s344 = scalar_select %p343, %s17, 1
        %s345 = smul.addr %s344, 8
        %s346 = smul.addr %s345, 8
        %s347 = scalar_lea.vmem %s1, %s346
      $region56: #{basic_attention_layer.2} parent=47 // pred_fallthru
        _
      // Predicated region
      $region57: #{basic_attention_layer.2} parent=47 // pred_check
        %p348 = pneg %p89
      $region58: #{basic_attention_layer.2} parent=47 // pred_check_branch
        %350 = sbr.rel (%p348) target = $region60
      $region59: #{basic_attention_layer.2} parent=47 // pred_region
        %p351 = scmp.lt.s32.totalorder %s17, 1
        %s352 = scalar_select %p351, %s17, 1
        %s353 = smul.addr %s352, 2
        %s354 = smul.addr %s353, 8
        %s355 = scalar_lea.vmem %s2, %s354
      $region60: #{basic_attention_layer.2} parent=47 // pred_fallthru
        _
    $region48: #{basic_attention_layer.2} parent=5 // pred_fallthru
      _
    %p356 = scmp.le.s32.totalorder 1, %s17
    %p357 = scmp.lt.s32.totalorder %s17, 3
    %p358 = pnand %p356, %p357
    %p359 = pneg %p358
    // Predicated region
    $region61: #{basic_attention_layer.2} parent=5 // pred_check
      _
    $region62: #{basic_attention_layer.2} parent=5 // pred_check_branch
      %361 = sbr.rel (%p358) target = $region64
    $region63: #{basic_attention_layer.2} parent=5 // pred_region
      %s362 = ssub.s32 %s17, 1
      %p363 = scmp.lt.s32.totalorder %s22, 1
      %s364 = scalar_select %p363, %s22, 1
      %s365 = smul.addr %s364, 2
      %s366 = smul.addr %s365, 8
      %s367 = scalar_lea.vmem %s0, %s366
      %p368 = pneg %p43
      %p369 = pneg %p40
      %p370 = scmp.lt.s32.totalorder %s22, 1
      %s371 = scalar_select %p370, %s22, 1
      %s372 = smul.addr %s371, 8
      %s373 = smul.addr %s372, 8
      %s374 = scalar_lea.vmem %s1, %s373
      %p375 = pneg %p69
      %p376 = pneg %p66
      %p377 = scmp.lt.s32.totalorder %s22, 1
      %s378 = scalar_select %p377, %s22, 1
      %s379 = smul.addr %s378, 2
      %s380 = smul.addr %s379, 8
      %s381 = scalar_lea.vmem %s2, %s380
      %p382 = pneg %p95
      %p383 = pneg %p92
      %p384 = pneg %p116
      %p385 = pneg %p113
      %p386 = pneg %p137
      %p387 = pneg %p134
      %p388 = pneg %p158
      %p389 = pneg %p155
      %p390 = pneg %p179
      %p391 = pneg %p176
      %p392 = pneg %p200
      %p393 = pneg %p197
      %p394 = pneg %p221
      %p395 = pneg %p218
      %p396 = pneg %p242
      %p397 = pneg %p239
      %p398 = pneg %p263
      %p399 = pneg %p260
      %p400 = pneg %p289
      %p401 = pneg %p286
      %p402 = scmp.lt.s32.totalorder %s22, 1
      %s403 = scalar_select %p402, %s22, 1
      %s404 = smul.addr %s403, 2
      %s405 = smul.addr %s404, 8
      %s406 = scalar_lea.vmem %s11, %s405
      %p407 = scmp.lt.s32.totalorder %s22, 1
      %s408 = scalar_select %p407, %s22, 1
      %s409 = smul.addr %s408, 2
      %s410 = smul.addr %s409, 8
      %s411 = scalar_lea.vmem %s0, %s410
      %p412 = scmp.lt.s32.totalorder %s22, 1
      %s413 = scalar_select %p412, %s22, 1
      %s414 = smul.addr %s413, 8
      %s415 = smul.addr %s414, 8
      %s416 = scalar_lea.vmem %s1, %s415
      %p417 = scmp.lt.s32.totalorder %s22, 1
      %s418 = scalar_select %p417, %s22, 1
      %s419 = smul.addr %s418, 2
      %s420 = smul.addr %s419, 8
      %s421 = scalar_lea.vmem %s2, %s420
      %p422 = scmp.lt.s32.totalorder %s22, 1
      %s423 = scalar_select %p422, %s22, 1
      %s424 = smul.addr %s423, 2
      %s425 = smul.addr %s424, 8
      %s426 = scalar_lea.vmem %s11, %s425
      %v428 = vld [vmem:[%s411] sm:$0xff]
      %v429 = vld [vmem:[%s411 + $0x8] sm:$0xff]
      %v430 = vld [vmem:[%s416] sm:$0xff]
      %v431 = vld [vmem:[%s416 + $0x8] sm:$0xff]
      %v432 = vld [vmem:[%s416 + $0x10] sm:$0xff]
      %v433 = vld [vmem:[%s416 + $0x18] sm:$0xff]
      %v434 = vld [vmem:[%s416 + $0x20] sm:$0xff]
      %v435 = vld [vmem:[%s416 + $0x28] sm:$0xff]
      %v436 = vld [vmem:[%s416 + $0x30] sm:$0xff]
      %v437 = vld [vmem:[%s416 + $0x38] sm:$0xff]
      %v438 = vld [vmem:[%s421] sm:$0xff]
      %v439 = vld [vmem:[%s421 + $0x8] sm:$0xff]
      %v440 = vpack.c.bf16 %v429, %v428
      %v441 = vld [vmem:[%s3] sm:$0xf]
      %v442 = vld [vmem:[%s3 + $0x4] sm:$0xf]
      %v443 = vld [vmem:[%s3 + $0x8] sm:$0xf]
      %v444 = vld [vmem:[%s3 + $0xc] sm:$0xf]
      %v445 = vld [vmem:[%s4] sm:$0x1]
      %v447 = vlaneseq
      %v448 = vshrl.u32 %v447, 7
      %v449 = vsub.s32 0, %v448
      %v450 = vrot.slane %v445, %v449
      %v456 = vunpack.c.l.b16 %v441
      %v457 = vunpack.c.l.b16 %v442
      %v458 = vunpack.c.l.b16 %v443
      %v459 = vunpack.c.l.b16 %v444
      %v460 = vpack.c.b16 %v457, %v456
      %v461 = vpack.c.b16 %v459, %v458
      %vm464 = vcmask 261120
      %v466 = vsel %vm464, %v440, 0
      %468 = vmatprep.subr.bf16.mxu0 0
      %469 = vmatpush1.bf16.msra.mxu0 %v460
      %470 = vmatprep.subr.bf16.mxu0 0
      %471 = vmatpush1.bf16.msra.mxu0 %v461
      %472 = vmatprep.subr.bf16.mxu0 0
      %473 = vmatpush1.bf16.msra.mxu0 0
      %474 = vmatprep.subr.bf16.mxu0 0
      %475 = vmatpush1.bf16.msra.mxu0 0
      %476 = vmatprep.subr.bf16.mxu0 0
      %477 = vmatpush1.bf16.msra.mxu0 0
      %478 = vmatprep.subr.bf16.mxu0 0
      %479 = vmatpush1.bf16.msra.mxu0 0
      %480 = vmatprep.subr.bf16.mxu0 0
      %481 = vmatpush1.bf16.msra.mxu0 0
      %482 = vmatprep.subr.bf16.mxu0 0
      %483 = vmatpush1.bf16.msra.mxu0 0
      %484 = vmatprep.subr.bf16.mxu0 0
      %485 = vmatpush1.bf16.msra.mxu0 0
      %486 = vmatprep.subr.bf16.mxu0 0
      %487 = vmatpush1.bf16.msra.mxu0 0
      %488 = vmatprep.subr.bf16.mxu0 0
      %489 = vmatpush1.bf16.msra.mxu0 0
      %490 = vmatprep.subr.bf16.mxu0 0
      %491 = vmatpush1.bf16.msra.mxu0 0
      %492 = vmatprep.subr.bf16.mxu0 0
      %493 = vmatpush1.bf16.msra.mxu0 0
      %494 = vmatprep.subr.bf16.mxu0 0
      %495 = vmatpush1.bf16.msra.mxu0 0
      %496 = vmatprep.subr.bf16.mxu0 0
      %497 = vmatpush1.bf16.msra.mxu0 0
      %498 = vmatprep.subr.bf16.mxu0 0
      %499 = vmatpush1.bf16.msra.mxu0 0
      %500 = vmatprep.mubr.bf16.mxu0 0
      %501 = vmatmul.mubr.bf16.gmra.mrb[0].mxu0 %v466
      %v502 = vpop.f32.mrb[0].mxu0
      %v503 = vadd.f32 %v450, %v502
      %v504 = vpop.f32.mrb[0].mxu0
      %v505 = vpop.f32.mrb[0].mxu0
      %v506 = vadd.f32 %v450, %v505
      %v507 = vpop.f32.mrb[0].mxu0
      %508 = vdwg.mxu0
      %v509 = vpack.c.bf16 %v431, %v430
      %v510 = vpack.c.bf16 %v433, %v432
      %v511 = vpack.c.bf16 %v435, %v434
      %v512 = vpack.c.bf16 %v437, %v436
      %v513 = vld [vmem:[%s5] sm:$0xf]
      %v514 = vld [vmem:[%s5 + $0x4] sm:$0xf]
      %v515 = vld [vmem:[%s5 + $0x8] sm:$0xf]
      %v516 = vld [vmem:[%s5 + $0xc] sm:$0xf]
      %v517 = vld [vmem:[%s6] sm:$0x1]
      %v519 = vlaneseq
      %v520 = vshrl.u32 %v519, 7
      %v521 = vsub.s32 0, %v520
      %v522 = vrot.slane %v517, %v521
      %v528 = vunpack.c.l.b16 %v513
      %v529 = vunpack.c.l.b16 %v514
      %v530 = vunpack.c.l.b16 %v515
      %v531 = vunpack.c.l.b16 %v516
      %v532 = vpack.c.b16 %v529, %v528
      %v533 = vpack.c.b16 %v531, %v530
      %v537 = vsel %vm464, %v509, 0
      %v540 = vsel %vm464, %v510, 0
      %v543 = vsel %vm464, %v511, 0
      %v546 = vsel %vm464, %v512, 0
      %548 = vmatprep.subr.bf16.mxu0 0
      %549 = vmatpush1.bf16.msra.mxu0 %v532
      %550 = vmatprep.subr.bf16.mxu0 0
      %551 = vmatpush1.bf16.msra.mxu0 %v533
      %552 = vmatprep.subr.bf16.mxu0 0
      %553 = vmatpush1.bf16.msra.mxu0 0
      %554 = vmatprep.subr.bf16.mxu0 0
      %555 = vmatpush1.bf16.msra.mxu0 0
      %556 = vmatprep.subr.bf16.mxu0 0
      %557 = vmatpush1.bf16.msra.mxu0 0
      %558 = vmatprep.subr.bf16.mxu0 0
      %559 = vmatpush1.bf16.msra.mxu0 0
      %560 = vmatprep.subr.bf16.mxu0 0
      %561 = vmatpush1.bf16.msra.mxu0 0
      %562 = vmatprep.subr.bf16.mxu0 0
      %563 = vmatpush1.bf16.msra.mxu0 0
      %564 = vmatprep.subr.bf16.mxu0 0
      %565 = vmatpush1.bf16.msra.mxu0 0
      %566 = vmatprep.subr.bf16.mxu0 0
      %567 = vmatpush1.bf16.msra.mxu0 0
      %568 = vmatprep.subr.bf16.mxu0 0
      %569 = vmatpush1.bf16.msra.mxu0 0
      %570 = vmatprep.subr.bf16.mxu0 0
      %571 = vmatpush1.bf16.msra.mxu0 0
      %572 = vmatprep.subr.bf16.mxu0 0
      %573 = vmatpush1.bf16.msra.mxu0 0
      %574 = vmatprep.subr.bf16.mxu0 0
      %575 = vmatpush1.bf16.msra.mxu0 0
      %576 = vmatprep.subr.bf16.mxu0 0
      %577 = vmatpush1.bf16.msra.mxu0 0
      %578 = vmatprep.subr.bf16.mxu0 0
      %579 = vmatpush1.bf16.msra.mxu0 0
      %580 = vmatprep.mubr.bf16.mxu0 0
      %581 = vmatmul.mubr.bf16.gmra.mrb[0].mxu0 %v537
      %v582 = vpop.f32.mrb[0].mxu0
      %v583 = vadd.f32 %v522, %v582
      %v584 = vpop.f32.mrb[0].mxu0
      %v585 = vpop.f32.mrb[0].mxu0
      %v586 = vadd.f32 %v522, %v585
      %v587 = vpop.f32.mrb[0].mxu0
      %588 = vmatprep.mubr.bf16.mxu0 0
      %589 = vmatmul.mubr.bf16.gmra.mrb[0].mxu0 %v540
      %v590 = vpop.f32.mrb[0].mxu0
      %v591 = vadd.f32 %v522, %v590
      %v592 = vpop.f32.mrb[0].mxu0
      %v593 = vpop.f32.mrb[0].mxu0
      %v594 = vadd.f32 %v522, %v593
      %v595 = vpop.f32.mrb[0].mxu0
      %596 = vmatprep.mubr.bf16.mxu0 0
      %597 = vmatmul.mubr.bf16.gmra.mrb[0].mxu0 %v543
      %v598 = vpop.f32.mrb[0].mxu0
      %v599 = vadd.f32 %v522, %v598
      %v600 = vpop.f32.mrb[0].mxu0
      %v601 = vpop.f32.mrb[0].mxu0
      %v602 = vadd.f32 %v522, %v601
      %v603 = vpop.f32.mrb[0].mxu0
      %604 = vmatprep.mubr.bf16.mxu0 0
      %605 = vmatmul.mubr.bf16.gmra.mrb[0].mxu0 %v546
      %v606 = vpop.f32.mrb[0].mxu0
      %v607 = vadd.f32 %v522, %v606
      %v608 = vpop.f32.mrb[0].mxu0
      %v609 = vpop.f32.mrb[0].mxu0
      %v610 = vadd.f32 %v522, %v609
      %v611 = vpop.f32.mrb[0].mxu0
      %612 = vdwg.mxu0
      %615 = vrot.lane.b32.xlu0 %v503, 120
      %v616 = vpop.permute.xlu0 %615
      %617 = vrot.lane.b32.xlu0 %v506, 120
      %v618 = vpop.permute.xlu0 %617
      %621 = vrot.lane.b32.xlu0 %v503, 112
      %v622 = vpop.permute.xlu0 %621
      %623 = vrot.lane.b32.xlu0 %v506, 112
      %v624 = vpop.permute.xlu0 %623
      %627 = vrot.lane.b32.xlu0 %v503, 104
      %v628 = vpop.permute.xlu0 %627
      %629 = vrot.lane.b32.xlu0 %v506, 104
      %v630 = vpop.permute.xlu0 %629
      %v633 = vcombine.low %v503, %v622
      %v634 = vcombine.high %v503, %v622
      %v636 = vunpack.c.l.s4 1983009808
      %v637 = vunpack.c.0.s8 %v636
      %v638 = vlaneseq
      %v639 = vshrl.u32 %v638, 7
      %v640 = vsub.s32 %v637, %v639
      %v641 = vrot.slane %v633, %v640
      %v643 = vunpack.c.l.s4 1983009808
      %v644 = vunpack.c.0.s8 %v643
      %v645 = vlaneseq
      %v646 = vshrl.u32 %v645, 7
      %v647 = vsub.s32 %v644, %v646
      %v648 = vrot.slane %v634, %v647
      %v649 = vcombine.low %v616, %v628
      %v650 = vcombine.high %v616, %v628
      %v652 = vunpack.c.l.s4 1983009808
      %v653 = vunpack.c.0.s8 %v652
      %v654 = vlaneseq
      %v655 = vshrl.u32 %v654, 7
      %v656 = vsub.s32 %v653, %v655
      %v657 = vrot.slane %v649, %v656
      %v659 = vunpack.c.l.s4 1983009808
      %v660 = vunpack.c.0.s8 %v659
      %v661 = vlaneseq
      %v662 = vshrl.u32 %v661, 7
      %v663 = vsub.s32 %v660, %v662
      %v664 = vrot.slane %v650, %v663
      %v665 = vcombine.low %v641, %v657
      %v666 = vcombine.high %v641, %v657
      %v668 = vunpack.c.l.s4 1934713408
      %v669 = vunpack.c.0.s8 %v668
      %v670 = vlaneseq
      %v671 = vshrl.u32 %v670, 7
      %v672 = vsub.s32 %v669, %v671
      %v673 = vrot.slane %v665, %v672
      %v675 = vunpack.c.l.s4 1934713408
      %v676 = vunpack.c.0.s8 %v675
      %v677 = vlaneseq
      %v678 = vshrl.u32 %v677, 7
      %v679 = vsub.s32 %v676, %v678
      %v680 = vrot.slane %v666, %v679
      %v681 = vcombine.low %v648, %v664
      %v682 = vcombine.high %v648, %v664
      %v684 = vunpack.c.l.s4 1934713408
      %v685 = vunpack.c.0.s8 %v684
      %v686 = vlaneseq
      %v687 = vshrl.u32 %v686, 7
      %v688 = vsub.s32 %v685, %v687
      %v689 = vrot.slane %v681, %v688
      %v691 = vunpack.c.l.s4 1934713408
      %v692 = vunpack.c.0.s8 %v691
      %v693 = vlaneseq
      %v694 = vshrl.u32 %v693, 7
      %v695 = vsub.s32 %v692, %v694
      %v696 = vrot.slane %v682, %v695
      %v697 = vcombine.high %v673, 0.0
      %v698 = vcombine.high %v680, 0.0
      %v699 = vcombine.high %v689, 0.0
      %v700 = vcombine.high %v696, 0.0
      %v701 = vcombine.low %v506, %v624
      %v702 = vcombine.high %v506, %v624
      %v704 = vunpack.c.l.s4 1983009808
      %v705 = vunpack.c.0.s8 %v704
      %v706 = vlaneseq
      %v707 = vshrl.u32 %v706, 7
      %v708 = vsub.s32 %v705, %v707
      %v709 = vrot.slane %v701, %v708
      %v711 = vunpack.c.l.s4 1983009808
      %v712 = vunpack.c.0.s8 %v711
      %v713 = vlaneseq
      %v714 = vshrl.u32 %v713, 7
      %v715 = vsub.s32 %v712, %v714
      %v716 = vrot.slane %v702, %v715
      %v717 = vcombine.low %v618, %v630
      %v718 = vcombine.high %v618, %v630
      %v720 = vunpack.c.l.s4 1983009808
      %v721 = vunpack.c.0.s8 %v720
      %v722 = vlaneseq
      %v723 = vshrl.u32 %v722, 7
      %v724 = vsub.s32 %v721, %v723
      %v725 = vrot.slane %v717, %v724
      %v727 = vunpack.c.l.s4 1983009808
      %v728 = vunpack.c.0.s8 %v727
      %v729 = vlaneseq
      %v730 = vshrl.u32 %v729, 7
      %v731 = vsub.s32 %v728, %v730
      %v732 = vrot.slane %v718, %v731
      %v733 = vcombine.low %v709, %v725
      %v734 = vcombine.high %v709, %v725
      %v736 = vunpack.c.l.s4 1934713408
      %v737 = vunpack.c.0.s8 %v736
      %v738 = vlaneseq
      %v739 = vshrl.u32 %v738, 7
      %v740 = vsub.s32 %v737, %v739
      %v741 = vrot.slane %v733, %v740
      %v743 = vunpack.c.l.s4 1934713408
      %v744 = vunpack.c.0.s8 %v743
      %v745 = vlaneseq
      %v746 = vshrl.u32 %v745, 7
      %v747 = vsub.s32 %v744, %v746
      %v748 = vrot.slane %v734, %v747
      %v749 = vcombine.low %v716, %v732
      %v750 = vcombine.high %v716, %v732
      %v752 = vunpack.c.l.s4 1934713408
      %v753 = vunpack.c.0.s8 %v752
      %v754 = vlaneseq
      %v755 = vshrl.u32 %v754, 7
      %v756 = vsub.s32 %v753, %v755
      %v757 = vrot.slane %v749, %v756
      %v759 = vunpack.c.l.s4 1934713408
      %v760 = vunpack.c.0.s8 %v759
      %v761 = vlaneseq
      %v762 = vshrl.u32 %v761, 7
      %v763 = vsub.s32 %v760, %v762
      %v764 = vrot.slane %v750, %v763
      %v765 = vcombine.high %v741, 0.0
      %v766 = vcombine.high %v748, 0.0
      %v767 = vcombine.high %v757, 0.0
      %v768 = vcombine.high %v764, 0.0
      %v769 = vcombine.low %v673, %v680
      %v771 = vunpack.c.l.s4 1983009808
      %v772 = vunpack.c.0.s8 %v771
      %v773 = vlaneseq
      %v774 = vshrl.u32 %v773, 7
      %v775 = vsub.s32 %v772, %v774
      %v776 = vrot.slane %v769, %v775
      %v777 = vcombine.low %v697, %v698
      %v779 = vunpack.c.l.s4 1983009808
      %v780 = vunpack.c.0.s8 %v779
      %v781 = vlaneseq
      %v782 = vshrl.u32 %v781, 7
      %v783 = vsub.s32 %v780, %v782
      %v784 = vrot.slane %v777, %v783
      %v785 = vcombine.low %v689, %v696
      %v787 = vunpack.c.l.s4 1983009808
      %v788 = vunpack.c.0.s8 %v787
      %v789 = vlaneseq
      %v790 = vshrl.u32 %v789, 7
      %v791 = vsub.s32 %v788, %v790
      %v792 = vrot.slane %v785, %v791
      %v793 = vcombine.low %v699, %v700
      %v795 = vunpack.c.l.s4 1983009808
      %v796 = vunpack.c.0.s8 %v795
      %v797 = vlaneseq
      %v798 = vshrl.u32 %v797, 7
      %v799 = vsub.s32 %v796, %v798
      %v800 = vrot.slane %v793, %v799
      %v801 = vcombine.low %v776, %v784
      %v802 = vcombine.high %v776, %v784
      %v804 = vunpack.c.l.s4 1934713408
      %v805 = vunpack.c.0.s8 %v804
      %v806 = vlaneseq
      %v807 = vshrl.u32 %v806, 7
      %v808 = vsub.s32 %v805, %v807
      %v809 = vrot.slane %v801, %v808
      %v811 = vunpack.c.l.s4 1934713408
      %v812 = vunpack.c.0.s8 %v811
      %v813 = vlaneseq
      %v814 = vshrl.u32 %v813, 7
      %v815 = vsub.s32 %v812, %v814
      %v816 = vrot.slane %v802, %v815
      %v817 = vcombine.low %v792, %v800
      %v818 = vcombine.high %v792, %v800
      %v820 = vunpack.c.l.s4 1934713408
      %v821 = vunpack.c.0.s8 %v820
      %v822 = vlaneseq
      %v823 = vshrl.u32 %v822, 7
      %v824 = vsub.s32 %v821, %v823
      %v825 = vrot.slane %v817, %v824
      %v827 = vunpack.c.l.s4 1934713408
      %v828 = vunpack.c.0.s8 %v827
      %v829 = vlaneseq
      %v830 = vshrl.u32 %v829, 7
      %v831 = vsub.s32 %v828, %v830
      %v832 = vrot.slane %v818, %v831
      %v833 = vcombine.low %v809, %v825
      %v834 = vcombine.high %v809, %v825
      %v835 = vcombine.low %v816, %v832
      %v836 = vcombine.high %v816, %v832
      %v837 = vcombine.low %v741, %v748
      %v839 = vunpack.c.l.s4 1983009808
      %v840 = vunpack.c.0.s8 %v839
      %v841 = vlaneseq
      %v842 = vshrl.u32 %v841, 7
      %v843 = vsub.s32 %v840, %v842
      %v844 = vrot.slane %v837, %v843
      %v845 = vcombine.low %v765, %v766
      %v847 = vunpack.c.l.s4 1983009808
      %v848 = vunpack.c.0.s8 %v847
      %v849 = vlaneseq
      %v850 = vshrl.u32 %v849, 7
      %v851 = vsub.s32 %v848, %v850
      %v852 = vrot.slane %v845, %v851
      %v853 = vcombine.low %v757, %v764
      %v855 = vunpack.c.l.s4 1983009808
      %v856 = vunpack.c.0.s8 %v855
      %v857 = vlaneseq
      %v858 = vshrl.u32 %v857, 7
      %v859 = vsub.s32 %v856, %v858
      %v860 = vrot.slane %v853, %v859
      %v861 = vcombine.low %v767, %v768
      %v863 = vunpack.c.l.s4 1983009808
      %v864 = vunpack.c.0.s8 %v863
      %v865 = vlaneseq
      %v866 = vshrl.u32 %v865, 7
      %v867 = vsub.s32 %v864, %v866
      %v868 = vrot.slane %v861, %v867
      %v869 = vcombine.low %v844, %v852
      %v870 = vcombine.high %v844, %v852
      %v872 = vunpack.c.l.s4 1934713408
      %v873 = vunpack.c.0.s8 %v872
      %v874 = vlaneseq
      %v875 = vshrl.u32 %v874, 7
      %v876 = vsub.s32 %v873, %v875
      %v877 = vrot.slane %v869, %v876
      %v879 = vunpack.c.l.s4 1934713408
      %v880 = vunpack.c.0.s8 %v879
      %v881 = vlaneseq
      %v882 = vshrl.u32 %v881, 7
      %v883 = vsub.s32 %v880, %v882
      %v884 = vrot.slane %v870, %v883
      %v885 = vcombine.low %v860, %v868
      %v886 = vcombine.high %v860, %v868
      %v888 = vunpack.c.l.s4 1934713408
      %v889 = vunpack.c.0.s8 %v888
      %v890 = vlaneseq
      %v891 = vshrl.u32 %v890, 7
      %v892 = vsub.s32 %v889, %v891
      %v893 = vrot.slane %v885, %v892
      %v895 = vunpack.c.l.s4 1934713408
      %v896 = vunpack.c.0.s8 %v895
      %v897 = vlaneseq
      %v898 = vshrl.u32 %v897, 7
      %v899 = vsub.s32 %v896, %v898
      %v900 = vrot.slane %v886, %v899
      %v901 = vcombine.low %v877, %v893
      %v902 = vcombine.high %v877, %v893
      %v903 = vcombine.low %v884, %v900
      %v904 = vcombine.high %v884, %v900
      %v905 = vpack.c.bf16 %v901, %v833
      %v906 = vpack.c.bf16 %v902, %v834
      %v907 = vpack.c.bf16 %v903, %v835
      %v908 = vpack.c.bf16 %v904, %v836
      %917 = vrot.lane.b32.xlu0 %v583, 120
      %v918 = vpop.permute.xlu0 %917
      %919 = vrot.lane.b32.xlu0 %v586, 120
      %v920 = vpop.permute.xlu0 %919
      %921 = vrot.lane.b32.xlu0 %v591, 120
      %v922 = vpop.permute.xlu0 %921
      %923 = vrot.lane.b32.xlu0 %v594, 120
      %v924 = vpop.permute.xlu0 %923
      %925 = vrot.lane.b32.xlu0 %v599, 120
      %v926 = vpop.permute.xlu0 %925
      %927 = vrot.lane.b32.xlu0 %v602, 120
      %v928 = vpop.permute.xlu0 %927
      %929 = vrot.lane.b32.xlu0 %v607, 120
      %v930 = vpop.permute.xlu0 %929
      %931 = vrot.lane.b32.xlu0 %v610, 120
      %v932 = vpop.permute.xlu0 %931
      %941 = vrot.lane.b32.xlu0 %v583, 112
      %v942 = vpop.permute.xlu0 %941
      %943 = vrot.lane.b32.xlu0 %v586, 112
      %v944 = vpop.permute.xlu0 %943
      %945 = vrot.lane.b32.xlu0 %v591, 112
      %v946 = vpop.permute.xlu0 %945
      %947 = vrot.lane.b32.xlu0 %v594, 112
      %v948 = vpop.permute.xlu0 %947
      %949 = vrot.lane.b32.xlu0 %v599, 112
      %v950 = vpop.permute.xlu0 %949
      %951 = vrot.lane.b32.xlu0 %v602, 112
      %v952 = vpop.permute.xlu0 %951
      %953 = vrot.lane.b32.xlu0 %v607, 112
      %v954 = vpop.permute.xlu0 %953
      %955 = vrot.lane.b32.xlu0 %v610, 112
      %v956 = vpop.permute.xlu0 %955
      %965 = vrot.lane.b32.xlu0 %v583, 104
      %v966 = vpop.permute.xlu0 %965
      %967 = vrot.lane.b32.xlu0 %v586, 104
      %v968 = vpop.permute.xlu0 %967
      %969 = vrot.lane.b32.xlu0 %v591, 104
      %v970 = vpop.permute.xlu0 %969
      %971 = vrot.lane.b32.xlu0 %v594, 104
      %v972 = vpop.permute.xlu0 %971
      %973 = vrot.lane.b32.xlu0 %v599, 104
      %v974 = vpop.permute.xlu0 %973
      %975 = vrot.lane.b32.xlu0 %v602, 104
      %v976 = vpop.permute.xlu0 %975
      %977 = vrot.lane.b32.xlu0 %v607, 104
      %v978 = vpop.permute.xlu0 %977
      %979 = vrot.lane.b32.xlu0 %v610, 104
      %v980 = vpop.permute.xlu0 %979
      %v989 = vcombine.low %v583, %v942
      %v990 = vcombine.high %v583, %v942
      %v992 = vunpack.c.l.s4 1983009808
      %v993 = vunpack.c.0.s8 %v992
      %v994 = vlaneseq
      %v995 = vshrl.u32 %v994, 7
      %v996 = vsub.s32 %v993, %v995
      %v997 = vrot.slane %v989, %v996
      %v999 = vunpack.c.l.s4 1983009808
      %v1000 = vunpack.c.0.s8 %v999
      %v1001 = vlaneseq
      %v1002 = vshrl.u32 %v1001, 7
      %v1003 = vsub.s32 %v1000, %v1002
      %v1004 = vrot.slane %v990, %v1003
      %v1005 = vcombine.low %v918, %v966
      %v1006 = vcombine.high %v918, %v966
      %v1008 = vunpack.c.l.s4 1983009808
      %v1009 = vunpack.c.0.s8 %v1008
      %v1010 = vlaneseq
      %v1011 = vshrl.u32 %v1010, 7
      %v1012 = vsub.s32 %v1009, %v1011
      %v1013 = vrot.slane %v1005, %v1012
      %v1015 = vunpack.c.l.s4 1983009808
      %v1016 = vunpack.c.0.s8 %v1015
      %v1017 = vlaneseq
      %v1018 = vshrl.u32 %v1017, 7
      %v1019 = vsub.s32 %v1016, %v1018
      %v1020 = vrot.slane %v1006, %v1019
      %v1021 = vcombine.low %v997, %v1013
      %v1022 = vcombine.high %v997, %v1013
      %v1024 = vunpack.c.l.s4 1934713408
      %v1025 = vunpack.c.0.s8 %v1024
      %v1026 = vlaneseq
      %v1027 = vshrl.u32 %v1026, 7
      %v1028 = vsub.s32 %v1025, %v1027
      %v1029 = vrot.slane %v1021, %v1028
      %v1031 = vunpack.c.l.s4 1934713408
      %v1032 = vunpack.c.0.s8 %v1031
      %v1033 = vlaneseq
      %v1034 = vshrl.u32 %v1033, 7
      %v1035 = vsub.s32 %v1032, %v1034
      %v1036 = vrot.slane %v1022, %v1035
      %v1037 = vcombine.low %v1004, %v1020
      %v1038 = vcombine.high %v1004, %v1020
      %v1040 = vunpack.c.l.s4 1934713408
      %v1041 = vunpack.c.0.s8 %v1040
      %v1042 = vlaneseq
      %v1043 = vshrl.u32 %v1042, 7
      %v1044 = vsub.s32 %v1041, %v1043
      %v1045 = vrot.slane %v1037, %v1044
      %v1047 = vunpack.c.l.s4 1934713408
      %v1048 = vunpack.c.0.s8 %v1047
      %v1049 = vlaneseq
      %v1050 = vshrl.u32 %v1049, 7
      %v1051 = vsub.s32 %v1048, %v1050
      %v1052 = vrot.slane %v1038, %v1051
      %v1053 = vcombine.high %v1029, 0.0
      %v1054 = vcombine.high %v1036, 0.0
      %v1055 = vcombine.high %v1045, 0.0
      %v1056 = vcombine.high %v1052, 0.0
      %v1057 = vcombine.low %v586, %v944
      %v1058 = vcombine.high %v586, %v944
      %v1060 = vunpack.c.l.s4 1983009808
      %v1061 = vunpack.c.0.s8 %v1060
      %v1062 = vlaneseq
      %v1063 = vshrl.u32 %v1062, 7
      %v1064 = vsub.s32 %v1061, %v1063
      %v1065 = vrot.slane %v1057, %v1064
      %v1067 = vunpack.c.l.s4 1983009808
      %v1068 = vunpack.c.0.s8 %v1067
      %v1069 = vlaneseq
      %v1070 = vshrl.u32 %v1069, 7
      %v1071 = vsub.s32 %v1068, %v1070
      %v1072 = vrot.slane %v1058, %v1071
      %v1073 = vcombine.low %v920, %v968
      %v1074 = vcombine.high %v920, %v968
      %v1076 = vunpack.c.l.s4 1983009808
      %v1077 = vunpack.c.0.s8 %v1076
      %v1078 = vlaneseq
      %v1079 = vshrl.u32 %v1078, 7
      %v1080 = vsub.s32 %v1077, %v1079
      %v1081 = vrot.slane %v1073, %v1080
      %v1083 = vunpack.c.l.s4 1983009808
      %v1084 = vunpack.c.0.s8 %v1083
      %v1085 = vlaneseq
      %v1086 = vshrl.u32 %v1085, 7
      %v1087 = vsub.s32 %v1084, %v1086
      %v1088 = vrot.slane %v1074, %v1087
      %v1089 = vcombine.low %v1065, %v1081
      %v1090 = vcombine.high %v1065, %v1081
      %v1092 = vunpack.c.l.s4 1934713408
      %v1093 = vunpack.c.0.s8 %v1092
      %v1094 = vlaneseq
      %v1095 = vshrl.u32 %v1094, 7
      %v1096 = vsub.s32 %v1093, %v1095
      %v1097 = vrot.slane %v1089, %v1096
      %v1099 = vunpack.c.l.s4 1934713408
      %v1100 = vunpack.c.0.s8 %v1099
      %v1101 = vlaneseq
      %v1102 = vshrl.u32 %v1101, 7
      %v1103 = vsub.s32 %v1100, %v1102
      %v1104 = vrot.slane %v1090, %v1103
      %v1105 = vcombine.low %v1072, %v1088
      %v1106 = vcombine.high %v1072, %v1088
      %v1108 = vunpack.c.l.s4 1934713408
      %v1109 = vunpack.c.0.s8 %v1108
      %v1110 = vlaneseq
      %v1111 = vshrl.u32 %v1110, 7
      %v1112 = vsub.s32 %v1109, %v1111
      %v1113 = vrot.slane %v1105, %v1112
      %v1115 = vunpack.c.l.s4 1934713408
      %v1116 = vunpack.c.0.s8 %v1115
      %v1117 = vlaneseq
      %v1118 = vshrl.u32 %v1117, 7
      %v1119 = vsub.s32 %v1116, %v1118
      %v1120 = vrot.slane %v1106, %v1119
      %v1121 = vcombine.high %v1097, 0.0
      %v1122 = vcombine.high %v1104, 0.0
      %v1123 = vcombine.high %v1113, 0.0
      %v1124 = vcombine.high %v1120, 0.0
      %v1125 = vcombine.low %v591, %v946
      %v1126 = vcombine.high %v591, %v946
      %v1128 = vunpack.c.l.s4 1983009808
      %v1129 = vunpack.c.0.s8 %v1128
      %v1130 = vlaneseq
      %v1131 = vshrl.u32 %v1130, 7
      %v1132 = vsub.s32 %v1129, %v1131
      %v1133 = vrot.slane %v1125, %v1132
      %v1135 = vunpack.c.l.s4 1983009808
      %v1136 = vunpack.c.0.s8 %v1135
      %v1137 = vlaneseq
      %v1138 = vshrl.u32 %v1137, 7
      %v1139 = vsub.s32 %v1136, %v1138
      %v1140 = vrot.slane %v1126, %v1139
      %v1141 = vcombine.low %v922, %v970
      %v1142 = vcombine.high %v922, %v970
      %v1144 = vunpack.c.l.s4 1983009808
      %v1145 = vunpack.c.0.s8 %v1144
      %v1146 = vlaneseq
      %v1147 = vshrl.u32 %v1146, 7
      %v1148 = vsub.s32 %v1145, %v1147
      %v1149 = vrot.slane %v1141, %v1148
      %v1151 = vunpack.c.l.s4 1983009808
      %v1152 = vunpack.c.0.s8 %v1151
      %v1153 = vlaneseq
      %v1154 = vshrl.u32 %v1153, 7
      %v1155 = vsub.s32 %v1152, %v1154
      %v1156 = vrot.slane %v1142, %v1155
      %v1157 = vcombine.low %v1133, %v1149
      %v1158 = vcombine.high %v1133, %v1149
      %v1160 = vunpack.c.l.s4 1934713408
      %v1161 = vunpack.c.0.s8 %v1160
      %v1162 = vlaneseq
      %v1163 = vshrl.u32 %v1162, 7
      %v1164 = vsub.s32 %v1161, %v1163
      %v1165 = vrot.slane %v1157, %v1164
      %v1167 = vunpack.c.l.s4 1934713408
      %v1168 = vunpack.c.0.s8 %v1167
      %v1169 = vlaneseq
      %v1170 = vshrl.u32 %v1169, 7
      %v1171 = vsub.s32 %v1168, %v1170
      %v1172 = vrot.slane %v1158, %v1171
      %v1173 = vcombine.low %v1140, %v1156
      %v1174 = vcombine.high %v1140, %v1156
      %v1176 = vunpack.c.l.s4 1934713408
      %v1177 = vunpack.c.0.s8 %v1176
      %v1178 = vlaneseq
      %v1179 = vshrl.u32 %v1178, 7
      %v1180 = vsub.s32 %v1177, %v1179
      %v1181 = vrot.slane %v1173, %v1180
      %v1183 = vunpack.c.l.s4 1934713408
      %v1184 = vunpack.c.0.s8 %v1183
      %v1185 = vlaneseq
      %v1186 = vshrl.u32 %v1185, 7
      %v1187 = vsub.s32 %v1184, %v1186
      %v1188 = vrot.slane %v1174, %v1187
      %v1189 = vcombine.high %v1165, 0.0
      %v1190 = vcombine.high %v1172, 0.0
      %v1191 = vcombine.high %v1181, 0.0
      %v1192 = vcombine.high %v1188, 0.0
      %v1193 = vcombine.low %v594, %v948
      %v1194 = vcombine.high %v594, %v948
      %v1196 = vunpack.c.l.s4 1983009808
      %v1197 = vunpack.c.0.s8 %v1196
      %v1198 = vlaneseq
      %v1199 = vshrl.u32 %v1198, 7
      %v1200 = vsub.s32 %v1197, %v1199
      %v1201 = vrot.slane %v1193, %v1200
      %v1203 = vunpack.c.l.s4 1983009808
      %v1204 = vunpack.c.0.s8 %v1203
      %v1205 = vlaneseq
      %v1206 = vshrl.u32 %v1205, 7
      %v1207 = vsub.s32 %v1204, %v1206
      %v1208 = vrot.slane %v1194, %v1207
      %v1209 = vcombine.low %v924, %v972
      %v1210 = vcombine.high %v924, %v972
      %v1212 = vunpack.c.l.s4 1983009808
      %v1213 = vunpack.c.0.s8 %v1212
      %v1214 = vlaneseq
      %v1215 = vshrl.u32 %v1214, 7
      %v1216 = vsub.s32 %v1213, %v1215
      %v1217 = vrot.slane %v1209, %v1216
      %v1219 = vunpack.c.l.s4 1983009808
      %v1220 = vunpack.c.0.s8 %v1219
      %v1221 = vlaneseq
      %v1222 = vshrl.u32 %v1221, 7
      %v1223 = vsub.s32 %v1220, %v1222
      %v1224 = vrot.slane %v1210, %v1223
      %v1225 = vcombine.low %v1201, %v1217
      %v1226 = vcombine.high %v1201, %v1217
      %v1228 = vunpack.c.l.s4 1934713408
      %v1229 = vunpack.c.0.s8 %v1228
      %v1230 = vlaneseq
      %v1231 = vshrl.u32 %v1230, 7
      %v1232 = vsub.s32 %v1229, %v1231
      %v1233 = vrot.slane %v1225, %v1232
      %v1235 = vunpack.c.l.s4 1934713408
      %v1236 = vunpack.c.0.s8 %v1235
      %v1237 = vlaneseq
      %v1238 = vshrl.u32 %v1237, 7
      %v1239 = vsub.s32 %v1236, %v1238
      %v1240 = vrot.slane %v1226, %v1239
      %v1241 = vcombine.low %v1208, %v1224
      %v1242 = vcombine.high %v1208, %v1224
      %v1244 = vunpack.c.l.s4 1934713408
      %v1245 = vunpack.c.0.s8 %v1244
      %v1246 = vlaneseq
      %v1247 = vshrl.u32 %v1246, 7
      %v1248 = vsub.s32 %v1245, %v1247
      %v1249 = vrot.slane %v1241, %v1248
      %v1251 = vunpack.c.l.s4 1934713408
      %v1252 = vunpack.c.0.s8 %v1251
      %v1253 = vlaneseq
      %v1254 = vshrl.u32 %v1253, 7
      %v1255 = vsub.s32 %v1252, %v1254
      %v1256 = vrot.slane %v1242, %v1255
      %v1257 = vcombine.high %v1233, 0.0
      %v1258 = vcombine.high %v1240, 0.0
      %v1259 = vcombine.high %v1249, 0.0
      %v1260 = vcombine.high %v1256, 0.0
      %v1261 = vcombine.low %v599, %v950
      %v1262 = vcombine.high %v599, %v950
      %v1264 = vunpack.c.l.s4 1983009808
      %v1265 = vunpack.c.0.s8 %v1264
      %v1266 = vlaneseq
      %v1267 = vshrl.u32 %v1266, 7
      %v1268 = vsub.s32 %v1265, %v1267
      %v1269 = vrot.slane %v1261, %v1268
      %v1271 = vunpack.c.l.s4 1983009808
      %v1272 = vunpack.c.0.s8 %v1271
      %v1273 = vlaneseq
      %v1274 = vshrl.u32 %v1273, 7
      %v1275 = vsub.s32 %v1272, %v1274
      %v1276 = vrot.slane %v1262, %v1275
      %v1277 = vcombine.low %v926, %v974
      %v1278 = vcombine.high %v926, %v974
      %v1280 = vunpack.c.l.s4 1983009808
      %v1281 = vunpack.c.0.s8 %v1280
      %v1282 = vlaneseq
      %v1283 = vshrl.u32 %v1282, 7
      %v1284 = vsub.s32 %v1281, %v1283
      %v1285 = vrot.slane %v1277, %v1284
      %v1287 = vunpack.c.l.s4 1983009808
      %v1288 = vunpack.c.0.s8 %v1287
      %v1289 = vlaneseq
      %v1290 = vshrl.u32 %v1289, 7
      %v1291 = vsub.s32 %v1288, %v1290
      %v1292 = vrot.slane %v1278, %v1291
      %v1293 = vcombine.low %v1269, %v1285
      %v1294 = vcombine.high %v1269, %v1285
      %v1296 = vunpack.c.l.s4 1934713408
      %v1297 = vunpack.c.0.s8 %v1296
      %v1298 = vlaneseq
      %v1299 = vshrl.u32 %v1298, 7
      %v1300 = vsub.s32 %v1297, %v1299
      %v1301 = vrot.slane %v1293, %v1300
      %v1303 = vunpack.c.l.s4 1934713408
      %v1304 = vunpack.c.0.s8 %v1303
      %v1305 = vlaneseq
      %v1306 = vshrl.u32 %v1305, 7
      %v1307 = vsub.s32 %v1304, %v1306
      %v1308 = vrot.slane %v1294, %v1307
      %v1309 = vcombine.low %v1276, %v1292
      %v1310 = vcombine.high %v1276, %v1292
      %v1312 = vunpack.c.l.s4 1934713408
      %v1313 = vunpack.c.0.s8 %v1312
      %v1314 = vlaneseq
      %v1315 = vshrl.u32 %v1314, 7
      %v1316 = vsub.s32 %v1313, %v1315
      %v1317 = vrot.slane %v1309, %v1316
      %v1319 = vunpack.c.l.s4 1934713408
      %v1320 = vunpack.c.0.s8 %v1319
      %v1321 = vlaneseq
      %v1322 = vshrl.u32 %v1321, 7
      %v1323 = vsub.s32 %v1320, %v1322
      %v1324 = vrot.slane %v1310, %v1323
      %v1325 = vcombine.high %v1301, 0.0
      %v1326 = vcombine.high %v1308, 0.0
      %v1327 = vcombine.high %v1317, 0.0
      %v1328 = vcombine.high %v1324, 0.0
      %v1329 = vcombine.low %v602, %v952
      %v1330 = vcombine.high %v602, %v952
      %v1332 = vunpack.c.l.s4 1983009808
      %v1333 = vunpack.c.0.s8 %v1332
      %v1334 = vlaneseq
      %v1335 = vshrl.u32 %v1334, 7
      %v1336 = vsub.s32 %v1333, %v1335
      %v1337 = vrot.slane %v1329, %v1336
      %v1339 = vunpack.c.l.s4 1983009808
      %v1340 = vunpack.c.0.s8 %v1339
      %v1341 = vlaneseq
      %v1342 = vshrl.u32 %v1341, 7
      %v1343 = vsub.s32 %v1340, %v1342
      %v1344 = vrot.slane %v1330, %v1343
      %v1345 = vcombine.low %v928, %v976
      %v1346 = vcombine.high %v928, %v976
      %v1348 = vunpack.c.l.s4 1983009808
      %v1349 = vunpack.c.0.s8 %v1348
      %v1350 = vlaneseq
      %v1351 = vshrl.u32 %v1350, 7
      %v1352 = vsub.s32 %v1349, %v1351
      %v1353 = vrot.slane %v1345, %v1352
      %v1355 = vunpack.c.l.s4 1983009808
      %v1356 = vunpack.c.0.s8 %v1355
      %v1357 = vlaneseq
      %v1358 = vshrl.u32 %v1357, 7
      %v1359 = vsub.s32 %v1356, %v1358
      %v1360 = vrot.slane %v1346, %v1359
      %v1361 = vcombine.low %v1337, %v1353
      %v1362 = vcombine.high %v1337, %v1353
      %v1364 = vunpack.c.l.s4 1934713408
      %v1365 = vunpack.c.0.s8 %v1364
      %v1366 = vlaneseq
      %v1367 = vshrl.u32 %v1366, 7
      %v1368 = vsub.s32 %v1365, %v1367
      %v1369 = vrot.slane %v1361, %v1368
      %v1371 = vunpack.c.l.s4 1934713408
      %v1372 = vunpack.c.0.s8 %v1371
      %v1373 = vlaneseq
      %v1374 = vshrl.u32 %v1373, 7
      %v1375 = vsub.s32 %v1372, %v1374
      %v1376 = vrot.slane %v1362, %v1375
      %v1377 = vcombine.low %v1344, %v1360
      %v1378 = vcombine.high %v1344, %v1360
      %v1380 = vunpack.c.l.s4 1934713408
      %v1381 = vunpack.c.0.s8 %v1380
      %v1382 = vlaneseq
      %v1383 = vshrl.u32 %v1382, 7
      %v1384 = vsub.s32 %v1381, %v1383
      %v1385 = vrot.slane %v1377, %v1384
      %v1387 = vunpack.c.l.s4 1934713408
      %v1388 = vunpack.c.0.s8 %v1387
      %v1389 = vlaneseq
      %v1390 = vshrl.u32 %v1389, 7
      %v1391 = vsub.s32 %v1388, %v1390
      %v1392 = vrot.slane %v1378, %v1391
      %v1393 = vcombine.high %v1369, 0.0
      %v1394 = vcombine.high %v1376, 0.0
      %v1395 = vcombine.high %v1385, 0.0
      %v1396 = vcombine.high %v1392, 0.0
      %v1397 = vcombine.low %v607, %v954
      %v1398 = vcombine.high %v607, %v954
      %v1400 = vunpack.c.l.s4 1983009808
      %v1401 = vunpack.c.0.s8 %v1400
      %v1402 = vlaneseq
      %v1403 = vshrl.u32 %v1402, 7
      %v1404 = vsub.s32 %v1401, %v1403
      %v1405 = vrot.slane %v1397, %v1404
      %v1407 = vunpack.c.l.s4 1983009808
      %v1408 = vunpack.c.0.s8 %v1407
      %v1409 = vlaneseq
      %v1410 = vshrl.u32 %v1409, 7
      %v1411 = vsub.s32 %v1408, %v1410
      %v1412 = vrot.slane %v1398, %v1411
      %v1413 = vcombine.low %v930, %v978
      %v1414 = vcombine.high %v930, %v978
      %v1416 = vunpack.c.l.s4 1983009808
      %v1417 = vunpack.c.0.s8 %v1416
      %v1418 = vlaneseq
      %v1419 = vshrl.u32 %v1418, 7
      %v1420 = vsub.s32 %v1417, %v1419
      %v1421 = vrot.slane %v1413, %v1420
      %v1423 = vunpack.c.l.s4 1983009808
      %v1424 = vunpack.c.0.s8 %v1423
      %v1425 = vlaneseq
      %v1426 = vshrl.u32 %v1425, 7
      %v1427 = vsub.s32 %v1424, %v1426
      %v1428 = vrot.slane %v1414, %v1427
      %v1429 = vcombine.low %v1405, %v1421
      %v1430 = vcombine.high %v1405, %v1421
      %v1432 = vunpack.c.l.s4 1934713408
      %v1433 = vunpack.c.0.s8 %v1432
      %v1434 = vlaneseq
      %v1435 = vshrl.u32 %v1434, 7
      %v1436 = vsub.s32 %v1433, %v1435
      %v1437 = vrot.slane %v1429, %v1436
      %v1439 = vunpack.c.l.s4 1934713408
      %v1440 = vunpack.c.0.s8 %v1439
      %v1441 = vlaneseq
      %v1442 = vshrl.u32 %v1441, 7
      %v1443 = vsub.s32 %v1440, %v1442
      %v1444 = vrot.slane %v1430, %v1443
      %v1445 = vcombine.low %v1412, %v1428
      %v1446 = vcombine.high %v1412, %v1428
      %v1448 = vunpack.c.l.s4 1934713408
      %v1449 = vunpack.c.0.s8 %v1448
      %v1450 = vlaneseq
      %v1451 = vshrl.u32 %v1450, 7
      %v1452 = vsub.s32 %v1449, %v1451
      %v1453 = vrot.slane %v1445, %v1452
      %v1455 = vunpack.c.l.s4 1934713408
      %v1456 = vunpack.c.0.s8 %v1455
      %v1457 = vlaneseq
      %v1458 = vshrl.u32 %v1457, 7
      %v1459 = vsub.s32 %v1456, %v1458
      %v1460 = vrot.slane %v1446, %v1459
      %v1461 = vcombine.high %v1437, 0.0
      %v1462 = vcombine.high %v1444, 0.0
      %v1463 = vcombine.high %v1453, 0.0
      %v1464 = vcombine.high %v1460, 0.0
      %v1465 = vcombine.low %v610, %v956
      %v1466 = vcombine.high %v610, %v956
      %v1468 = vunpack.c.l.s4 1983009808
      %v1469 = vunpack.c.0.s8 %v1468
      %v1470 = vlaneseq
      %v1471 = vshrl.u32 %v1470, 7
      %v1472 = vsub.s32 %v1469, %v1471
      %v1473 = vrot.slane %v1465, %v1472
      %v1475 = vunpack.c.l.s4 1983009808
      %v1476 = vunpack.c.0.s8 %v1475
      %v1477 = vlaneseq
      %v1478 = vshrl.u32 %v1477, 7
      %v1479 = vsub.s32 %v1476, %v1478
      %v1480 = vrot.slane %v1466, %v1479
      %v1481 = vcombine.low %v932, %v980
      %v1482 = vcombine.high %v932, %v980
      %v1484 = vunpack.c.l.s4 1983009808
      %v1485 = vunpack.c.0.s8 %v1484
      %v1486 = vlaneseq
      %v1487 = vshrl.u32 %v1486, 7
      %v1488 = vsub.s32 %v1485, %v1487
      %v1489 = vrot.slane %v1481, %v1488
      %v1491 = vunpack.c.l.s4 1983009808
      %v1492 = vunpack.c.0.s8 %v1491
      %v1493 = vlaneseq
      %v1494 = vshrl.u32 %v1493, 7
      %v1495 = vsub.s32 %v1492, %v1494
      %v1496 = vrot.slane %v1482, %v1495
      %v1497 = vcombine.low %v1473, %v1489
      %v1498 = vcombine.high %v1473, %v1489
      %v1500 = vunpack.c.l.s4 1934713408
      %v1501 = vunpack.c.0.s8 %v1500
      %v1502 = vlaneseq
      %v1503 = vshrl.u32 %v1502, 7
      %v1504 = vsub.s32 %v1501, %v1503
      %v1505 = vrot.slane %v1497, %v1504
      %v1507 = vunpack.c.l.s4 1934713408
      %v1508 = vunpack.c.0.s8 %v1507
      %v1509 = vlaneseq
      %v1510 = vshrl.u32 %v1509, 7
      %v1511 = vsub.s32 %v1508, %v1510
      %v1512 = vrot.slane %v1498, %v1511
      %v1513 = vcombine.low %v1480, %v1496
      %v1514 = vcombine.high %v1480, %v1496
      %v1516 = vunpack.c.l.s4 1934713408
      %v1517 = vunpack.c.0.s8 %v1516
      %v1518 = vlaneseq
      %v1519 = vshrl.u32 %v1518, 7
      %v1520 = vsub.s32 %v1517, %v1519
      %v1521 = vrot.slane %v1513, %v1520
      %v1523 = vunpack.c.l.s4 1934713408
      %v1524 = vunpack.c.0.s8 %v1523
      %v1525 = vlaneseq
      %v1526 = vshrl.u32 %v1525, 7
      %v1527 = vsub.s32 %v1524, %v1526
      %v1528 = vrot.slane %v1514, %v1527
      %v1529 = vcombine.high %v1505, 0.0
      %v1530 = vcombine.high %v1512, 0.0
      %v1531 = vcombine.high %v1521, 0.0
      %v1532 = vcombine.high %v1528, 0.0
      %v1533 = vcombine.low %v1029, %v1036
      %v1535 = vunpack.c.l.s4 1983009808
      %v1536 = vunpack.c.0.s8 %v1535
      %v1537 = vlaneseq
      %v1538 = vshrl.u32 %v1537, 7
      %v1539 = vsub.s32 %v1536, %v1538
      %v1540 = vrot.slane %v1533, %v1539
      %v1541 = vcombine.low %v1053, %v1054
      %v1543 = vunpack.c.l.s4 1983009808
      %v1544 = vunpack.c.0.s8 %v1543
      %v1545 = vlaneseq
      %v1546 = vshrl.u32 %v1545, 7
      %v1547 = vsub.s32 %v1544, %v1546
      %v1548 = vrot.slane %v1541, %v1547
      %v1549 = vcombine.low %v1045, %v1052
      %v1551 = vunpack.c.l.s4 1983009808
      %v1552 = vunpack.c.0.s8 %v1551
      %v1553 = vlaneseq
      %v1554 = vshrl.u32 %v1553, 7
      %v1555 = vsub.s32 %v1552, %v1554
      %v1556 = vrot.slane %v1549, %v1555
      %v1557 = vcombine.low %v1055, %v1056
      %v1559 = vunpack.c.l.s4 1983009808
      %v1560 = vunpack.c.0.s8 %v1559
      %v1561 = vlaneseq
      %v1562 = vshrl.u32 %v1561, 7
      %v1563 = vsub.s32 %v1560, %v1562
      %v1564 = vrot.slane %v1557, %v1563
      %v1565 = vcombine.low %v1540, %v1548
      %v1566 = vcombine.high %v1540, %v1548
      %v1568 = vunpack.c.l.s4 1934713408
      %v1569 = vunpack.c.0.s8 %v1568
      %v1570 = vlaneseq
      %v1571 = vshrl.u32 %v1570, 7
      %v1572 = vsub.s32 %v1569, %v1571
      %v1573 = vrot.slane %v1565, %v1572
      %v1575 = vunpack.c.l.s4 1934713408
      %v1576 = vunpack.c.0.s8 %v1575
      %v1577 = vlaneseq
      %v1578 = vshrl.u32 %v1577, 7
      %v1579 = vsub.s32 %v1576, %v1578
      %v1580 = vrot.slane %v1566, %v1579
      %v1581 = vcombine.low %v1556, %v1564
      %v1582 = vcombine.high %v1556, %v1564
      %v1584 = vunpack.c.l.s4 1934713408
      %v1585 = vunpack.c.0.s8 %v1584
      %v1586 = vlaneseq
      %v1587 = vshrl.u32 %v1586, 7
      %v1588 = vsub.s32 %v1585, %v1587
      %v1589 = vrot.slane %v1581, %v1588
      %v1591 = vunpack.c.l.s4 1934713408
      %v1592 = vunpack.c.0.s8 %v1591
      %v1593 = vlaneseq
      %v1594 = vshrl.u32 %v1593, 7
      %v1595 = vsub.s32 %v1592, %v1594
      %v1596 = vrot.slane %v1582, %v1595
      %v1597 = vcombine.low %v1573, %v1589
      %v1598 = vcombine.high %v1573, %v1589
      %v1599 = vcombine.low %v1580, %v1596
      %v1600 = vcombine.high %v1580, %v1596
      %v1601 = vcombine.low %v1097, %v1104
      %v1603 = vunpack.c.l.s4 1983009808
      %v1604 = vunpack.c.0.s8 %v1603
      %v1605 = vlaneseq
      %v1606 = vshrl.u32 %v1605, 7
      %v1607 = vsub.s32 %v1604, %v1606
      %v1608 = vrot.slane %v1601, %v1607
      %v1609 = vcombine.low %v1121, %v1122
      %v1611 = vunpack.c.l.s4 1983009808
      %v1612 = vunpack.c.0.s8 %v1611
      %v1613 = vlaneseq
      %v1614 = vshrl.u32 %v1613, 7
      %v1615 = vsub.s32 %v1612, %v1614
      %v1616 = vrot.slane %v1609, %v1615
      %v1617 = vcombine.low %v1113, %v1120
      %v1619 = vunpack.c.l.s4 1983009808
      %v1620 = vunpack.c.0.s8 %v1619
      %v1621 = vlaneseq
      %v1622 = vshrl.u32 %v1621, 7
      %v1623 = vsub.s32 %v1620, %v1622
      %v1624 = vrot.slane %v1617, %v1623
      %v1625 = vcombine.low %v1123, %v1124
      %v1627 = vunpack.c.l.s4 1983009808
      %v1628 = vunpack.c.0.s8 %v1627
      %v1629 = vlaneseq
      %v1630 = vshrl.u32 %v1629, 7
      %v1631 = vsub.s32 %v1628, %v1630
      %v1632 = vrot.slane %v1625, %v1631
      %v1633 = vcombine.low %v1608, %v1616
      %v1634 = vcombine.high %v1608, %v1616
      %v1636 = vunpack.c.l.s4 1934713408
      %v1637 = vunpack.c.0.s8 %v1636
      %v1638 = vlaneseq
      %v1639 = vshrl.u32 %v1638, 7
      %v1640 = vsub.s32 %v1637, %v1639
      %v1641 = vrot.slane %v1633, %v1640
      %v1643 = vunpack.c.l.s4 1934713408
      %v1644 = vunpack.c.0.s8 %v1643
      %v1645 = vlaneseq
      %v1646 = vshrl.u32 %v1645, 7
      %v1647 = vsub.s32 %v1644, %v1646
      %v1648 = vrot.slane %v1634, %v1647
      %v1649 = vcombine.low %v1624, %v1632
      %v1650 = vcombine.high %v1624, %v1632
      %v1652 = vunpack.c.l.s4 1934713408
      %v1653 = vunpack.c.0.s8 %v1652
      %v1654 = vlaneseq
      %v1655 = vshrl.u32 %v1654, 7
      %v1656 = vsub.s32 %v1653, %v1655
      %v1657 = vrot.slane %v1649, %v1656
      %v1659 = vunpack.c.l.s4 1934713408
      %v1660 = vunpack.c.0.s8 %v1659
      %v1661 = vlaneseq
      %v1662 = vshrl.u32 %v1661, 7
      %v1663 = vsub.s32 %v1660, %v1662
      %v1664 = vrot.slane %v1650, %v1663
      %v1665 = vcombine.low %v1641, %v1657
      %v1666 = vcombine.high %v1641, %v1657
      %v1667 = vcombine.low %v1648, %v1664
      %v1668 = vcombine.high %v1648, %v1664
      %v1669 = vcombine.low %v1165, %v1172
      %v1671 = vunpack.c.l.s4 1983009808
      %v1672 = vunpack.c.0.s8 %v1671
      %v1673 = vlaneseq
      %v1674 = vshrl.u32 %v1673, 7
      %v1675 = vsub.s32 %v1672, %v1674
      %v1676 = vrot.slane %v1669, %v1675
      %v1677 = vcombine.low %v1189, %v1190
      %v1679 = vunpack.c.l.s4 1983009808
      %v1680 = vunpack.c.0.s8 %v1679
      %v1681 = vlaneseq
      %v1682 = vshrl.u32 %v1681, 7
      %v1683 = vsub.s32 %v1680, %v1682
      %v1684 = vrot.slane %v1677, %v1683
      %v1685 = vcombine.low %v1181, %v1188
      %v1687 = vunpack.c.l.s4 1983009808
      %v1688 = vunpack.c.0.s8 %v1687
      %v1689 = vlaneseq
      %v1690 = vshrl.u32 %v1689, 7
      %v1691 = vsub.s32 %v1688, %v1690
      %v1692 = vrot.slane %v1685, %v1691
      %v1693 = vcombine.low %v1191, %v1192
      %v1695 = vunpack.c.l.s4 1983009808
      %v1696 = vunpack.c.0.s8 %v1695
      %v1697 = vlaneseq
      %v1698 = vshrl.u32 %v1697, 7
      %v1699 = vsub.s32 %v1696, %v1698
      %v1700 = vrot.slane %v1693, %v1699
      %v1701 = vcombine.low %v1676, %v1684
      %v1702 = vcombine.high %v1676, %v1684
      %v1704 = vunpack.c.l.s4 1934713408
      %v1705 = vunpack.c.0.s8 %v1704
      %v1706 = vlaneseq
      %v1707 = vshrl.u32 %v1706, 7
      %v1708 = vsub.s32 %v1705, %v1707
      %v1709 = vrot.slane %v1701, %v1708
      %v1711 = vunpack.c.l.s4 1934713408
      %v1712 = vunpack.c.0.s8 %v1711
      %v1713 = vlaneseq
      %v1714 = vshrl.u32 %v1713, 7
      %v1715 = vsub.s32 %v1712, %v1714
      %v1716 = vrot.slane %v1702, %v1715
      %v1717 = vcombine.low %v1692, %v1700
      %v1718 = vcombine.high %v1692, %v1700
      %v1720 = vunpack.c.l.s4 1934713408
      %v1721 = vunpack.c.0.s8 %v1720
      %v1722 = vlaneseq
      %v1723 = vshrl.u32 %v1722, 7
      %v1724 = vsub.s32 %v1721, %v1723
      %v1725 = vrot.slane %v1717, %v1724
      %v1727 = vunpack.c.l.s4 1934713408
      %v1728 = vunpack.c.0.s8 %v1727
      %v1729 = vlaneseq
      %v1730 = vshrl.u32 %v1729, 7
      %v1731 = vsub.s32 %v1728, %v1730
      %v1732 = vrot.slane %v1718, %v1731
      %v1733 = vcombine.low %v1709, %v1725
      %v1734 = vcombine.high %v1709, %v1725
      %v1735 = vcombine.low %v1716, %v1732
      %v1736 = vcombine.high %v1716, %v1732
      %v1737 = vcombine.low %v1233, %v1240
      %v1739 = vunpack.c.l.s4 1983009808
      %v1740 = vunpack.c.0.s8 %v1739
      %v1741 = vlaneseq
      %v1742 = vshrl.u32 %v1741, 7
      %v1743 = vsub.s32 %v1740, %v1742
      %v1744 = vrot.slane %v1737, %v1743
      %v1745 = vcombine.low %v1257, %v1258
      %v1747 = vunpack.c.l.s4 1983009808
      %v1748 = vunpack.c.0.s8 %v1747
      %v1749 = vlaneseq
      %v1750 = vshrl.u32 %v1749, 7
      %v1751 = vsub.s32 %v1748, %v1750
      %v1752 = vrot.slane %v1745, %v1751
      %v1753 = vcombine.low %v1249, %v1256
      %v1755 = vunpack.c.l.s4 1983009808
      %v1756 = vunpack.c.0.s8 %v1755
      %v1757 = vlaneseq
      %v1758 = vshrl.u32 %v1757, 7
      %v1759 = vsub.s32 %v1756, %v1758
      %v1760 = vrot.slane %v1753, %v1759
      %v1761 = vcombine.low %v1259, %v1260
      %v1763 = vunpack.c.l.s4 1983009808
      %v1764 = vunpack.c.0.s8 %v1763
      %v1765 = vlaneseq
      %v1766 = vshrl.u32 %v1765, 7
      %v1767 = vsub.s32 %v1764, %v1766
      %v1768 = vrot.slane %v1761, %v1767
      %v1769 = vcombine.low %v1744, %v1752
      %v1770 = vcombine.high %v1744, %v1752
      %v1772 = vunpack.c.l.s4 1934713408
      %v1773 = vunpack.c.0.s8 %v1772
      %v1774 = vlaneseq
      %v1775 = vshrl.u32 %v1774, 7
      %v1776 = vsub.s32 %v1773, %v1775
      %v1777 = vrot.slane %v1769, %v1776
      %v1779 = vunpack.c.l.s4 1934713408
      %v1780 = vunpack.c.0.s8 %v1779
      %v1781 = vlaneseq
      %v1782 = vshrl.u32 %v1781, 7
      %v1783 = vsub.s32 %v1780, %v1782
      %v1784 = vrot.slane %v1770, %v1783
      %v1785 = vcombine.low %v1760, %v1768
      %v1786 = vcombine.high %v1760, %v1768
      %v1788 = vunpack.c.l.s4 1934713408
      %v1789 = vunpack.c.0.s8 %v1788
      %v1790 = vlaneseq
      %v1791 = vshrl.u32 %v1790, 7
      %v1792 = vsub.s32 %v1789, %v1791
      %v1793 = vrot.slane %v1785, %v1792
      %v1795 = vunpack.c.l.s4 1934713408
      %v1796 = vunpack.c.0.s8 %v1795
      %v1797 = vlaneseq
      %v1798 = vshrl.u32 %v1797, 7
      %v1799 = vsub.s32 %v1796, %v1798
      %v1800 = vrot.slane %v1786, %v1799
      %v1801 = vcombine.low %v1777, %v1793
      %v1802 = vcombine.high %v1777, %v1793
      %v1803 = vcombine.low %v1784, %v1800
      %v1804 = vcombine.high %v1784, %v1800
      %v1805 = vcombine.low %v1301, %v1308
      %v1807 = vunpack.c.l.s4 1983009808
      %v1808 = vunpack.c.0.s8 %v1807
      %v1809 = vlaneseq
      %v1810 = vshrl.u32 %v1809, 7
      %v1811 = vsub.s32 %v1808, %v1810
      %v1812 = vrot.slane %v1805, %v1811
      %v1813 = vcombine.low %v1325, %v1326
      %v1815 = vunpack.c.l.s4 1983009808
      %v1816 = vunpack.c.0.s8 %v1815
      %v1817 = vlaneseq
      %v1818 = vshrl.u32 %v1817, 7
      %v1819 = vsub.s32 %v1816, %v1818
      %v1820 = vrot.slane %v1813, %v1819
      %v1821 = vcombine.low %v1317, %v1324
      %v1823 = vunpack.c.l.s4 1983009808
      %v1824 = vunpack.c.0.s8 %v1823
      %v1825 = vlaneseq
      %v1826 = vshrl.u32 %v1825, 7
      %v1827 = vsub.s32 %v1824, %v1826
      %v1828 = vrot.slane %v1821, %v1827
      %v1829 = vcombine.low %v1327, %v1328
      %v1831 = vunpack.c.l.s4 1983009808
      %v1832 = vunpack.c.0.s8 %v1831
      %v1833 = vlaneseq
      %v1834 = vshrl.u32 %v1833, 7
      %v1835 = vsub.s32 %v1832, %v1834
      %v1836 = vrot.slane %v1829, %v1835
      %v1837 = vcombine.low %v1812, %v1820
      %v1838 = vcombine.high %v1812, %v1820
      %v1840 = vunpack.c.l.s4 1934713408
      %v1841 = vunpack.c.0.s8 %v1840
      %v1842 = vlaneseq
      %v1843 = vshrl.u32 %v1842, 7
      %v1844 = vsub.s32 %v1841, %v1843
      %v1845 = vrot.slane %v1837, %v1844
      %v1847 = vunpack.c.l.s4 1934713408
      %v1848 = vunpack.c.0.s8 %v1847
      %v1849 = vlaneseq
      %v1850 = vshrl.u32 %v1849, 7
      %v1851 = vsub.s32 %v1848, %v1850
      %v1852 = vrot.slane %v1838, %v1851
      %v1853 = vcombine.low %v1828, %v1836
      %v1854 = vcombine.high %v1828, %v1836
      %v1856 = vunpack.c.l.s4 1934713408
      %v1857 = vunpack.c.0.s8 %v1856
      %v1858 = vlaneseq
      %v1859 = vshrl.u32 %v1858, 7
      %v1860 = vsub.s32 %v1857, %v1859
      %v1861 = vrot.slane %v1853, %v1860
      %v1863 = vunpack.c.l.s4 1934713408
      %v1864 = vunpack.c.0.s8 %v1863
      %v1865 = vlaneseq
      %v1866 = vshrl.u32 %v1865, 7
      %v1867 = vsub.s32 %v1864, %v1866
      %v1868 = vrot.slane %v1854, %v1867
      %v1869 = vcombine.low %v1845, %v1861
      %v1870 = vcombine.high %v1845, %v1861
      %v1871 = vcombine.low %v1852, %v1868
      %v1872 = vcombine.high %v1852, %v1868
      %v1873 = vcombine.low %v1369, %v1376
      %v1875 = vunpack.c.l.s4 1983009808
      %v1876 = vunpack.c.0.s8 %v1875
      %v1877 = vlaneseq
      %v1878 = vshrl.u32 %v1877, 7
      %v1879 = vsub.s32 %v1876, %v1878
      %v1880 = vrot.slane %v1873, %v1879
      %v1881 = vcombine.low %v1393, %v1394
      %v1883 = vunpack.c.l.s4 1983009808
      %v1884 = vunpack.c.0.s8 %v1883
      %v1885 = vlaneseq
      %v1886 = vshrl.u32 %v1885, 7
      %v1887 = vsub.s32 %v1884, %v1886
      %v1888 = vrot.slane %v1881, %v1887
      %v1889 = vcombine.low %v1385, %v1392
      %v1891 = vunpack.c.l.s4 1983009808
      %v1892 = vunpack.c.0.s8 %v1891
      %v1893 = vlaneseq
      %v1894 = vshrl.u32 %v1893, 7
      %v1895 = vsub.s32 %v1892, %v1894
      %v1896 = vrot.slane %v1889, %v1895
      %v1897 = vcombine.low %v1395, %v1396
      %v1899 = vunpack.c.l.s4 1983009808
      %v1900 = vunpack.c.0.s8 %v1899
      %v1901 = vlaneseq
      %v1902 = vshrl.u32 %v1901, 7
      %v1903 = vsub.s32 %v1900, %v1902
      %v1904 = vrot.slane %v1897, %v1903
      %v1905 = vcombine.low %v1880, %v1888
      %v1906 = vcombine.high %v1880, %v1888
      %v1908 = vunpack.c.l.s4 1934713408
      %v1909 = vunpack.c.0.s8 %v1908
      %v1910 = vlaneseq
      %v1911 = vshrl.u32 %v1910, 7
      %v1912 = vsub.s32 %v1909, %v1911
      %v1913 = vrot.slane %v1905, %v1912
      %v1915 = vunpack.c.l.s4 1934713408
      %v1916 = vunpack.c.0.s8 %v1915
      %v1917 = vlaneseq
      %v1918 = vshrl.u32 %v1917, 7
      %v1919 = vsub.s32 %v1916, %v1918
      %v1920 = vrot.slane %v1906, %v1919
      %v1921 = vcombine.low %v1896, %v1904
      %v1922 = vcombine.high %v1896, %v1904
      %v1924 = vunpack.c.l.s4 1934713408
      %v1925 = vunpack.c.0.s8 %v1924
      %v1926 = vlaneseq
      %v1927 = vshrl.u32 %v1926, 7
      %v1928 = vsub.s32 %v1925, %v1927
      %v1929 = vrot.slane %v1921, %v1928
      %v1931 = vunpack.c.l.s4 1934713408
      %v1932 = vunpack.c.0.s8 %v1931
      %v1933 = vlaneseq
      %v1934 = vshrl.u32 %v1933, 7
      %v1935 = vsub.s32 %v1932, %v1934
      %v1936 = vrot.slane %v1922, %v1935
      %v1937 = vcombine.low %v1913, %v1929
      %v1938 = vcombine.high %v1913, %v1929
      %v1939 = vcombine.low %v1920, %v1936
      %v1940 = vcombine.high %v1920, %v1936
      %v1941 = vcombine.low %v1437, %v1444
      %v1943 = vunpack.c.l.s4 1983009808
      %v1944 = vunpack.c.0.s8 %v1943
      %v1945 = vlaneseq
      %v1946 = vshrl.u32 %v1945, 7
      %v1947 = vsub.s32 %v1944, %v1946
      %v1948 = vrot.slane %v1941, %v1947
      %v1949 = vcombine.low %v1461, %v1462
      %v1951 = vunpack.c.l.s4 1983009808
      %v1952 = vunpack.c.0.s8 %v1951
      %v1953 = vlaneseq
      %v1954 = vshrl.u32 %v1953, 7
      %v1955 = vsub.s32 %v1952, %v1954
      %v1956 = vrot.slane %v1949, %v1955
      %v1957 = vcombine.low %v1453, %v1460
      %v1959 = vunpack.c.l.s4 1983009808
      %v1960 = vunpack.c.0.s8 %v1959
      %v1961 = vlaneseq
      %v1962 = vshrl.u32 %v1961, 7
      %v1963 = vsub.s32 %v1960, %v1962
      %v1964 = vrot.slane %v1957, %v1963
      %v1965 = vcombine.low %v1463, %v1464
      %v1967 = vunpack.c.l.s4 1983009808
      %v1968 = vunpack.c.0.s8 %v1967
      %v1969 = vlaneseq
      %v1970 = vshrl.u32 %v1969, 7
      %v1971 = vsub.s32 %v1968, %v1970
      %v1972 = vrot.slane %v1965, %v1971
      %v1973 = vcombine.low %v1948, %v1956
      %v1974 = vcombine.high %v1948, %v1956
      %v1976 = vunpack.c.l.s4 1934713408
      %v1977 = vunpack.c.0.s8 %v1976
      %v1978 = vlaneseq
      %v1979 = vshrl.u32 %v1978, 7
      %v1980 = vsub.s32 %v1977, %v1979
      %v1981 = vrot.slane %v1973, %v1980
      %v1983 = vunpack.c.l.s4 1934713408
      %v1984 = vunpack.c.0.s8 %v1983
      %v1985 = vlaneseq
      %v1986 = vshrl.u32 %v1985, 7
      %v1987 = vsub.s32 %v1984, %v1986
      %v1988 = vrot.slane %v1974, %v1987
      %v1989 = vcombine.low %v1964, %v1972
      %v1990 = vcombine.high %v1964, %v1972
      %v1992 = vunpack.c.l.s4 1934713408
      %v1993 = vunpack.c.0.s8 %v1992
      %v1994 = vlaneseq
      %v1995 = vshrl.u32 %v1994, 7
      %v1996 = vsub.s32 %v1993, %v1995
      %v1997 = vrot.slane %v1989, %v1996
      %v1999 = vunpack.c.l.s4 1934713408
      %v2000 = vunpack.c.0.s8 %v1999
      %v2001 = vlaneseq
      %v2002 = vshrl.u32 %v2001, 7
      %v2003 = vsub.s32 %v2000, %v2002
      %v2004 = vrot.slane %v1990, %v2003
      %v2005 = vcombine.low %v1981, %v1997
      %v2006 = vcombine.high %v1981, %v1997
      %v2007 = vcombine.low %v1988, %v2004
      %v2008 = vcombine.high %v1988, %v2004
      %v2009 = vcombine.low %v1505, %v1512
      %v2011 = vunpack.c.l.s4 1983009808
      %v2012 = vunpack.c.0.s8 %v2011
      %v2013 = vlaneseq
      %v2014 = vshrl.u32 %v2013, 7
      %v2015 = vsub.s32 %v2012, %v2014
      %v2016 = vrot.slane %v2009, %v2015
      %v2017 = vcombine.low %v1529, %v1530
      %v2019 = vunpack.c.l.s4 1983009808
      %v2020 = vunpack.c.0.s8 %v2019
      %v2021 = vlaneseq
      %v2022 = vshrl.u32 %v2021, 7
      %v2023 = vsub.s32 %v2020, %v2022
      %v2024 = vrot.slane %v2017, %v2023
      %v2025 = vcombine.low %v1521, %v1528
      %v2027 = vunpack.c.l.s4 1983009808
      %v2028 = vunpack.c.0.s8 %v2027
      %v2029 = vlaneseq
      %v2030 = vshrl.u32 %v2029, 7
      %v2031 = vsub.s32 %v2028, %v2030
      %v2032 = vrot.slane %v2025, %v2031
      %v2033 = vcombine.low %v1531, %v1532
      %v2035 = vunpack.c.l.s4 1983009808
      %v2036 = vunpack.c.0.s8 %v2035
      %v2037 = vlaneseq
      %v2038 = vshrl.u32 %v2037, 7
      %v2039 = vsub.s32 %v2036, %v2038
      %v2040 = vrot.slane %v2033, %v2039
      %v2041 = vcombine.low %v2016, %v2024
      %v2042 = vcombine.high %v2016, %v2024
      %v2044 = vunpack.c.l.s4 1934713408
      %v2045 = vunpack.c.0.s8 %v2044
      %v2046 = vlaneseq
      %v2047 = vshrl.u32 %v2046, 7
      %v2048 = vsub.s32 %v2045, %v2047
      %v2049 = vrot.slane %v2041, %v2048
      %v2051 = vunpack.c.l.s4 1934713408
      %v2052 = vunpack.c.0.s8 %v2051
      %v2053 = vlaneseq
      %v2054 = vshrl.u32 %v2053, 7
      %v2055 = vsub.s32 %v2052, %v2054
      %v2056 = vrot.slane %v2042, %v2055
      %v2057 = vcombine.low %v2032, %v2040
      %v2058 = vcombine.high %v2032, %v2040
      %v2060 = vunpack.c.l.s4 1934713408
      %v2061 = vunpack.c.0.s8 %v2060
      %v2062 = vlaneseq
      %v2063 = vshrl.u32 %v2062, 7
      %v2064 = vsub.s32 %v2061, %v2063
      %v2065 = vrot.slane %v2057, %v2064
      %v2067 = vunpack.c.l.s4 1934713408
      %v2068 = vunpack.c.0.s8 %v2067
      %v2069 = vlaneseq
      %v2070 = vshrl.u32 %v2069, 7
      %v2071 = vsub.s32 %v2068, %v2070
      %v2072 = vrot.slane %v2058, %v2071
      %v2073 = vcombine.low %v2049, %v2065
      %v2074 = vcombine.high %v2049, %v2065
      %v2075 = vcombine.low %v2056, %v2072
      %v2076 = vcombine.high %v2056, %v2072
      %v2077 = vpack.c.bf16 %v1665, %v1597
      %v2078 = vpack.c.bf16 %v1801, %v1733
      %v2079 = vpack.c.bf16 %v1937, %v1869
      %v2080 = vpack.c.bf16 %v2073, %v2005
      %v2081 = vpack.c.bf16 %v1666, %v1598
      %v2082 = vpack.c.bf16 %v1802, %v1734
      %v2083 = vpack.c.bf16 %v1938, %v1870
      %v2084 = vpack.c.bf16 %v2074, %v2006
      %v2085 = vpack.c.bf16 %v1667, %v1599
      %v2086 = vpack.c.bf16 %v1803, %v1735
      %v2087 = vpack.c.bf16 %v1939, %v1871
      %v2088 = vpack.c.bf16 %v2075, %v2007
      %v2089 = vpack.c.bf16 %v1668, %v1600
      %v2090 = vpack.c.bf16 %v1804, %v1736
      %v2091 = vpack.c.bf16 %v1940, %v1872
      %v2092 = vpack.c.bf16 %v2076, %v2008
      %2093 = vrot.lane.b32.xlu0 %v583, 96
      %v2094 = vpop.permute.xlu0 %2093
      %2095 = vrot.lane.b32.xlu0 %v586, 96
      %v2096 = vpop.permute.xlu0 %2095
      %2097 = vrot.lane.b32.xlu0 %v591, 96
      %v2098 = vpop.permute.xlu0 %2097
      %2099 = vrot.lane.b32.xlu0 %v594, 96
      %v2100 = vpop.permute.xlu0 %2099
      %2101 = vrot.lane.b32.xlu0 %v599, 96
      %v2102 = vpop.permute.xlu0 %2101
      %2103 = vrot.lane.b32.xlu0 %v602, 96
      %v2104 = vpop.permute.xlu0 %2103
      %2105 = vrot.lane.b32.xlu0 %v607, 96
      %v2106 = vpop.permute.xlu0 %2105
      %2107 = vrot.lane.b32.xlu0 %v610, 96
      %v2108 = vpop.permute.xlu0 %2107
      %2109 = vrot.lane.b32.xlu0 %v918, 96
      %v2110 = vpop.permute.xlu0 %2109
      %2111 = vrot.lane.b32.xlu0 %v920, 96
      %v2112 = vpop.permute.xlu0 %2111
      %2113 = vrot.lane.b32.xlu0 %v922, 96
      %v2114 = vpop.permute.xlu0 %2113
      %2115 = vrot.lane.b32.xlu0 %v924, 96
      %v2116 = vpop.permute.xlu0 %2115
      %2117 = vrot.lane.b32.xlu0 %v926, 96
      %v2118 = vpop.permute.xlu0 %2117
      %2119 = vrot.lane.b32.xlu0 %v928, 96
      %v2120 = vpop.permute.xlu0 %2119
      %2121 = vrot.lane.b32.xlu0 %v930, 96
      %v2122 = vpop.permute.xlu0 %2121
      %2123 = vrot.lane.b32.xlu0 %v932, 96
      %v2124 = vpop.permute.xlu0 %2123
      %2125 = vrot.lane.b32.xlu0 %v942, 96
      %v2126 = vpop.permute.xlu0 %2125
      %2127 = vrot.lane.b32.xlu0 %v944, 96
      %v2128 = vpop.permute.xlu0 %2127
      %2129 = vrot.lane.b32.xlu0 %v946, 96
      %v2130 = vpop.permute.xlu0 %2129
      %2131 = vrot.lane.b32.xlu0 %v948, 96
      %v2132 = vpop.permute.xlu0 %2131
      %2133 = vrot.lane.b32.xlu0 %v950, 96
      %v2134 = vpop.permute.xlu0 %2133
      %2135 = vrot.lane.b32.xlu0 %v952, 96
      %v2136 = vpop.permute.xlu0 %2135
      %2137 = vrot.lane.b32.xlu0 %v954, 96
      %v2138 = vpop.permute.xlu0 %2137
      %2139 = vrot.lane.b32.xlu0 %v956, 96
      %v2140 = vpop.permute.xlu0 %2139
      %2141 = vrot.lane.b32.xlu0 %v966, 96
      %v2142 = vpop.permute.xlu0 %2141
      %2143 = vrot.lane.b32.xlu0 %v968, 96
      %v2144 = vpop.permute.xlu0 %2143
      %2145 = vrot.lane.b32.xlu0 %v970, 96
      %v2146 = vpop.permute.xlu0 %2145
      %2147 = vrot.lane.b32.xlu0 %v972, 96
      %v2148 = vpop.permute.xlu0 %2147
      %2149 = vrot.lane.b32.xlu0 %v974, 96
      %v2150 = vpop.permute.xlu0 %2149
      %2151 = vrot.lane.b32.xlu0 %v976, 96
      %v2152 = vpop.permute.xlu0 %2151
      %2153 = vrot.lane.b32.xlu0 %v978, 96
      %v2154 = vpop.permute.xlu0 %2153
      %2155 = vrot.lane.b32.xlu0 %v980, 96
      %v2156 = vpop.permute.xlu0 %2155
      %v2189 = vcombine.low %v2094, %v2126
      %v2190 = vcombine.high %v2094, %v2126
      %v2192 = vunpack.c.l.s4 1983009808
      %v2193 = vunpack.c.0.s8 %v2192
      %v2194 = vlaneseq
      %v2195 = vshrl.u32 %v2194, 7
      %v2196 = vsub.s32 %v2193, %v2195
      %v2197 = vrot.slane %v2189, %v2196
      %v2199 = vunpack.c.l.s4 1983009808
      %v2200 = vunpack.c.0.s8 %v2199
      %v2201 = vlaneseq
      %v2202 = vshrl.u32 %v2201, 7
      %v2203 = vsub.s32 %v2200, %v2202
      %v2204 = vrot.slane %v2190, %v2203
      %v2205 = vcombine.low %v2110, %v2142
      %v2206 = vcombine.high %v2110, %v2142
      %v2208 = vunpack.c.l.s4 1983009808
      %v2209 = vunpack.c.0.s8 %v2208
      %v2210 = vlaneseq
      %v2211 = vshrl.u32 %v2210, 7
      %v2212 = vsub.s32 %v2209, %v2211
      %v2213 = vrot.slane %v2205, %v2212
      %v2215 = vunpack.c.l.s4 1983009808
      %v2216 = vunpack.c.0.s8 %v2215
      %v2217 = vlaneseq
      %v2218 = vshrl.u32 %v2217, 7
      %v2219 = vsub.s32 %v2216, %v2218
      %v2220 = vrot.slane %v2206, %v2219
      %v2221 = vcombine.low %v2197, %v2213
      %v2222 = vcombine.high %v2197, %v2213
      %v2224 = vunpack.c.l.s4 1934713408
      %v2225 = vunpack.c.0.s8 %v2224
      %v2226 = vlaneseq
      %v2227 = vshrl.u32 %v2226, 7
      %v2228 = vsub.s32 %v2225, %v2227
      %v2229 = vrot.slane %v2221, %v2228
      %v2231 = vunpack.c.l.s4 1934713408
      %v2232 = vunpack.c.0.s8 %v2231
      %v2233 = vlaneseq
      %v2234 = vshrl.u32 %v2233, 7
      %v2235 = vsub.s32 %v2232, %v2234
      %v2236 = vrot.slane %v2222, %v2235
      %v2237 = vcombine.low %v2204, %v2220
      %v2238 = vcombine.high %v2204, %v2220
      %v2240 = vunpack.c.l.s4 1934713408
      %v2241 = vunpack.c.0.s8 %v2240
      %v2242 = vlaneseq
      %v2243 = vshrl.u32 %v2242, 7
      %v2244 = vsub.s32 %v2241, %v2243
      %v2245 = vrot.slane %v2237, %v2244
      %v2247 = vunpack.c.l.s4 1934713408
      %v2248 = vunpack.c.0.s8 %v2247
      %v2249 = vlaneseq
      %v2250 = vshrl.u32 %v2249, 7
      %v2251 = vsub.s32 %v2248, %v2250
      %v2252 = vrot.slane %v2238, %v2251
      %v2253 = vcombine.high %v2229, 0.0
      %v2254 = vcombine.high %v2236, 0.0
      %v2255 = vcombine.high %v2245, 0.0
      %v2256 = vcombine.high %v2252, 0.0
      %v2257 = vcombine.low %v2096, %v2128
      %v2258 = vcombine.high %v2096, %v2128
      %v2260 = vunpack.c.l.s4 1983009808
      %v2261 = vunpack.c.0.s8 %v2260
      %v2262 = vlaneseq
      %v2263 = vshrl.u32 %v2262, 7
      %v2264 = vsub.s32 %v2261, %v2263
      %v2265 = vrot.slane %v2257, %v2264
      %v2267 = vunpack.c.l.s4 1983009808
      %v2268 = vunpack.c.0.s8 %v2267
      %v2269 = vlaneseq
      %v2270 = vshrl.u32 %v2269, 7
      %v2271 = vsub.s32 %v2268, %v2270
      %v2272 = vrot.slane %v2258, %v2271
      %v2273 = vcombine.low %v2112, %v2144
      %v2274 = vcombine.high %v2112, %v2144
      %v2276 = vunpack.c.l.s4 1983009808
      %v2277 = vunpack.c.0.s8 %v2276
      %v2278 = vlaneseq
      %v2279 = vshrl.u32 %v2278, 7
      %v2280 = vsub.s32 %v2277, %v2279
      %v2281 = vrot.slane %v2273, %v2280
      %v2283 = vunpack.c.l.s4 1983009808
      %v2284 = vunpack.c.0.s8 %v2283
      %v2285 = vlaneseq
      %v2286 = vshrl.u32 %v2285, 7
      %v2287 = vsub.s32 %v2284, %v2286
      %v2288 = vrot.slane %v2274, %v2287
      %v2289 = vcombine.low %v2265, %v2281
      %v2290 = vcombine.high %v2265, %v2281
      %v2292 = vunpack.c.l.s4 1934713408
      %v2293 = vunpack.c.0.s8 %v2292
      %v2294 = vlaneseq
      %v2295 = vshrl.u32 %v2294, 7
      %v2296 = vsub.s32 %v2293, %v2295
      %v2297 = vrot.slane %v2289, %v2296
      %v2299 = vunpack.c.l.s4 1934713408
      %v2300 = vunpack.c.0.s8 %v2299
      %v2301 = vlaneseq
      %v2302 = vshrl.u32 %v2301, 7
      %v2303 = vsub.s32 %v2300, %v2302
      %v2304 = vrot.slane %v2290, %v2303
      %v2305 = vcombine.low %v2272, %v2288
      %v2306 = vcombine.high %v2272, %v2288
      %v2308 = vunpack.c.l.s4 1934713408
      %v2309 = vunpack.c.0.s8 %v2308
      %v2310 = vlaneseq
      %v2311 = vshrl.u32 %v2310, 7
      %v2312 = vsub.s32 %v2309, %v2311
      %v2313 = vrot.slane %v2305, %v2312
      %v2315 = vunpack.c.l.s4 1934713408
      %v2316 = vunpack.c.0.s8 %v2315
      %v2317 = vlaneseq
      %v2318 = vshrl.u32 %v2317, 7
      %v2319 = vsub.s32 %v2316, %v2318
      %v2320 = vrot.slane %v2306, %v2319
      %v2321 = vcombine.high %v2297, 0.0
      %v2322 = vcombine.high %v2304, 0.0
      %v2323 = vcombine.high %v2313, 0.0
      %v2324 = vcombine.high %v2320, 0.0
      %v2325 = vcombine.low %v2098, %v2130
      %v2326 = vcombine.high %v2098, %v2130
      %v2328 = vunpack.c.l.s4 1983009808
      %v2329 = vunpack.c.0.s8 %v2328
      %v2330 = vlaneseq
      %v2331 = vshrl.u32 %v2330, 7
      %v2332 = vsub.s32 %v2329, %v2331
      %v2333 = vrot.slane %v2325, %v2332
      %v2335 = vunpack.c.l.s4 1983009808
      %v2336 = vunpack.c.0.s8 %v2335
      %v2337 = vlaneseq
      %v2338 = vshrl.u32 %v2337, 7
      %v2339 = vsub.s32 %v2336, %v2338
      %v2340 = vrot.slane %v2326, %v2339
      %v2341 = vcombine.low %v2114, %v2146
      %v2342 = vcombine.high %v2114, %v2146
      %v2344 = vunpack.c.l.s4 1983009808
      %v2345 = vunpack.c.0.s8 %v2344
      %v2346 = vlaneseq
      %v2347 = vshrl.u32 %v2346, 7
      %v2348 = vsub.s32 %v2345, %v2347
      %v2349 = vrot.slane %v2341, %v2348
      %v2351 = vunpack.c.l.s4 1983009808
      %v2352 = vunpack.c.0.s8 %v2351
      %v2353 = vlaneseq
      %v2354 = vshrl.u32 %v2353, 7
      %v2355 = vsub.s32 %v2352, %v2354
      %v2356 = vrot.slane %v2342, %v2355
      %v2357 = vcombine.low %v2333, %v2349
      %v2358 = vcombine.high %v2333, %v2349
      %v2360 = vunpack.c.l.s4 1934713408
      %v2361 = vunpack.c.0.s8 %v2360
      %v2362 = vlaneseq
      %v2363 = vshrl.u32 %v2362, 7
      %v2364 = vsub.s32 %v2361, %v2363
      %v2365 = vrot.slane %v2357, %v2364
      %v2367 = vunpack.c.l.s4 1934713408
      %v2368 = vunpack.c.0.s8 %v2367
      %v2369 = vlaneseq
      %v2370 = vshrl.u32 %v2369, 7
      %v2371 = vsub.s32 %v2368, %v2370
      %v2372 = vrot.slane %v2358, %v2371
      %v2373 = vcombine.low %v2340, %v2356
      %v2374 = vcombine.high %v2340, %v2356
      %v2376 = vunpack.c.l.s4 1934713408
      %v2377 = vunpack.c.0.s8 %v2376
      %v2378 = vlaneseq
      %v2379 = vshrl.u32 %v2378, 7
      %v2380 = vsub.s32 %v2377, %v2379
      %v2381 = vrot.slane %v2373, %v2380
      %v2383 = vunpack.c.l.s4 1934713408
      %v2384 = vunpack.c.0.s8 %v2383
      %v2385 = vlaneseq
      %v2386 = vshrl.u32 %v2385, 7
      %v2387 = vsub.s32 %v2384, %v2386
      %v2388 = vrot.slane %v2374, %v2387
      %v2389 = vcombine.high %v2365, 0.0
      %v2390 = vcombine.high %v2372, 0.0
      %v2391 = vcombine.high %v2381, 0.0
      %v2392 = vcombine.high %v2388, 0.0
      %v2393 = vcombine.low %v2100, %v2132
      %v2394 = vcombine.high %v2100, %v2132
      %v2396 = vunpack.c.l.s4 1983009808
      %v2397 = vunpack.c.0.s8 %v2396
      %v2398 = vlaneseq
      %v2399 = vshrl.u32 %v2398, 7
      %v2400 = vsub.s32 %v2397, %v2399
      %v2401 = vrot.slane %v2393, %v2400
      %v2403 = vunpack.c.l.s4 1983009808
      %v2404 = vunpack.c.0.s8 %v2403
      %v2405 = vlaneseq
      %v2406 = vshrl.u32 %v2405, 7
      %v2407 = vsub.s32 %v2404, %v2406
      %v2408 = vrot.slane %v2394, %v2407
      %v2409 = vcombine.low %v2116, %v2148
      %v2410 = vcombine.high %v2116, %v2148
      %v2412 = vunpack.c.l.s4 1983009808
      %v2413 = vunpack.c.0.s8 %v2412
      %v2414 = vlaneseq
      %v2415 = vshrl.u32 %v2414, 7
      %v2416 = vsub.s32 %v2413, %v2415
      %v2417 = vrot.slane %v2409, %v2416
      %v2419 = vunpack.c.l.s4 1983009808
      %v2420 = vunpack.c.0.s8 %v2419
      %v2421 = vlaneseq
      %v2422 = vshrl.u32 %v2421, 7
      %v2423 = vsub.s32 %v2420, %v2422
      %v2424 = vrot.slane %v2410, %v2423
      %v2425 = vcombine.low %v2401, %v2417
      %v2426 = vcombine.high %v2401, %v2417
      %v2428 = vunpack.c.l.s4 1934713408
      %v2429 = vunpack.c.0.s8 %v2428
      %v2430 = vlaneseq
      %v2431 = vshrl.u32 %v2430, 7
      %v2432 = vsub.s32 %v2429, %v2431
      %v2433 = vrot.slane %v2425, %v2432
      %v2435 = vunpack.c.l.s4 1934713408
      %v2436 = vunpack.c.0.s8 %v2435
      %v2437 = vlaneseq
      %v2438 = vshrl.u32 %v2437, 7
      %v2439 = vsub.s32 %v2436, %v2438
      %v2440 = vrot.slane %v2426, %v2439
      %v2441 = vcombine.low %v2408, %v2424
      %v2442 = vcombine.high %v2408, %v2424
      %v2444 = vunpack.c.l.s4 1934713408
      %v2445 = vunpack.c.0.s8 %v2444
      %v2446 = vlaneseq
      %v2447 = vshrl.u32 %v2446, 7
      %v2448 = vsub.s32 %v2445, %v2447
      %v2449 = vrot.slane %v2441, %v2448
      %v2451 = vunpack.c.l.s4 1934713408
      %v2452 = vunpack.c.0.s8 %v2451
      %v2453 = vlaneseq
      %v2454 = vshrl.u32 %v2453, 7
      %v2455 = vsub.s32 %v2452, %v2454
      %v2456 = vrot.slane %v2442, %v2455
      %v2457 = vcombine.high %v2433, 0.0
      %v2458 = vcombine.high %v2440, 0.0
      %v2459 = vcombine.high %v2449, 0.0
      %v2460 = vcombine.high %v2456, 0.0
      %v2461 = vcombine.low %v2102, %v2134
      %v2462 = vcombine.high %v2102, %v2134
      %v2464 = vunpack.c.l.s4 1983009808
      %v2465 = vunpack.c.0.s8 %v2464
      %v2466 = vlaneseq
      %v2467 = vshrl.u32 %v2466, 7
      %v2468 = vsub.s32 %v2465, %v2467
      %v2469 = vrot.slane %v2461, %v2468
      %v2471 = vunpack.c.l.s4 1983009808
      %v2472 = vunpack.c.0.s8 %v2471
      %v2473 = vlaneseq
      %v2474 = vshrl.u32 %v2473, 7
      %v2475 = vsub.s32 %v2472, %v2474
      %v2476 = vrot.slane %v2462, %v2475
      %v2477 = vcombine.low %v2118, %v2150
      %v2478 = vcombine.high %v2118, %v2150
      %v2480 = vunpack.c.l.s4 1983009808
      %v2481 = vunpack.c.0.s8 %v2480
      %v2482 = vlaneseq
      %v2483 = vshrl.u32 %v2482, 7
      %v2484 = vsub.s32 %v2481, %v2483
      %v2485 = vrot.slane %v2477, %v2484
      %v2487 = vunpack.c.l.s4 1983009808
      %v2488 = vunpack.c.0.s8 %v2487
      %v2489 = vlaneseq
      %v2490 = vshrl.u32 %v2489, 7
      %v2491 = vsub.s32 %v2488, %v2490
      %v2492 = vrot.slane %v2478, %v2491
      %v2493 = vcombine.low %v2469, %v2485
      %v2494 = vcombine.high %v2469, %v2485
      %v2496 = vunpack.c.l.s4 1934713408
      %v2497 = vunpack.c.0.s8 %v2496
      %v2498 = vlaneseq
      %v2499 = vshrl.u32 %v2498, 7
      %v2500 = vsub.s32 %v2497, %v2499
      %v2501 = vrot.slane %v2493, %v2500
      %v2503 = vunpack.c.l.s4 1934713408
      %v2504 = vunpack.c.0.s8 %v2503
      %v2505 = vlaneseq
      %v2506 = vshrl.u32 %v2505, 7
      %v2507 = vsub.s32 %v2504, %v2506
      %v2508 = vrot.slane %v2494, %v2507
      %v2509 = vcombine.low %v2476, %v2492
      %v2510 = vcombine.high %v2476, %v2492
      %v2512 = vunpack.c.l.s4 1934713408
      %v2513 = vunpack.c.0.s8 %v2512
      %v2514 = vlaneseq
      %v2515 = vshrl.u32 %v2514, 7
      %v2516 = vsub.s32 %v2513, %v2515
      %v2517 = vrot.slane %v2509, %v2516
      %v2519 = vunpack.c.l.s4 1934713408
      %v2520 = vunpack.c.0.s8 %v2519
      %v2521 = vlaneseq
      %v2522 = vshrl.u32 %v2521, 7
      %v2523 = vsub.s32 %v2520, %v2522
      %v2524 = vrot.slane %v2510, %v2523
      %v2525 = vcombine.high %v2501, 0.0
      %v2526 = vcombine.high %v2508, 0.0
      %v2527 = vcombine.high %v2517, 0.0
      %v2528 = vcombine.high %v2524, 0.0
      %v2529 = vcombine.low %v2104, %v2136
      %v2530 = vcombine.high %v2104, %v2136
      %v2532 = vunpack.c.l.s4 1983009808
      %v2533 = vunpack.c.0.s8 %v2532
      %v2534 = vlaneseq
      %v2535 = vshrl.u32 %v2534, 7
      %v2536 = vsub.s32 %v2533, %v2535
      %v2537 = vrot.slane %v2529, %v2536
      %v2539 = vunpack.c.l.s4 1983009808
      %v2540 = vunpack.c.0.s8 %v2539
      %v2541 = vlaneseq
      %v2542 = vshrl.u32 %v2541, 7
      %v2543 = vsub.s32 %v2540, %v2542
      %v2544 = vrot.slane %v2530, %v2543
      %v2545 = vcombine.low %v2120, %v2152
      %v2546 = vcombine.high %v2120, %v2152
      %v2548 = vunpack.c.l.s4 1983009808
      %v2549 = vunpack.c.0.s8 %v2548
      %v2550 = vlaneseq
      %v2551 = vshrl.u32 %v2550, 7
      %v2552 = vsub.s32 %v2549, %v2551
      %v2553 = vrot.slane %v2545, %v2552
      %v2555 = vunpack.c.l.s4 1983009808
      %v2556 = vunpack.c.0.s8 %v2555
      %v2557 = vlaneseq
      %v2558 = vshrl.u32 %v2557, 7
      %v2559 = vsub.s32 %v2556, %v2558
      %v2560 = vrot.slane %v2546, %v2559
      %v2561 = vcombine.low %v2537, %v2553
      %v2562 = vcombine.high %v2537, %v2553
      %v2564 = vunpack.c.l.s4 1934713408
      %v2565 = vunpack.c.0.s8 %v2564
      %v2566 = vlaneseq
      %v2567 = vshrl.u32 %v2566, 7
      %v2568 = vsub.s32 %v2565, %v2567
      %v2569 = vrot.slane %v2561, %v2568
      %v2571 = vunpack.c.l.s4 1934713408
      %v2572 = vunpack.c.0.s8 %v2571
      %v2573 = vlaneseq
      %v2574 = vshrl.u32 %v2573, 7
      %v2575 = vsub.s32 %v2572, %v2574
      %v2576 = vrot.slane %v2562, %v2575
      %v2577 = vcombine.low %v2544, %v2560
      %v2578 = vcombine.high %v2544, %v2560
      %v2580 = vunpack.c.l.s4 1934713408
      %v2581 = vunpack.c.0.s8 %v2580
      %v2582 = vlaneseq
      %v2583 = vshrl.u32 %v2582, 7
      %v2584 = vsub.s32 %v2581, %v2583
      %v2585 = vrot.slane %v2577, %v2584
      %v2587 = vunpack.c.l.s4 1934713408
      %v2588 = vunpack.c.0.s8 %v2587
      %v2589 = vlaneseq
      %v2590 = vshrl.u32 %v2589, 7
      %v2591 = vsub.s32 %v2588, %v2590
      %v2592 = vrot.slane %v2578, %v2591
      %v2593 = vcombine.high %v2569, 0.0
      %v2594 = vcombine.high %v2576, 0.0
      %v2595 = vcombine.high %v2585, 0.0
      %v2596 = vcombine.high %v2592, 0.0
      %v2597 = vcombine.low %v2106, %v2138
      %v2598 = vcombine.high %v2106, %v2138
      %v2600 = vunpack.c.l.s4 1983009808
      %v2601 = vunpack.c.0.s8 %v2600
      %v2602 = vlaneseq
      %v2603 = vshrl.u32 %v2602, 7
      %v2604 = vsub.s32 %v2601, %v2603
      %v2605 = vrot.slane %v2597, %v2604
      %v2607 = vunpack.c.l.s4 1983009808
      %v2608 = vunpack.c.0.s8 %v2607
      %v2609 = vlaneseq
      %v2610 = vshrl.u32 %v2609, 7
      %v2611 = vsub.s32 %v2608, %v2610
      %v2612 = vrot.slane %v2598, %v2611
      %v2613 = vcombine.low %v2122, %v2154
      %v2614 = vcombine.high %v2122, %v2154
      %v2616 = vunpack.c.l.s4 1983009808
      %v2617 = vunpack.c.0.s8 %v2616
      %v2618 = vlaneseq
      %v2619 = vshrl.u32 %v2618, 7
      %v2620 = vsub.s32 %v2617, %v2619
      %v2621 = vrot.slane %v2613, %v2620
      %v2623 = vunpack.c.l.s4 1983009808
      %v2624 = vunpack.c.0.s8 %v2623
      %v2625 = vlaneseq
      %v2626 = vshrl.u32 %v2625, 7
      %v2627 = vsub.s32 %v2624, %v2626
      %v2628 = vrot.slane %v2614, %v2627
      %v2629 = vcombine.low %v2605, %v2621
      %v2630 = vcombine.high %v2605, %v2621
      %v2632 = vunpack.c.l.s4 1934713408
      %v2633 = vunpack.c.0.s8 %v2632
      %v2634 = vlaneseq
      %v2635 = vshrl.u32 %v2634, 7
      %v2636 = vsub.s32 %v2633, %v2635
      %v2637 = vrot.slane %v2629, %v2636
      %v2639 = vunpack.c.l.s4 1934713408
      %v2640 = vunpack.c.0.s8 %v2639
      %v2641 = vlaneseq
      %v2642 = vshrl.u32 %v2641, 7
      %v2643 = vsub.s32 %v2640, %v2642
      %v2644 = vrot.slane %v2630, %v2643
      %v2645 = vcombine.low %v2612, %v2628
      %v2646 = vcombine.high %v2612, %v2628
      %v2648 = vunpack.c.l.s4 1934713408
      %v2649 = vunpack.c.0.s8 %v2648
      %v2650 = vlaneseq
      %v2651 = vshrl.u32 %v2650, 7
      %v2652 = vsub.s32 %v2649, %v2651
      %v2653 = vrot.slane %v2645, %v2652
      %v2655 = vunpack.c.l.s4 1934713408
      %v2656 = vunpack.c.0.s8 %v2655
      %v2657 = vlaneseq
      %v2658 = vshrl.u32 %v2657, 7
      %v2659 = vsub.s32 %v2656, %v2658
      %v2660 = vrot.slane %v2646, %v2659
      %v2661 = vcombine.high %v2637, 0.0
      %v2662 = vcombine.high %v2644, 0.0
      %v2663 = vcombine.high %v2653, 0.0
      %v2664 = vcombine.high %v2660, 0.0
      %v2665 = vcombine.low %v2108, %v2140
      %v2666 = vcombine.high %v2108, %v2140
      %v2668 = vunpack.c.l.s4 1983009808
      %v2669 = vunpack.c.0.s8 %v2668
      %v2670 = vlaneseq
      %v2671 = vshrl.u32 %v2670, 7
      %v2672 = vsub.s32 %v2669, %v2671
      %v2673 = vrot.slane %v2665, %v2672
      %v2675 = vunpack.c.l.s4 1983009808
      %v2676 = vunpack.c.0.s8 %v2675
      %v2677 = vlaneseq
      %v2678 = vshrl.u32 %v2677, 7
      %v2679 = vsub.s32 %v2676, %v2678
      %v2680 = vrot.slane %v2666, %v2679
      %v2681 = vcombine.low %v2124, %v2156
      %v2682 = vcombine.high %v2124, %v2156
      %v2684 = vunpack.c.l.s4 1983009808
      %v2685 = vunpack.c.0.s8 %v2684
      %v2686 = vlaneseq
      %v2687 = vshrl.u32 %v2686, 7
      %v2688 = vsub.s32 %v2685, %v2687
      %v2689 = vrot.slane %v2681, %v2688
      %v2691 = vunpack.c.l.s4 1983009808
      %v2692 = vunpack.c.0.s8 %v2691
      %v2693 = vlaneseq
      %v2694 = vshrl.u32 %v2693, 7
      %v2695 = vsub.s32 %v2692, %v2694
      %v2696 = vrot.slane %v2682, %v2695
      %v2697 = vcombine.low %v2673, %v2689
      %v2698 = vcombine.high %v2673, %v2689
      %v2700 = vunpack.c.l.s4 1934713408
      %v2701 = vunpack.c.0.s8 %v2700
      %v2702 = vlaneseq
      %v2703 = vshrl.u32 %v2702, 7
      %v2704 = vsub.s32 %v2701, %v2703
      %v2705 = vrot.slane %v2697, %v2704
      %v2707 = vunpack.c.l.s4 1934713408
      %v2708 = vunpack.c.0.s8 %v2707
      %v2709 = vlaneseq
      %v2710 = vshrl.u32 %v2709, 7
      %v2711 = vsub.s32 %v2708, %v2710
      %v2712 = vrot.slane %v2698, %v2711
      %v2713 = vcombine.low %v2680, %v2696
      %v2714 = vcombine.high %v2680, %v2696
      %v2716 = vunpack.c.l.s4 1934713408
      %v2717 = vunpack.c.0.s8 %v2716
      %v2718 = vlaneseq
      %v2719 = vshrl.u32 %v2718, 7
      %v2720 = vsub.s32 %v2717, %v2719
      %v2721 = vrot.slane %v2713, %v2720
      %v2723 = vunpack.c.l.s4 1934713408
      %v2724 = vunpack.c.0.s8 %v2723
      %v2725 = vlaneseq
      %v2726 = vshrl.u32 %v2725, 7
      %v2727 = vsub.s32 %v2724, %v2726
      %v2728 = vrot.slane %v2714, %v2727
      %v2729 = vcombine.high %v2705, 0.0
      %v2730 = vcombine.high %v2712, 0.0
      %v2731 = vcombine.high %v2721, 0.0
      %v2732 = vcombine.high %v2728, 0.0
      %v2733 = vcombine.low %v2229, %v2236
      %v2735 = vunpack.c.l.s4 1983009808
      %v2736 = vunpack.c.0.s8 %v2735
      %v2737 = vlaneseq
      %v2738 = vshrl.u32 %v2737, 7
      %v2739 = vsub.s32 %v2736, %v2738
      %v2740 = vrot.slane %v2733, %v2739
      %v2741 = vcombine.low %v2253, %v2254
      %v2743 = vunpack.c.l.s4 1983009808
      %v2744 = vunpack.c.0.s8 %v2743
      %v2745 = vlaneseq
      %v2746 = vshrl.u32 %v2745, 7
      %v2747 = vsub.s32 %v2744, %v2746
      %v2748 = vrot.slane %v2741, %v2747
      %v2749 = vcombine.low %v2245, %v2252
      %v2751 = vunpack.c.l.s4 1983009808
      %v2752 = vunpack.c.0.s8 %v2751
      %v2753 = vlaneseq
      %v2754 = vshrl.u32 %v2753, 7
      %v2755 = vsub.s32 %v2752, %v2754
      %v2756 = vrot.slane %v2749, %v2755
      %v2757 = vcombine.low %v2255, %v2256
      %v2759 = vunpack.c.l.s4 1983009808
      %v2760 = vunpack.c.0.s8 %v2759
      %v2761 = vlaneseq
      %v2762 = vshrl.u32 %v2761, 7
      %v2763 = vsub.s32 %v2760, %v2762
      %v2764 = vrot.slane %v2757, %v2763
      %v2765 = vcombine.low %v2740, %v2748
      %v2766 = vcombine.high %v2740, %v2748
      %v2768 = vunpack.c.l.s4 1934713408
      %v2769 = vunpack.c.0.s8 %v2768
      %v2770 = vlaneseq
      %v2771 = vshrl.u32 %v2770, 7
      %v2772 = vsub.s32 %v2769, %v2771
      %v2773 = vrot.slane %v2765, %v2772
      %v2775 = vunpack.c.l.s4 1934713408
      %v2776 = vunpack.c.0.s8 %v2775
      %v2777 = vlaneseq
      %v2778 = vshrl.u32 %v2777, 7
      %v2779 = vsub.s32 %v2776, %v2778
      %v2780 = vrot.slane %v2766, %v2779
      %v2781 = vcombine.low %v2756, %v2764
      %v2782 = vcombine.high %v2756, %v2764
      %v2784 = vunpack.c.l.s4 1934713408
      %v2785 = vunpack.c.0.s8 %v2784
      %v2786 = vlaneseq
      %v2787 = vshrl.u32 %v2786, 7
      %v2788 = vsub.s32 %v2785, %v2787
      %v2789 = vrot.slane %v2781, %v2788
      %v2791 = vunpack.c.l.s4 1934713408
      %v2792 = vunpack.c.0.s8 %v2791
      %v2793 = vlaneseq
      %v2794 = vshrl.u32 %v2793, 7
      %v2795 = vsub.s32 %v2792, %v2794
      %v2796 = vrot.slane %v2782, %v2795
      %v2797 = vcombine.low %v2773, %v2789
      %v2798 = vcombine.high %v2773, %v2789
      %v2799 = vcombine.low %v2780, %v2796
      %v2800 = vcombine.high %v2780, %v2796
      %v2801 = vcombine.low %v2297, %v2304
      %v2803 = vunpack.c.l.s4 1983009808
      %v2804 = vunpack.c.0.s8 %v2803
      %v2805 = vlaneseq
      %v2806 = vshrl.u32 %v2805, 7
      %v2807 = vsub.s32 %v2804, %v2806
      %v2808 = vrot.slane %v2801, %v2807
      %v2809 = vcombine.low %v2321, %v2322
      %v2811 = vunpack.c.l.s4 1983009808
      %v2812 = vunpack.c.0.s8 %v2811
      %v2813 = vlaneseq
      %v2814 = vshrl.u32 %v2813, 7
      %v2815 = vsub.s32 %v2812, %v2814
      %v2816 = vrot.slane %v2809, %v2815
      %v2817 = vcombine.low %v2313, %v2320
      %v2819 = vunpack.c.l.s4 1983009808
      %v2820 = vunpack.c.0.s8 %v2819
      %v2821 = vlaneseq
      %v2822 = vshrl.u32 %v2821, 7
      %v2823 = vsub.s32 %v2820, %v2822
      %v2824 = vrot.slane %v2817, %v2823
      %v2825 = vcombine.low %v2323, %v2324
      %v2827 = vunpack.c.l.s4 1983009808
      %v2828 = vunpack.c.0.s8 %v2827
      %v2829 = vlaneseq
      %v2830 = vshrl.u32 %v2829, 7
      %v2831 = vsub.s32 %v2828, %v2830
      %v2832 = vrot.slane %v2825, %v2831
      %v2833 = vcombine.low %v2808, %v2816
      %v2834 = vcombine.high %v2808, %v2816
      %v2836 = vunpack.c.l.s4 1934713408
      %v2837 = vunpack.c.0.s8 %v2836
      %v2838 = vlaneseq
      %v2839 = vshrl.u32 %v2838, 7
      %v2840 = vsub.s32 %v2837, %v2839
      %v2841 = vrot.slane %v2833, %v2840
      %v2843 = vunpack.c.l.s4 1934713408
      %v2844 = vunpack.c.0.s8 %v2843
      %v2845 = vlaneseq
      %v2846 = vshrl.u32 %v2845, 7
      %v2847 = vsub.s32 %v2844, %v2846
      %v2848 = vrot.slane %v2834, %v2847
      %v2849 = vcombine.low %v2824, %v2832
      %v2850 = vcombine.high %v2824, %v2832
      %v2852 = vunpack.c.l.s4 1934713408
      %v2853 = vunpack.c.0.s8 %v2852
      %v2854 = vlaneseq
      %v2855 = vshrl.u32 %v2854, 7
      %v2856 = vsub.s32 %v2853, %v2855
      %v2857 = vrot.slane %v2849, %v2856
      %v2859 = vunpack.c.l.s4 1934713408
      %v2860 = vunpack.c.0.s8 %v2859
      %v2861 = vlaneseq
      %v2862 = vshrl.u32 %v2861, 7
      %v2863 = vsub.s32 %v2860, %v2862
      %v2864 = vrot.slane %v2850, %v2863
      %v2865 = vcombine.low %v2841, %v2857
      %v2866 = vcombine.high %v2841, %v2857
      %v2867 = vcombine.low %v2848, %v2864
      %v2868 = vcombine.high %v2848, %v2864
      %v2869 = vcombine.low %v2365, %v2372
      %v2871 = vunpack.c.l.s4 1983009808
      %v2872 = vunpack.c.0.s8 %v2871
      %v2873 = vlaneseq
      %v2874 = vshrl.u32 %v2873, 7
      %v2875 = vsub.s32 %v2872, %v2874
      %v2876 = vrot.slane %v2869, %v2875
      %v2877 = vcombine.low %v2389, %v2390
      %v2879 = vunpack.c.l.s4 1983009808
      %v2880 = vunpack.c.0.s8 %v2879
      %v2881 = vlaneseq
      %v2882 = vshrl.u32 %v2881, 7
      %v2883 = vsub.s32 %v2880, %v2882
      %v2884 = vrot.slane %v2877, %v2883
      %v2885 = vcombine.low %v2381, %v2388
      %v2887 = vunpack.c.l.s4 1983009808
      %v2888 = vunpack.c.0.s8 %v2887
      %v2889 = vlaneseq
      %v2890 = vshrl.u32 %v2889, 7
      %v2891 = vsub.s32 %v2888, %v2890
      %v2892 = vrot.slane %v2885, %v2891
      %v2893 = vcombine.low %v2391, %v2392
      %v2895 = vunpack.c.l.s4 1983009808
      %v2896 = vunpack.c.0.s8 %v2895
      %v2897 = vlaneseq
      %v2898 = vshrl.u32 %v2897, 7
      %v2899 = vsub.s32 %v2896, %v2898
      %v2900 = vrot.slane %v2893, %v2899
      %v2901 = vcombine.low %v2876, %v2884
      %v2902 = vcombine.high %v2876, %v2884
      %v2904 = vunpack.c.l.s4 1934713408
      %v2905 = vunpack.c.0.s8 %v2904
      %v2906 = vlaneseq
      %v2907 = vshrl.u32 %v2906, 7
      %v2908 = vsub.s32 %v2905, %v2907
      %v2909 = vrot.slane %v2901, %v2908
      %v2911 = vunpack.c.l.s4 1934713408
      %v2912 = vunpack.c.0.s8 %v2911
      %v2913 = vlaneseq
      %v2914 = vshrl.u32 %v2913, 7
      %v2915 = vsub.s32 %v2912, %v2914
      %v2916 = vrot.slane %v2902, %v2915
      %v2917 = vcombine.low %v2892, %v2900
      %v2918 = vcombine.high %v2892, %v2900
      %v2920 = vunpack.c.l.s4 1934713408
      %v2921 = vunpack.c.0.s8 %v2920
      %v2922 = vlaneseq
      %v2923 = vshrl.u32 %v2922, 7
      %v2924 = vsub.s32 %v2921, %v2923
      %v2925 = vrot.slane %v2917, %v2924
      %v2927 = vunpack.c.l.s4 1934713408
      %v2928 = vunpack.c.0.s8 %v2927
      %v2929 = vlaneseq
      %v2930 = vshrl.u32 %v2929, 7
      %v2931 = vsub.s32 %v2928, %v2930
      %v2932 = vrot.slane %v2918, %v2931
      %v2933 = vcombine.low %v2909, %v2925
      %v2934 = vcombine.high %v2909, %v2925
      %v2935 = vcombine.low %v2916, %v2932
      %v2936 = vcombine.high %v2916, %v2932
      %v2937 = vcombine.low %v2433, %v2440
      %v2939 = vunpack.c.l.s4 1983009808
      %v2940 = vunpack.c.0.s8 %v2939
      %v2941 = vlaneseq
      %v2942 = vshrl.u32 %v2941, 7
      %v2943 = vsub.s32 %v2940, %v2942
      %v2944 = vrot.slane %v2937, %v2943
      %v2945 = vcombine.low %v2457, %v2458
      %v2947 = vunpack.c.l.s4 1983009808
      %v2948 = vunpack.c.0.s8 %v2947
      %v2949 = vlaneseq
      %v2950 = vshrl.u32 %v2949, 7
      %v2951 = vsub.s32 %v2948, %v2950
      %v2952 = vrot.slane %v2945, %v2951
      %v2953 = vcombine.low %v2449, %v2456
      %v2955 = vunpack.c.l.s4 1983009808
      %v2956 = vunpack.c.0.s8 %v2955
      %v2957 = vlaneseq
      %v2958 = vshrl.u32 %v2957, 7
      %v2959 = vsub.s32 %v2956, %v2958
      %v2960 = vrot.slane %v2953, %v2959
      %v2961 = vcombine.low %v2459, %v2460
      %v2963 = vunpack.c.l.s4 1983009808
      %v2964 = vunpack.c.0.s8 %v2963
      %v2965 = vlaneseq
      %v2966 = vshrl.u32 %v2965, 7
      %v2967 = vsub.s32 %v2964, %v2966
      %v2968 = vrot.slane %v2961, %v2967
      %v2969 = vcombine.low %v2944, %v2952
      %v2970 = vcombine.high %v2944, %v2952
      %v2972 = vunpack.c.l.s4 1934713408
      %v2973 = vunpack.c.0.s8 %v2972
      %v2974 = vlaneseq
      %v2975 = vshrl.u32 %v2974, 7
      %v2976 = vsub.s32 %v2973, %v2975
      %v2977 = vrot.slane %v2969, %v2976
      %v2979 = vunpack.c.l.s4 1934713408
      %v2980 = vunpack.c.0.s8 %v2979
      %v2981 = vlaneseq
      %v2982 = vshrl.u32 %v2981, 7
      %v2983 = vsub.s32 %v2980, %v2982
      %v2984 = vrot.slane %v2970, %v2983
      %v2985 = vcombine.low %v2960, %v2968
      %v2986 = vcombine.high %v2960, %v2968
      %v2988 = vunpack.c.l.s4 1934713408
      %v2989 = vunpack.c.0.s8 %v2988
      %v2990 = vlaneseq
      %v2991 = vshrl.u32 %v2990, 7
      %v2992 = vsub.s32 %v2989, %v2991
      %v2993 = vrot.slane %v2985, %v2992
      %v2995 = vunpack.c.l.s4 1934713408
      %v2996 = vunpack.c.0.s8 %v2995
      %v2997 = vlaneseq
      %v2998 = vshrl.u32 %v2997, 7
      %v2999 = vsub.s32 %v2996, %v2998
      %v3000 = vrot.slane %v2986, %v2999
      %v3001 = vcombine.low %v2977, %v2993
      %v3002 = vcombine.high %v2977, %v2993
      %v3003 = vcombine.low %v2984, %v3000
      %v3004 = vcombine.high %v2984, %v3000
      %v3005 = vcombine.low %v2501, %v2508
      %v3007 = vunpack.c.l.s4 1983009808
      %v3008 = vunpack.c.0.s8 %v3007
      %v3009 = vlaneseq
      %v3010 = vshrl.u32 %v3009, 7
      %v3011 = vsub.s32 %v3008, %v3010
      %v3012 = vrot.slane %v3005, %v3011
      %v3013 = vcombine.low %v2525, %v2526
      %v3015 = vunpack.c.l.s4 1983009808
      %v3016 = vunpack.c.0.s8 %v3015
      %v3017 = vlaneseq
      %v3018 = vshrl.u32 %v3017, 7
      %v3019 = vsub.s32 %v3016, %v3018
      %v3020 = vrot.slane %v3013, %v3019
      %v3021 = vcombine.low %v2517, %v2524
      %v3023 = vunpack.c.l.s4 1983009808
      %v3024 = vunpack.c.0.s8 %v3023
      %v3025 = vlaneseq
      %v3026 = vshrl.u32 %v3025, 7
      %v3027 = vsub.s32 %v3024, %v3026
      %v3028 = vrot.slane %v3021, %v3027
      %v3029 = vcombine.low %v2527, %v2528
      %v3031 = vunpack.c.l.s4 1983009808
      %v3032 = vunpack.c.0.s8 %v3031
      %v3033 = vlaneseq
      %v3034 = vshrl.u32 %v3033, 7
      %v3035 = vsub.s32 %v3032, %v3034
      %v3036 = vrot.slane %v3029, %v3035
      %v3037 = vcombine.low %v3012, %v3020
      %v3038 = vcombine.high %v3012, %v3020
      %v3040 = vunpack.c.l.s4 1934713408
      %v3041 = vunpack.c.0.s8 %v3040
      %v3042 = vlaneseq
      %v3043 = vshrl.u32 %v3042, 7
      %v3044 = vsub.s32 %v3041, %v3043
      %v3045 = vrot.slane %v3037, %v3044
      %v3047 = vunpack.c.l.s4 1934713408
      %v3048 = vunpack.c.0.s8 %v3047
      %v3049 = vlaneseq
      %v3050 = vshrl.u32 %v3049, 7
      %v3051 = vsub.s32 %v3048, %v3050
      %v3052 = vrot.slane %v3038, %v3051
      %v3053 = vcombine.low %v3028, %v3036
      %v3054 = vcombine.high %v3028, %v3036
      %v3056 = vunpack.c.l.s4 1934713408
      %v3057 = vunpack.c.0.s8 %v3056
      %v3058 = vlaneseq
      %v3059 = vshrl.u32 %v3058, 7
      %v3060 = vsub.s32 %v3057, %v3059
      %v3061 = vrot.slane %v3053, %v3060
      %v3063 = vunpack.c.l.s4 1934713408
      %v3064 = vunpack.c.0.s8 %v3063
      %v3065 = vlaneseq
      %v3066 = vshrl.u32 %v3065, 7
      %v3067 = vsub.s32 %v3064, %v3066
      %v3068 = vrot.slane %v3054, %v3067
      %v3069 = vcombine.low %v3045, %v3061
      %v3070 = vcombine.high %v3045, %v3061
      %v3071 = vcombine.low %v3052, %v3068
      %v3072 = vcombine.high %v3052, %v3068
      %v3073 = vcombine.low %v2569, %v2576
      %v3075 = vunpack.c.l.s4 1983009808
      %v3076 = vunpack.c.0.s8 %v3075
      %v3077 = vlaneseq
      %v3078 = vshrl.u32 %v3077, 7
      %v3079 = vsub.s32 %v3076, %v3078
      %v3080 = vrot.slane %v3073, %v3079
      %v3081 = vcombine.low %v2593, %v2594
      %v3083 = vunpack.c.l.s4 1983009808
      %v3084 = vunpack.c.0.s8 %v3083
      %v3085 = vlaneseq
      %v3086 = vshrl.u32 %v3085, 7
      %v3087 = vsub.s32 %v3084, %v3086
      %v3088 = vrot.slane %v3081, %v3087
      %v3089 = vcombine.low %v2585, %v2592
      %v3091 = vunpack.c.l.s4 1983009808
      %v3092 = vunpack.c.0.s8 %v3091
      %v3093 = vlaneseq
      %v3094 = vshrl.u32 %v3093, 7
      %v3095 = vsub.s32 %v3092, %v3094
      %v3096 = vrot.slane %v3089, %v3095
      %v3097 = vcombine.low %v2595, %v2596
      %v3099 = vunpack.c.l.s4 1983009808
      %v3100 = vunpack.c.0.s8 %v3099
      %v3101 = vlaneseq
      %v3102 = vshrl.u32 %v3101, 7
      %v3103 = vsub.s32 %v3100, %v3102
      %v3104 = vrot.slane %v3097, %v3103
      %v3105 = vcombine.low %v3080, %v3088
      %v3106 = vcombine.high %v3080, %v3088
      %v3108 = vunpack.c.l.s4 1934713408
      %v3109 = vunpack.c.0.s8 %v3108
      %v3110 = vlaneseq
      %v3111 = vshrl.u32 %v3110, 7
      %v3112 = vsub.s32 %v3109, %v3111
      %v3113 = vrot.slane %v3105, %v3112
      %v3115 = vunpack.c.l.s4 1934713408
      %v3116 = vunpack.c.0.s8 %v3115
      %v3117 = vlaneseq
      %v3118 = vshrl.u32 %v3117, 7
      %v3119 = vsub.s32 %v3116, %v3118
      %v3120 = vrot.slane %v3106, %v3119
      %v3121 = vcombine.low %v3096, %v3104
      %v3122 = vcombine.high %v3096, %v3104
      %v3124 = vunpack.c.l.s4 1934713408
      %v3125 = vunpack.c.0.s8 %v3124
      %v3126 = vlaneseq
      %v3127 = vshrl.u32 %v3126, 7
      %v3128 = vsub.s32 %v3125, %v3127
      %v3129 = vrot.slane %v3121, %v3128
      %v3131 = vunpack.c.l.s4 1934713408
      %v3132 = vunpack.c.0.s8 %v3131
      %v3133 = vlaneseq
      %v3134 = vshrl.u32 %v3133, 7
      %v3135 = vsub.s32 %v3132, %v3134
      %v3136 = vrot.slane %v3122, %v3135
      %v3137 = vcombine.low %v3113, %v3129
      %v3138 = vcombine.high %v3113, %v3129
      %v3139 = vcombine.low %v3120, %v3136
      %v3140 = vcombine.high %v3120, %v3136
      %v3141 = vcombine.low %v2637, %v2644
      %v3143 = vunpack.c.l.s4 1983009808
      %v3144 = vunpack.c.0.s8 %v3143
      %v3145 = vlaneseq
      %v3146 = vshrl.u32 %v3145, 7
      %v3147 = vsub.s32 %v3144, %v3146
      %v3148 = vrot.slane %v3141, %v3147
      %v3149 = vcombine.low %v2661, %v2662
      %v3151 = vunpack.c.l.s4 1983009808
      %v3152 = vunpack.c.0.s8 %v3151
      %v3153 = vlaneseq
      %v3154 = vshrl.u32 %v3153, 7
      %v3155 = vsub.s32 %v3152, %v3154
      %v3156 = vrot.slane %v3149, %v3155
      %v3157 = vcombine.low %v2653, %v2660
      %v3159 = vunpack.c.l.s4 1983009808
      %v3160 = vunpack.c.0.s8 %v3159
      %v3161 = vlaneseq
      %v3162 = vshrl.u32 %v3161, 7
      %v3163 = vsub.s32 %v3160, %v3162
      %v3164 = vrot.slane %v3157, %v3163
      %v3165 = vcombine.low %v2663, %v2664
      %v3167 = vunpack.c.l.s4 1983009808
      %v3168 = vunpack.c.0.s8 %v3167
      %v3169 = vlaneseq
      %v3170 = vshrl.u32 %v3169, 7
      %v3171 = vsub.s32 %v3168, %v3170
      %v3172 = vrot.slane %v3165, %v3171
      %v3173 = vcombine.low %v3148, %v3156
      %v3174 = vcombine.high %v3148, %v3156
      %v3176 = vunpack.c.l.s4 1934713408
      %v3177 = vunpack.c.0.s8 %v3176
      %v3178 = vlaneseq
      %v3179 = vshrl.u32 %v3178, 7
      %v3180 = vsub.s32 %v3177, %v3179
      %v3181 = vrot.slane %v3173, %v3180
      %v3183 = vunpack.c.l.s4 1934713408
      %v3184 = vunpack.c.0.s8 %v3183
      %v3185 = vlaneseq
      %v3186 = vshrl.u32 %v3185, 7
      %v3187 = vsub.s32 %v3184, %v3186
      %v3188 = vrot.slane %v3174, %v3187
      %v3189 = vcombine.low %v3164, %v3172
      %v3190 = vcombine.high %v3164, %v3172
      %v3192 = vunpack.c.l.s4 1934713408
      %v3193 = vunpack.c.0.s8 %v3192
      %v3194 = vlaneseq
      %v3195 = vshrl.u32 %v3194, 7
      %v3196 = vsub.s32 %v3193, %v3195
      %v3197 = vrot.slane %v3189, %v3196
      %v3199 = vunpack.c.l.s4 1934713408
      %v3200 = vunpack.c.0.s8 %v3199
      %v3201 = vlaneseq
      %v3202 = vshrl.u32 %v3201, 7
      %v3203 = vsub.s32 %v3200, %v3202
      %v3204 = vrot.slane %v3190, %v3203
      %v3205 = vcombine.low %v3181, %v3197
      %v3206 = vcombine.high %v3181, %v3197
      %v3207 = vcombine.low %v3188, %v3204
      %v3208 = vcombine.high %v3188, %v3204
      %v3209 = vcombine.low %v2705, %v2712
      %v3211 = vunpack.c.l.s4 1983009808
      %v3212 = vunpack.c.0.s8 %v3211
      %v3213 = vlaneseq
      %v3214 = vshrl.u32 %v3213, 7
      %v3215 = vsub.s32 %v3212, %v3214
      %v3216 = vrot.slane %v3209, %v3215
      %v3217 = vcombine.low %v2729, %v2730
      %v3219 = vunpack.c.l.s4 1983009808
      %v3220 = vunpack.c.0.s8 %v3219
      %v3221 = vlaneseq
      %v3222 = vshrl.u32 %v3221, 7
      %v3223 = vsub.s32 %v3220, %v3222
      %v3224 = vrot.slane %v3217, %v3223
      %v3225 = vcombine.low %v2721, %v2728
      %v3227 = vunpack.c.l.s4 1983009808
      %v3228 = vunpack.c.0.s8 %v3227
      %v3229 = vlaneseq
      %v3230 = vshrl.u32 %v3229, 7
      %v3231 = vsub.s32 %v3228, %v3230
      %v3232 = vrot.slane %v3225, %v3231
      %v3233 = vcombine.low %v2731, %v2732
      %v3235 = vunpack.c.l.s4 1983009808
      %v3236 = vunpack.c.0.s8 %v3235
      %v3237 = vlaneseq
      %v3238 = vshrl.u32 %v3237, 7
      %v3239 = vsub.s32 %v3236, %v3238
      %v3240 = vrot.slane %v3233, %v3239
      %v3241 = vcombine.low %v3216, %v3224
      %v3242 = vcombine.high %v3216, %v3224
      %v3244 = vunpack.c.l.s4 1934713408
      %v3245 = vunpack.c.0.s8 %v3244
      %v3246 = vlaneseq
      %v3247 = vshrl.u32 %v3246, 7
      %v3248 = vsub.s32 %v3245, %v3247
      %v3249 = vrot.slane %v3241, %v3248
      %v3251 = vunpack.c.l.s4 1934713408
      %v3252 = vunpack.c.0.s8 %v3251
      %v3253 = vlaneseq
      %v3254 = vshrl.u32 %v3253, 7
      %v3255 = vsub.s32 %v3252, %v3254
      %v3256 = vrot.slane %v3242, %v3255
      %v3257 = vcombine.low %v3232, %v3240
      %v3258 = vcombine.high %v3232, %v3240
      %v3260 = vunpack.c.l.s4 1934713408
      %v3261 = vunpack.c.0.s8 %v3260
      %v3262 = vlaneseq
      %v3263 = vshrl.u32 %v3262, 7
      %v3264 = vsub.s32 %v3261, %v3263
      %v3265 = vrot.slane %v3257, %v3264
      %v3267 = vunpack.c.l.s4 1934713408
      %v3268 = vunpack.c.0.s8 %v3267
      %v3269 = vlaneseq
      %v3270 = vshrl.u32 %v3269, 7
      %v3271 = vsub.s32 %v3268, %v3270
      %v3272 = vrot.slane %v3258, %v3271
      %v3273 = vcombine.low %v3249, %v3265
      %v3274 = vcombine.high %v3249, %v3265
      %v3275 = vcombine.low %v3256, %v3272
      %v3276 = vcombine.high %v3256, %v3272
      %v3277 = vpack.c.bf16 %v2865, %v2797
      %v3278 = vpack.c.bf16 %v3001, %v2933
      %v3279 = vpack.c.bf16 %v3137, %v3069
      %v3280 = vpack.c.bf16 %v3273, %v3205
      %v3281 = vpack.c.bf16 %v2866, %v2798
      %v3282 = vpack.c.bf16 %v3002, %v2934
      %v3283 = vpack.c.bf16 %v3138, %v3070
      %v3284 = vpack.c.bf16 %v3274, %v3206
      %v3285 = vpack.c.bf16 %v2867, %v2799
      %v3286 = vpack.c.bf16 %v3003, %v2935
      %v3287 = vpack.c.bf16 %v3139, %v3071
      %v3288 = vpack.c.bf16 %v3275, %v3207
      %v3289 = vpack.c.bf16 %v2868, %v2800
      %v3290 = vpack.c.bf16 %v3004, %v2936
      %v3291 = vpack.c.bf16 %v3140, %v3072
      %v3292 = vpack.c.bf16 %v3276, %v3208
      %vm3293 = vcmask 64512
      %v3295 = vsel %vm3293, %v905, 0
      %v3298 = vsel %vm3293, %v2077, 0
      %v3301 = vsel %vm3293, %v2078, 0
      %v3304 = vsel %vm3293, %v2079, 0
      %v3307 = vsel %vm3293, %v2080, 0
      %3309 = vmatprep.subr.bf16.mxu0 0
      %3310 = vmatpush1.bf16.xpose.msra.mxu0 %v3298
      %3311 = vmatprep.subr.bf16.mxu0 0
      %3312 = vmatpush1.bf16.xpose.msra.mxu0 %v3301
      %3313 = vmatprep.subr.bf16.mxu0 0
      %3314 = vmatpush1.bf16.xpose.msra.mxu0 %v3304
      %3315 = vmatprep.subr.bf16.mxu0 0
      %3316 = vmatpush1.bf16.xpose.msra.mxu0 %v3307
      %3317 = vmatprep.subr.bf16.mxu0 0
      %3318 = vmatpush1.bf16.xpose.msra.mxu0 0
      %3319 = vmatprep.subr.bf16.mxu0 0
      %3320 = vmatpush1.bf16.xpose.msra.mxu0 0
      %3321 = vmatprep.subr.bf16.mxu0 0
      %3322 = vmatpush1.bf16.xpose.msra.mxu0 0
      %3323 = vmatprep.subr.bf16.mxu0 0
      %3324 = vmatpush1.bf16.xpose.msra.mxu0 0
      %3325 = vmatprep.subr.bf16.mxu0 0
      %3326 = vmatpush1.bf16.xpose.msra.mxu0 0
      %3327 = vmatprep.subr.bf16.mxu0 0
      %3328 = vmatpush1.bf16.xpose.msra.mxu0 0
      %3329 = vmatprep.subr.bf16.mxu0 0
      %3330 = vmatpush1.bf16.xpose.msra.mxu0 0
      %3331 = vmatprep.subr.bf16.mxu0 0
      %3332 = vmatpush1.bf16.xpose.msra.mxu0 0
      %3333 = vmatprep.subr.bf16.mxu0 0
      %3334 = vmatpush1.bf16.xpose.msra.mxu0 0
      %3335 = vmatprep.subr.bf16.mxu0 0
      %3336 = vmatpush1.bf16.xpose.msra.mxu0 0
      %3337 = vmatprep.subr.bf16.mxu0 0
      %3338 = vmatpush1.bf16.xpose.msra.mxu0 0
      %3339 = vmatprep.subr.bf16.mxu0 0
      %3340 = vmatpush1.bf16.xpose.msra.mxu0 0
      %3341 = vmatprep.mubr.bf16.mxu0 0
      %3342 = vmatmul.mubr.bf16.gmra.mrb[0].mxu0 %v3295
      %v3343 = vpop.f32.mrb[0].mxu0
      %v3344 = vadd.f32 0.0, %v3343
      %v3345 = vpop.f32.mrb[0].mxu0
      %v3346 = vpop.f32.mrb[0].mxu0
      %v3347 = vadd.f32 0.0, %v3346
      %v3348 = vpop.f32.mrb[0].mxu0
      %3349 = vdwg.mxu0
      %v3351 = vsel %vm3293, %v906, 0
      %v3354 = vsel %vm3293, %v2081, 0
      %v3357 = vsel %vm3293, %v2082, 0
      %v3360 = vsel %vm3293, %v2083, 0
      %v3363 = vsel %vm3293, %v2084, 0
      %3365 = vmatprep.subr.bf16.mxu0 0
      %3366 = vmatpush1.bf16.xpose.msra.mxu0 %v3354
      %3367 = vmatprep.subr.bf16.mxu0 0
      %3368 = vmatpush1.bf16.xpose.msra.mxu0 %v3357
      %3369 = vmatprep.subr.bf16.mxu0 0
      %3370 = vmatpush1.bf16.xpose.msra.mxu0 %v3360
      %3371 = vmatprep.subr.bf16.mxu0 0
      %3372 = vmatpush1.bf16.xpose.msra.mxu0 %v3363
      %3373 = vmatprep.subr.bf16.mxu0 0
      %3374 = vmatpush1.bf16.xpose.msra.mxu0 0
      %3375 = vmatprep.subr.bf16.mxu0 0
      %3376 = vmatpush1.bf16.xpose.msra.mxu0 0
      %3377 = vmatprep.subr.bf16.mxu0 0
      %3378 = vmatpush1.bf16.xpose.msra.mxu0 0
      %3379 = vmatprep.subr.bf16.mxu0 0
      %3380 = vmatpush1.bf16.xpose.msra.mxu0 0
      %3381 = vmatprep.subr.bf16.mxu0 0
      %3382 = vmatpush1.bf16.xpose.msra.mxu0 0
      %3383 = vmatprep.subr.bf16.mxu0 0
      %3384 = vmatpush1.bf16.xpose.msra.mxu0 0
      %3385 = vmatprep.subr.bf16.mxu0 0
      %3386 = vmatpush1.bf16.xpose.msra.mxu0 0
      %3387 = vmatprep.subr.bf16.mxu0 0
      %3388 = vmatpush1.bf16.xpose.msra.mxu0 0
      %3389 = vmatprep.subr.bf16.mxu0 0
      %3390 = vmatpush1.bf16.xpose.msra.mxu0 0
      %3391 = vmatprep.subr.bf16.mxu0 0
      %3392 = vmatpush1.bf16.xpose.msra.mxu0 0
      %3393 = vmatprep.subr.bf16.mxu0 0
      %3394 = vmatpush1.bf16.xpose.msra.mxu0 0
      %3395 = vmatprep.subr.bf16.mxu0 0
      %3396 = vmatpush1.bf16.xpose.msra.mxu0 0
      %3397 = vmatprep.mubr.bf16.mxu0 0
      %3398 = vmatmul.mubr.bf16.gmra.mrb[0].mxu0 %v3351
      %v3399 = vpop.f32.mrb[0].mxu0
      %v3400 = vadd.f32 0.0, %v3399
      %v3401 = vpop.f32.mrb[0].mxu0
      %v3402 = vpop.f32.mrb[0].mxu0
      %v3403 = vadd.f32 0.0, %v3402
      %v3404 = vpop.f32.mrb[0].mxu0
      %3405 = vdwg.mxu0
      %v3407 = vsel %vm3293, %v907, 0
      %v3410 = vsel %vm3293, %v2085, 0
      %v3413 = vsel %vm3293, %v2086, 0
      %v3416 = vsel %vm3293, %v2087, 0
      %v3419 = vsel %vm3293, %v2088, 0
      %3421 = vmatprep.subr.bf16.mxu0 0
      %3422 = vmatpush1.bf16.xpose.msra.mxu0 %v3410
      %3423 = vmatprep.subr.bf16.mxu0 0
      %3424 = vmatpush1.bf16.xpose.msra.mxu0 %v3413
      %3425 = vmatprep.subr.bf16.mxu0 0
      %3426 = vmatpush1.bf16.xpose.msra.mxu0 %v3416
      %3427 = vmatprep.subr.bf16.mxu0 0
      %3428 = vmatpush1.bf16.xpose.msra.mxu0 %v3419
      %3429 = vmatprep.subr.bf16.mxu0 0
      %3430 = vmatpush1.bf16.xpose.msra.mxu0 0
      %3431 = vmatprep.subr.bf16.mxu0 0
      %3432 = vmatpush1.bf16.xpose.msra.mxu0 0
      %3433 = vmatprep.subr.bf16.mxu0 0
      %3434 = vmatpush1.bf16.xpose.msra.mxu0 0
      %3435 = vmatprep.subr.bf16.mxu0 0
      %3436 = vmatpush1.bf16.xpose.msra.mxu0 0
      %3437 = vmatprep.subr.bf16.mxu0 0
      %3438 = vmatpush1.bf16.xpose.msra.mxu0 0
      %3439 = vmatprep.subr.bf16.mxu0 0
      %3440 = vmatpush1.bf16.xpose.msra.mxu0 0
      %3441 = vmatprep.subr.bf16.mxu0 0
      %3442 = vmatpush1.bf16.xpose.msra.mxu0 0
      %3443 = vmatprep.subr.bf16.mxu0 0
      %3444 = vmatpush1.bf16.xpose.msra.mxu0 0
      %3445 = vmatprep.subr.bf16.mxu0 0
      %3446 = vmatpush1.bf16.xpose.msra.mxu0 0
      %3447 = vmatprep.subr.bf16.mxu0 0
      %3448 = vmatpush1.bf16.xpose.msra.mxu0 0
      %3449 = vmatprep.subr.bf16.mxu0 0
      %3450 = vmatpush1.bf16.xpose.msra.mxu0 0
      %3451 = vmatprep.subr.bf16.mxu0 0
      %3452 = vmatpush1.bf16.xpose.msra.mxu0 0
      %3453 = vmatprep.mubr.bf16.mxu0 0
      %3454 = vmatmul.mubr.bf16.gmra.mrb[0].mxu0 %v3407
      %v3455 = vpop.f32.mrb[0].mxu0
      %v3456 = vadd.f32 0.0, %v3455
      %v3457 = vpop.f32.mrb[0].mxu0
      %v3458 = vpop.f32.mrb[0].mxu0
      %v3459 = vadd.f32 0.0, %v3458
      %v3460 = vpop.f32.mrb[0].mxu0
      %3461 = vdwg.mxu0
      %v3463 = vsel %vm3293, %v908, 0
      %v3466 = vsel %vm3293, %v2089, 0
      %v3469 = vsel %vm3293, %v2090, 0
      %v3472 = vsel %vm3293, %v2091, 0
      %v3475 = vsel %vm3293, %v2092, 0
      %3477 = vmatprep.subr.bf16.mxu0 0
      %3478 = vmatpush1.bf16.xpose.msra.mxu0 %v3466
      %3479 = vmatprep.subr.bf16.mxu0 0
      %3480 = vmatpush1.bf16.xpose.msra.mxu0 %v3469
      %3481 = vmatprep.subr.bf16.mxu0 0
      %3482 = vmatpush1.bf16.xpose.msra.mxu0 %v3472
      %3483 = vmatprep.subr.bf16.mxu0 0
      %3484 = vmatpush1.bf16.xpose.msra.mxu0 %v3475
      %3485 = vmatprep.subr.bf16.mxu0 0
      %3486 = vmatpush1.bf16.xpose.msra.mxu0 0
      %3487 = vmatprep.subr.bf16.mxu0 0
      %3488 = vmatpush1.bf16.xpose.msra.mxu0 0
      %3489 = vmatprep.subr.bf16.mxu0 0
      %3490 = vmatpush1.bf16.xpose.msra.mxu0 0
      %3491 = vmatprep.subr.bf16.mxu0 0
      %3492 = vmatpush1.bf16.xpose.msra.mxu0 0
      %3493 = vmatprep.subr.bf16.mxu0 0
      %3494 = vmatpush1.bf16.xpose.msra.mxu0 0
      %3495 = vmatprep.subr.bf16.mxu0 0
      %3496 = vmatpush1.bf16.xpose.msra.mxu0 0
      %3497 = vmatprep.subr.bf16.mxu0 0
      %3498 = vmatpush1.bf16.xpose.msra.mxu0 0
      %3499 = vmatprep.subr.bf16.mxu0 0
      %3500 = vmatpush1.bf16.xpose.msra.mxu0 0
      %3501 = vmatprep.subr.bf16.mxu0 0
      %3502 = vmatpush1.bf16.xpose.msra.mxu0 0
      %3503 = vmatprep.subr.bf16.mxu0 0
      %3504 = vmatpush1.bf16.xpose.msra.mxu0 0
      %3505 = vmatprep.subr.bf16.mxu0 0
      %3506 = vmatpush1.bf16.xpose.msra.mxu0 0
      %3507 = vmatprep.subr.bf16.mxu0 0
      %3508 = vmatpush1.bf16.xpose.msra.mxu0 0
      %3509 = vmatprep.mubr.bf16.mxu0 0
      %3510 = vmatmul.mubr.bf16.gmra.mrb[0].mxu0 %v3463
      %v3511 = vpop.f32.mrb[0].mxu0
      %v3512 = vadd.f32 0.0, %v3511
      %v3513 = vpop.f32.mrb[0].mxu0
      %v3514 = vpop.f32.mrb[0].mxu0
      %v3515 = vadd.f32 0.0, %v3514
      %v3516 = vpop.f32.mrb[0].mxu0
      %3517 = vdwg.mxu0
      %vm3518 = vcmask 523264
      %v3519 = vsel %vm3518, %v3344, -inf
      %3520 = vmax.xlane.f32.xlu0 %v3519
      %v3521 = vpop.xlane.xlu0 %3520
      %v3522 = vsel %vm3518, %v3347, -inf
      %3523 = vmax.xlane.f32.xlu0 %v3522
      %v3524 = vpop.xlane.xlu0 %3523
      %v3525 = vsel %vm3518, %v3400, -inf
      %3526 = vmax.xlane.f32.xlu0 %v3525
      %v3527 = vpop.xlane.xlu0 %3526
      %v3528 = vsel %vm3518, %v3403, -inf
      %3529 = vmax.xlane.f32.xlu0 %v3528
      %v3530 = vpop.xlane.xlu0 %3529
      %v3531 = vsel %vm3518, %v3456, -inf
      %3532 = vmax.xlane.f32.xlu0 %v3531
      %v3533 = vpop.xlane.xlu0 %3532
      %v3534 = vsel %vm3518, %v3459, -inf
      %3535 = vmax.xlane.f32.xlu0 %v3534
      %v3536 = vpop.xlane.xlu0 %3535
      %v3537 = vsel %vm3518, %v3512, -inf
      %3538 = vmax.xlane.f32.xlu0 %v3537
      %v3539 = vpop.xlane.xlu0 %3538
      %v3540 = vsel %vm3518, %v3515, -inf
      %3541 = vmax.xlane.f32.xlu0 %v3540
      %v3542 = vpop.xlane.xlu0 %3541
      %v3543 = vsub.f32 %v3344, %v3521
      %v3544 = vsub.f32 %v3347, %v3524
      %v3545 = vsub.f32 %v3400, %v3527
      %v3546 = vsub.f32 %v3403, %v3530
      %v3547 = vsub.f32 %v3456, %v3533
      %v3548 = vsub.f32 %v3459, %v3536
      %v3549 = vsub.f32 %v3512, %v3539
      %v3550 = vsub.f32 %v3515, %v3542
      %v3551 = vmul.f32 %v3543, 1.442695
      %v3552 = vpow.pop %v3551
      %v3553 = vmul.f32 %v3544, 1.442695
      %v3554 = vpow.pop %v3553
      %v3555 = vmul.f32 %v3545, 1.442695
      %v3556 = vpow.pop %v3555
      %v3557 = vmul.f32 %v3546, 1.442695
      %v3558 = vpow.pop %v3557
      %v3559 = vmul.f32 %v3547, 1.442695
      %v3560 = vpow.pop %v3559
      %v3561 = vmul.f32 %v3548, 1.442695
      %v3562 = vpow.pop %v3561
      %v3563 = vmul.f32 %v3549, 1.442695
      %v3564 = vpow.pop %v3563
      %v3565 = vmul.f32 %v3550, 1.442695
      %v3566 = vpow.pop %v3565
      %v3567 = vsel %vm3518, %v3552, 0.0
      %3568 = vadd.xlane.f32.xlu0 %v3567
      %v3569 = vpop.xlane.xlu0 %3568
      %v3570 = vsel %vm3518, %v3554, 0.0
      %3571 = vadd.xlane.f32.xlu0 %v3570
      %v3572 = vpop.xlane.xlu0 %3571
      %v3573 = vsel %vm3518, %v3556, 0.0
      %3574 = vadd.xlane.f32.xlu0 %v3573
      %v3575 = vpop.xlane.xlu0 %3574
      %v3576 = vsel %vm3518, %v3558, 0.0
      %3577 = vadd.xlane.f32.xlu0 %v3576
      %v3578 = vpop.xlane.xlu0 %3577
      %v3579 = vsel %vm3518, %v3560, 0.0
      %3580 = vadd.xlane.f32.xlu0 %v3579
      %v3581 = vpop.xlane.xlu0 %3580
      %v3582 = vsel %vm3518, %v3562, 0.0
      %3583 = vadd.xlane.f32.xlu0 %v3582
      %v3584 = vpop.xlane.xlu0 %3583
      %v3585 = vsel %vm3518, %v3564, 0.0
      %3586 = vadd.xlane.f32.xlu0 %v3585
      %v3587 = vpop.xlane.xlu0 %3586
      %v3588 = vsel %vm3518, %v3566, 0.0
      %3589 = vadd.xlane.f32.xlu0 %v3588
      %v3590 = vpop.xlane.xlu0 %3589
      %v3591 = vrcp.pop %v3569
      %v3592 = vrcp.pop %v3572
      %v3593 = vrcp.pop %v3575
      %v3594 = vrcp.pop %v3578
      %v3595 = vrcp.pop %v3581
      %v3596 = vrcp.pop %v3584
      %v3597 = vrcp.pop %v3587
      %v3598 = vrcp.pop %v3590
      %v3599 = vmul.f32 %v3552, %v3591
      %v3600 = vmul.f32 %v3554, %v3592
      %v3601 = vmul.f32 %v3556, %v3593
      %v3602 = vmul.f32 %v3558, %v3594
      %v3603 = vmul.f32 %v3560, %v3595
      %v3604 = vmul.f32 %v3562, %v3596
      %v3605 = vmul.f32 %v3564, %v3597
      %v3606 = vmul.f32 %v3566, %v3598
      %v3607 = vpack.c.bf16 %v3600, %v3599
      %v3608 = vpack.c.bf16 %v3602, %v3601
      %v3609 = vpack.c.bf16 %v3604, %v3603
      %v3610 = vpack.c.bf16 %v3606, %v3605
      %v3612 = vsel %vm3518, %v3607, 0
      %3614 = vmatprep.subr.bf16.mxu0 0
      %3615 = vmatpush1.bf16.msra.mxu0 %v3277
      %3616 = vmatprep.subr.bf16.mxu0 0
      %3617 = vmatpush1.bf16.msra.mxu0 %v3278
      %3618 = vmatprep.subr.bf16.mxu0 0
      %3619 = vmatpush1.bf16.msra.mxu0 %v3279
      %3620 = vmatprep.subr.bf16.mxu0 0
      %3621 = vmatpush1.bf16.msra.mxu0 %v3280
      %3622 = vmatprep.subr.bf16.mxu0 0
      %3623 = vmatpush1.bf16.msra.mxu0 0
      %3624 = vmatprep.subr.bf16.mxu0 0
      %3625 = vmatpush1.bf16.msra.mxu0 0
      %3626 = vmatprep.subr.bf16.mxu0 0
      %3627 = vmatpush1.bf16.msra.mxu0 0
      %3628 = vmatprep.subr.bf16.mxu0 0
      %3629 = vmatpush1.bf16.msra.mxu0 0
      %3630 = vmatprep.subr.bf16.mxu0 0
      %3631 = vmatpush1.bf16.msra.mxu0 0
      %3632 = vmatprep.subr.bf16.mxu0 0
      %3633 = vmatpush1.bf16.msra.mxu0 0
      %3634 = vmatprep.subr.bf16.mxu0 0
      %3635 = vmatpush1.bf16.msra.mxu0 0
      %3636 = vmatprep.subr.bf16.mxu0 0
      %3637 = vmatpush1.bf16.msra.mxu0 0
      %3638 = vmatprep.subr.bf16.mxu0 0
      %3639 = vmatpush1.bf16.msra.mxu0 0
      %3640 = vmatprep.subr.bf16.mxu0 0
      %3641 = vmatpush1.bf16.msra.mxu0 0
      %3642 = vmatprep.subr.bf16.mxu0 0
      %3643 = vmatpush1.bf16.msra.mxu0 0
      %3644 = vmatprep.subr.bf16.mxu0 0
      %3645 = vmatpush1.bf16.msra.mxu0 0
      %3646 = vmatprep.mubr.bf16.mxu0 0
      %3647 = vmatmul.mubr.bf16.gmra.mrb[0].mxu0 %v3612
      %v3648 = vpop.f32.mrb[0].mxu0
      %v3649 = vadd.f32 0.0, %v3648
      %v3650 = vpop.f32.mrb[0].mxu0
      %v3651 = vpop.f32.mrb[0].mxu0
      %v3652 = vadd.f32 0.0, %v3651
      %v3653 = vpop.f32.mrb[0].mxu0
      %3654 = vdwg.mxu0
      %v3656 = vsel %vm3518, %v3608, 0
      %3658 = vmatprep.subr.bf16.mxu0 0
      %3659 = vmatpush1.bf16.msra.mxu0 %v3281
      %3660 = vmatprep.subr.bf16.mxu0 0
      %3661 = vmatpush1.bf16.msra.mxu0 %v3282
      %3662 = vmatprep.subr.bf16.mxu0 0
      %3663 = vmatpush1.bf16.msra.mxu0 %v3283
      %3664 = vmatprep.subr.bf16.mxu0 0
      %3665 = vmatpush1.bf16.msra.mxu0 %v3284
      %3666 = vmatprep.subr.bf16.mxu0 0
      %3667 = vmatpush1.bf16.msra.mxu0 0
      %3668 = vmatprep.subr.bf16.mxu0 0
      %3669 = vmatpush1.bf16.msra.mxu0 0
      %3670 = vmatprep.subr.bf16.mxu0 0
      %3671 = vmatpush1.bf16.msra.mxu0 0
      %3672 = vmatprep.subr.bf16.mxu0 0
      %3673 = vmatpush1.bf16.msra.mxu0 0
      %3674 = vmatprep.subr.bf16.mxu0 0
      %3675 = vmatpush1.bf16.msra.mxu0 0
      %3676 = vmatprep.subr.bf16.mxu0 0
      %3677 = vmatpush1.bf16.msra.mxu0 0
      %3678 = vmatprep.subr.bf16.mxu0 0
      %3679 = vmatpush1.bf16.msra.mxu0 0
      %3680 = vmatprep.subr.bf16.mxu0 0
      %3681 = vmatpush1.bf16.msra.mxu0 0
      %3682 = vmatprep.subr.bf16.mxu0 0
      %3683 = vmatpush1.bf16.msra.mxu0 0
      %3684 = vmatprep.subr.bf16.mxu0 0
      %3685 = vmatpush1.bf16.msra.mxu0 0
      %3686 = vmatprep.subr.bf16.mxu0 0
      %3687 = vmatpush1.bf16.msra.mxu0 0
      %3688 = vmatprep.subr.bf16.mxu0 0
      %3689 = vmatpush1.bf16.msra.mxu0 0
      %3690 = vmatprep.mubr.bf16.mxu0 0
      %3691 = vmatmul.mubr.bf16.gmra.mrb[0].mxu0 %v3656
      %v3692 = vpop.f32.mrb[0].mxu0
      %v3693 = vadd.f32 0.0, %v3692
      %v3694 = vpop.f32.mrb[0].mxu0
      %v3695 = vpop.f32.mrb[0].mxu0
      %v3696 = vadd.f32 0.0, %v3695
      %v3697 = vpop.f32.mrb[0].mxu0
      %3698 = vdwg.mxu0
      %v3700 = vsel %vm3518, %v3609, 0
      %3702 = vmatprep.subr.bf16.mxu0 0
      %3703 = vmatpush1.bf16.msra.mxu0 %v3285
      %3704 = vmatprep.subr.bf16.mxu0 0
      %3705 = vmatpush1.bf16.msra.mxu0 %v3286
      %3706 = vmatprep.subr.bf16.mxu0 0
      %3707 = vmatpush1.bf16.msra.mxu0 %v3287
      %3708 = vmatprep.subr.bf16.mxu0 0
      %3709 = vmatpush1.bf16.msra.mxu0 %v3288
      %3710 = vmatprep.subr.bf16.mxu0 0
      %3711 = vmatpush1.bf16.msra.mxu0 0
      %3712 = vmatprep.subr.bf16.mxu0 0
      %3713 = vmatpush1.bf16.msra.mxu0 0
      %3714 = vmatprep.subr.bf16.mxu0 0
      %3715 = vmatpush1.bf16.msra.mxu0 0
      %3716 = vmatprep.subr.bf16.mxu0 0
      %3717 = vmatpush1.bf16.msra.mxu0 0
      %3718 = vmatprep.subr.bf16.mxu0 0
      %3719 = vmatpush1.bf16.msra.mxu0 0
      %3720 = vmatprep.subr.bf16.mxu0 0
      %3721 = vmatpush1.bf16.msra.mxu0 0
      %3722 = vmatprep.subr.bf16.mxu0 0
      %3723 = vmatpush1.bf16.msra.mxu0 0
      %3724 = vmatprep.subr.bf16.mxu0 0
      %3725 = vmatpush1.bf16.msra.mxu0 0
      %3726 = vmatprep.subr.bf16.mxu0 0
      %3727 = vmatpush1.bf16.msra.mxu0 0
      %3728 = vmatprep.subr.bf16.mxu0 0
      %3729 = vmatpush1.bf16.msra.mxu0 0
      %3730 = vmatprep.subr.bf16.mxu0 0
      %3731 = vmatpush1.bf16.msra.mxu0 0
      %3732 = vmatprep.subr.bf16.mxu0 0
      %3733 = vmatpush1.bf16.msra.mxu0 0
      %3734 = vmatprep.mubr.bf16.mxu0 0
      %3735 = vmatmul.mubr.bf16.gmra.mrb[0].mxu0 %v3700
      %v3736 = vpop.f32.mrb[0].mxu0
      %v3737 = vadd.f32 0.0, %v3736
      %v3738 = vpop.f32.mrb[0].mxu0
      %v3739 = vpop.f32.mrb[0].mxu0
      %v3740 = vadd.f32 0.0, %v3739
      %v3741 = vpop.f32.mrb[0].mxu0
      %3742 = vdwg.mxu0
      %v3744 = vsel %vm3518, %v3610, 0
      %3746 = vmatprep.subr.bf16.mxu0 0
      %3747 = vmatpush1.bf16.msra.mxu0 %v3289
      %3748 = vmatprep.subr.bf16.mxu0 0
      %3749 = vmatpush1.bf16.msra.mxu0 %v3290
      %3750 = vmatprep.subr.bf16.mxu0 0
      %3751 = vmatpush1.bf16.msra.mxu0 %v3291
      %3752 = vmatprep.subr.bf16.mxu0 0
      %3753 = vmatpush1.bf16.msra.mxu0 %v3292
      %3754 = vmatprep.subr.bf16.mxu0 0
      %3755 = vmatpush1.bf16.msra.mxu0 0
      %3756 = vmatprep.subr.bf16.mxu0 0
      %3757 = vmatpush1.bf16.msra.mxu0 0
      %3758 = vmatprep.subr.bf16.mxu0 0
      %3759 = vmatpush1.bf16.msra.mxu0 0
      %3760 = vmatprep.subr.bf16.mxu0 0
      %3761 = vmatpush1.bf16.msra.mxu0 0
      %3762 = vmatprep.subr.bf16.mxu0 0
      %3763 = vmatpush1.bf16.msra.mxu0 0
      %3764 = vmatprep.subr.bf16.mxu0 0
      %3765 = vmatpush1.bf16.msra.mxu0 0
      %3766 = vmatprep.subr.bf16.mxu0 0
      %3767 = vmatpush1.bf16.msra.mxu0 0
      %3768 = vmatprep.subr.bf16.mxu0 0
      %3769 = vmatpush1.bf16.msra.mxu0 0
      %3770 = vmatprep.subr.bf16.mxu0 0
      %3771 = vmatpush1.bf16.msra.mxu0 0
      %3772 = vmatprep.subr.bf16.mxu0 0
      %3773 = vmatpush1.bf16.msra.mxu0 0
      %3774 = vmatprep.subr.bf16.mxu0 0
      %3775 = vmatpush1.bf16.msra.mxu0 0
      %3776 = vmatprep.subr.bf16.mxu0 0
      %3777 = vmatpush1.bf16.msra.mxu0 0
      %3778 = vmatprep.mubr.bf16.mxu0 0
      %3779 = vmatmul.mubr.bf16.gmra.mrb[0].mxu0 %v3744
      %v3780 = vpop.f32.mrb[0].mxu0
      %v3781 = vadd.f32 0.0, %v3780
      %v3782 = vpop.f32.mrb[0].mxu0
      %v3783 = vpop.f32.mrb[0].mxu0
      %v3784 = vadd.f32 0.0, %v3783
      %v3785 = vpop.f32.mrb[0].mxu0
      %3786 = vdwg.mxu0
      %v3787 = vcombine.low %v3649, %v3737
      %v3788 = vcombine.high %v3649, %v3737
      %v3790 = vunpack.c.l.s4 1983009808
      %v3791 = vunpack.c.0.s8 %v3790
      %v3792 = vlaneseq
      %v3793 = vshrl.u32 %v3792, 7
      %v3794 = vsub.s32 %v3791, %v3793
      %v3795 = vrot.slane %v3787, %v3794
      %v3797 = vunpack.c.l.s4 1983009808
      %v3798 = vunpack.c.0.s8 %v3797
      %v3799 = vlaneseq
      %v3800 = vshrl.u32 %v3799, 7
      %v3801 = vsub.s32 %v3798, %v3800
      %v3802 = vrot.slane %v3788, %v3801
      %v3803 = vcombine.low %v3693, %v3781
      %v3804 = vcombine.high %v3693, %v3781
      %v3806 = vunpack.c.l.s4 1983009808
      %v3807 = vunpack.c.0.s8 %v3806
      %v3808 = vlaneseq
      %v3809 = vshrl.u32 %v3808, 7
      %v3810 = vsub.s32 %v3807, %v3809
      %v3811 = vrot.slane %v3803, %v3810
      %v3813 = vunpack.c.l.s4 1983009808
      %v3814 = vunpack.c.0.s8 %v3813
      %v3815 = vlaneseq
      %v3816 = vshrl.u32 %v3815, 7
      %v3817 = vsub.s32 %v3814, %v3816
      %v3818 = vrot.slane %v3804, %v3817
      %v3819 = vcombine.low %v3795, %v3811
      %v3820 = vcombine.high %v3795, %v3811
      %v3822 = vunpack.c.l.s4 1934713408
      %v3823 = vunpack.c.0.s8 %v3822
      %v3824 = vlaneseq
      %v3825 = vshrl.u32 %v3824, 7
      %v3826 = vsub.s32 %v3823, %v3825
      %v3827 = vrot.slane %v3819, %v3826
      %v3829 = vunpack.c.l.s4 1934713408
      %v3830 = vunpack.c.0.s8 %v3829
      %v3831 = vlaneseq
      %v3832 = vshrl.u32 %v3831, 7
      %v3833 = vsub.s32 %v3830, %v3832
      %v3834 = vrot.slane %v3820, %v3833
      %v3835 = vcombine.low %v3802, %v3818
      %v3836 = vcombine.high %v3802, %v3818
      %v3838 = vunpack.c.l.s4 1934713408
      %v3839 = vunpack.c.0.s8 %v3838
      %v3840 = vlaneseq
      %v3841 = vshrl.u32 %v3840, 7
      %v3842 = vsub.s32 %v3839, %v3841
      %v3843 = vrot.slane %v3835, %v3842
      %v3845 = vunpack.c.l.s4 1934713408
      %v3846 = vunpack.c.0.s8 %v3845
      %v3847 = vlaneseq
      %v3848 = vshrl.u32 %v3847, 7
      %v3849 = vsub.s32 %v3846, %v3848
      %v3850 = vrot.slane %v3836, %v3849
      %v3851 = vcombine.high %v3827, 0.0
      %v3852 = vcombine.high %v3834, 0.0
      %v3853 = vcombine.high %v3843, 0.0
      %v3854 = vcombine.high %v3850, 0.0
      %v3855 = vcombine.low %v3652, %v3740
      %v3856 = vcombine.high %v3652, %v3740
      %v3858 = vunpack.c.l.s4 1983009808
      %v3859 = vunpack.c.0.s8 %v3858
      %v3860 = vlaneseq
      %v3861 = vshrl.u32 %v3860, 7
      %v3862 = vsub.s32 %v3859, %v3861
      %v3863 = vrot.slane %v3855, %v3862
      %v3865 = vunpack.c.l.s4 1983009808
      %v3866 = vunpack.c.0.s8 %v3865
      %v3867 = vlaneseq
      %v3868 = vshrl.u32 %v3867, 7
      %v3869 = vsub.s32 %v3866, %v3868
      %v3870 = vrot.slane %v3856, %v3869
      %v3871 = vcombine.low %v3696, %v3784
      %v3872 = vcombine.high %v3696, %v3784
      %v3874 = vunpack.c.l.s4 1983009808
      %v3875 = vunpack.c.0.s8 %v3874
      %v3876 = vlaneseq
      %v3877 = vshrl.u32 %v3876, 7
      %v3878 = vsub.s32 %v3875, %v3877
      %v3879 = vrot.slane %v3871, %v3878
      %v3881 = vunpack.c.l.s4 1983009808
      %v3882 = vunpack.c.0.s8 %v3881
      %v3883 = vlaneseq
      %v3884 = vshrl.u32 %v3883, 7
      %v3885 = vsub.s32 %v3882, %v3884
      %v3886 = vrot.slane %v3872, %v3885
      %v3887 = vcombine.low %v3863, %v3879
      %v3888 = vcombine.high %v3863, %v3879
      %v3890 = vunpack.c.l.s4 1934713408
      %v3891 = vunpack.c.0.s8 %v3890
      %v3892 = vlaneseq
      %v3893 = vshrl.u32 %v3892, 7
      %v3894 = vsub.s32 %v3891, %v3893
      %v3895 = vrot.slane %v3887, %v3894
      %v3897 = vunpack.c.l.s4 1934713408
      %v3898 = vunpack.c.0.s8 %v3897
      %v3899 = vlaneseq
      %v3900 = vshrl.u32 %v3899, 7
      %v3901 = vsub.s32 %v3898, %v3900
      %v3902 = vrot.slane %v3888, %v3901
      %v3903 = vcombine.low %v3870, %v3886
      %v3904 = vcombine.high %v3870, %v3886
      %v3906 = vunpack.c.l.s4 1934713408
      %v3907 = vunpack.c.0.s8 %v3906
      %v3908 = vlaneseq
      %v3909 = vshrl.u32 %v3908, 7
      %v3910 = vsub.s32 %v3907, %v3909
      %v3911 = vrot.slane %v3903, %v3910
      %v3913 = vunpack.c.l.s4 1934713408
      %v3914 = vunpack.c.0.s8 %v3913
      %v3915 = vlaneseq
      %v3916 = vshrl.u32 %v3915, 7
      %v3917 = vsub.s32 %v3914, %v3916
      %v3918 = vrot.slane %v3904, %v3917
      %v3919 = vcombine.high %v3895, 0.0
      %v3920 = vcombine.high %v3902, 0.0
      %v3921 = vcombine.high %v3911, 0.0
      %v3922 = vcombine.high %v3918, 0.0
      %v3923 = vcombine.low %v3827, %v3834
      %v3925 = vunpack.c.l.s4 1983009808
      %v3926 = vunpack.c.0.s8 %v3925
      %v3927 = vlaneseq
      %v3928 = vshrl.u32 %v3927, 7
      %v3929 = vsub.s32 %v3926, %v3928
      %v3930 = vrot.slane %v3923, %v3929
      %v3931 = vcombine.low %v3851, %v3852
      %v3933 = vunpack.c.l.s4 1983009808
      %v3934 = vunpack.c.0.s8 %v3933
      %v3935 = vlaneseq
      %v3936 = vshrl.u32 %v3935, 7
      %v3937 = vsub.s32 %v3934, %v3936
      %v3938 = vrot.slane %v3931, %v3937
      %v3939 = vcombine.low %v3843, %v3850
      %v3941 = vunpack.c.l.s4 1983009808
      %v3942 = vunpack.c.0.s8 %v3941
      %v3943 = vlaneseq
      %v3944 = vshrl.u32 %v3943, 7
      %v3945 = vsub.s32 %v3942, %v3944
      %v3946 = vrot.slane %v3939, %v3945
      %v3947 = vcombine.low %v3853, %v3854
      %v3949 = vunpack.c.l.s4 1983009808
      %v3950 = vunpack.c.0.s8 %v3949
      %v3951 = vlaneseq
      %v3952 = vshrl.u32 %v3951, 7
      %v3953 = vsub.s32 %v3950, %v3952
      %v3954 = vrot.slane %v3947, %v3953
      %v3955 = vcombine.low %v3930, %v3938
      %v3956 = vcombine.high %v3930, %v3938
      %v3958 = vunpack.c.l.s4 1934713408
      %v3959 = vunpack.c.0.s8 %v3958
      %v3960 = vlaneseq
      %v3961 = vshrl.u32 %v3960, 7
      %v3962 = vsub.s32 %v3959, %v3961
      %v3963 = vrot.slane %v3955, %v3962
      %v3965 = vunpack.c.l.s4 1934713408
      %v3966 = vunpack.c.0.s8 %v3965
      %v3967 = vlaneseq
      %v3968 = vshrl.u32 %v3967, 7
      %v3969 = vsub.s32 %v3966, %v3968
      %v3970 = vrot.slane %v3956, %v3969
      %v3971 = vcombine.low %v3946, %v3954
      %v3972 = vcombine.high %v3946, %v3954
      %v3974 = vunpack.c.l.s4 1934713408
      %v3975 = vunpack.c.0.s8 %v3974
      %v3976 = vlaneseq
      %v3977 = vshrl.u32 %v3976, 7
      %v3978 = vsub.s32 %v3975, %v3977
      %v3979 = vrot.slane %v3971, %v3978
      %v3981 = vunpack.c.l.s4 1934713408
      %v3982 = vunpack.c.0.s8 %v3981
      %v3983 = vlaneseq
      %v3984 = vshrl.u32 %v3983, 7
      %v3985 = vsub.s32 %v3982, %v3984
      %v3986 = vrot.slane %v3972, %v3985
      %v3987 = vcombine.low %v3963, %v3979
      %v3988 = vcombine.high %v3963, %v3979
      %v3989 = vcombine.low %v3970, %v3986
      %v3990 = vcombine.high %v3970, %v3986
      %v3991 = vcombine.low %v3895, %v3902
      %v3993 = vunpack.c.l.s4 1983009808
      %v3994 = vunpack.c.0.s8 %v3993
      %v3995 = vlaneseq
      %v3996 = vshrl.u32 %v3995, 7
      %v3997 = vsub.s32 %v3994, %v3996
      %v3998 = vrot.slane %v3991, %v3997
      %v3999 = vcombine.low %v3919, %v3920
      %v4001 = vunpack.c.l.s4 1983009808
      %v4002 = vunpack.c.0.s8 %v4001
      %v4003 = vlaneseq
      %v4004 = vshrl.u32 %v4003, 7
      %v4005 = vsub.s32 %v4002, %v4004
      %v4006 = vrot.slane %v3999, %v4005
      %v4007 = vcombine.low %v3911, %v3918
      %v4009 = vunpack.c.l.s4 1983009808
      %v4010 = vunpack.c.0.s8 %v4009
      %v4011 = vlaneseq
      %v4012 = vshrl.u32 %v4011, 7
      %v4013 = vsub.s32 %v4010, %v4012
      %v4014 = vrot.slane %v4007, %v4013
      %v4015 = vcombine.low %v3921, %v3922
      %v4017 = vunpack.c.l.s4 1983009808
      %v4018 = vunpack.c.0.s8 %v4017
      %v4019 = vlaneseq
      %v4020 = vshrl.u32 %v4019, 7
      %v4021 = vsub.s32 %v4018, %v4020
      %v4022 = vrot.slane %v4015, %v4021
      %v4023 = vcombine.low %v3998, %v4006
      %v4024 = vcombine.high %v3998, %v4006
      %v4026 = vunpack.c.l.s4 1934713408
      %v4027 = vunpack.c.0.s8 %v4026
      %v4028 = vlaneseq
      %v4029 = vshrl.u32 %v4028, 7
      %v4030 = vsub.s32 %v4027, %v4029
      %v4031 = vrot.slane %v4023, %v4030
      %v4033 = vunpack.c.l.s4 1934713408
      %v4034 = vunpack.c.0.s8 %v4033
      %v4035 = vlaneseq
      %v4036 = vshrl.u32 %v4035, 7
      %v4037 = vsub.s32 %v4034, %v4036
      %v4038 = vrot.slane %v4024, %v4037
      %v4039 = vcombine.low %v4014, %v4022
      %v4040 = vcombine.high %v4014, %v4022
      %v4042 = vunpack.c.l.s4 1934713408
      %v4043 = vunpack.c.0.s8 %v4042
      %v4044 = vlaneseq
      %v4045 = vshrl.u32 %v4044, 7
      %v4046 = vsub.s32 %v4043, %v4045
      %v4047 = vrot.slane %v4039, %v4046
      %v4049 = vunpack.c.l.s4 1934713408
      %v4050 = vunpack.c.0.s8 %v4049
      %v4051 = vlaneseq
      %v4052 = vshrl.u32 %v4051, 7
      %v4053 = vsub.s32 %v4050, %v4052
      %v4054 = vrot.slane %v4040, %v4053
      %v4055 = vcombine.low %v4031, %v4047
      %v4056 = vcombine.high %v4031, %v4047
      %v4057 = vcombine.low %v4038, %v4054
      %v4058 = vcombine.high %v4038, %v4054
      %4061 = vrot.lane.b32.xlu0 %v3988, 8
      %v4062 = vpop.permute.xlu0 %4061
      %4063 = vrot.lane.b32.xlu0 %v4056, 8
      %v4064 = vpop.permute.xlu0 %4063
      %4069 = vrot.lane.b32.xlu0 %v3989, 16
      %v4070 = vpop.permute.xlu0 %4069
      %4071 = vrot.lane.b32.xlu0 %v4057, 16
      %v4072 = vpop.permute.xlu0 %4071
      %4077 = vrot.lane.b32.xlu0 %v3990, 24
      %v4078 = vpop.permute.xlu0 %4077
      %4079 = vrot.lane.b32.xlu0 %v4058, 24
      %v4080 = vpop.permute.xlu0 %4079
      %v4083 = vsel %vm3293, %v3987, %v4062
      %v4084 = vsel %vm3293, %v4055, %v4064
      %vm4085 = vcmask 130048
      %v4086 = vsel %vm4085, %v4083, %v4070
      %v4087 = vsel %vm4085, %v4084, %v4072
      %vm4088 = vcmask 195584
      %v4089 = vsel %vm4088, %v4086, %v4078
      %v4090 = vsel %vm4088, %v4087, %v4080
      %v4091 = vadd.f32 %v438, %v4089
      %v4092 = vadd.f32 %v439, %v4090
      %v4093 = vpack.c.bf16 %v4092, %v4091
      %v4094 = vld [vmem:[%s7] sm:$0xf]
      %v4095 = vld [vmem:[%s7 + $0x4] sm:$0xf]
      %v4096 = vld [vmem:[%s7 + $0x8] sm:$0xf]
      %v4097 = vld [vmem:[%s7 + $0xc] sm:$0xf]
      %v4098 = vld [vmem:[%s8] sm:$0x1]
      %v4100 = vlaneseq
      %v4101 = vshrl.u32 %v4100, 7
      %v4102 = vsub.s32 0, %v4101
      %v4103 = vrot.slane %v4098, %v4102
      %v4109 = vunpack.c.l.b16 %v4094
      %v4110 = vunpack.c.l.b16 %v4095
      %v4111 = vunpack.c.l.b16 %v4096
      %v4112 = vunpack.c.l.b16 %v4097
      %v4113 = vpack.c.b16 %v4110, %v4109
      %v4114 = vpack.c.b16 %v4112, %v4111
      %v4118 = vsel %vm464, %v4093, 0
      %4120 = vmatprep.subr.bf16.mxu0 0
      %4121 = vmatpush1.bf16.msra.mxu0 %v4113
      %4122 = vmatprep.subr.bf16.mxu0 0
      %4123 = vmatpush1.bf16.msra.mxu0 %v4114
      %4124 = vmatprep.subr.bf16.mxu0 0
      %4125 = vmatpush1.bf16.msra.mxu0 0
      %4126 = vmatprep.subr.bf16.mxu0 0
      %4127 = vmatpush1.bf16.msra.mxu0 0
      %4128 = vmatprep.subr.bf16.mxu0 0
      %4129 = vmatpush1.bf16.msra.mxu0 0
      %4130 = vmatprep.subr.bf16.mxu0 0
      %4131 = vmatpush1.bf16.msra.mxu0 0
      %4132 = vmatprep.subr.bf16.mxu0 0
      %4133 = vmatpush1.bf16.msra.mxu0 0
      %4134 = vmatprep.subr.bf16.mxu0 0
      %4135 = vmatpush1.bf16.msra.mxu0 0
      %4136 = vmatprep.subr.bf16.mxu0 0
      %4137 = vmatpush1.bf16.msra.mxu0 0
      %4138 = vmatprep.subr.bf16.mxu0 0
      %4139 = vmatpush1.bf16.msra.mxu0 0
      %4140 = vmatprep.subr.bf16.mxu0 0
      %4141 = vmatpush1.bf16.msra.mxu0 0
      %4142 = vmatprep.subr.bf16.mxu0 0
      %4143 = vmatpush1.bf16.msra.mxu0 0
      %4144 = vmatprep.subr.bf16.mxu0 0
      %4145 = vmatpush1.bf16.msra.mxu0 0
      %4146 = vmatprep.subr.bf16.mxu0 0
      %4147 = vmatpush1.bf16.msra.mxu0 0
      %4148 = vmatprep.subr.bf16.mxu0 0
      %4149 = vmatpush1.bf16.msra.mxu0 0
      %4150 = vmatprep.subr.bf16.mxu0 0
      %4151 = vmatpush1.bf16.msra.mxu0 0
      %4152 = vmatprep.mubr.bf16.mxu0 0
      %4153 = vmatmul.mubr.bf16.gmra.mrb[0].mxu0 %v4118
      %v4154 = vpop.f32.mrb[0].mxu0
      %v4155 = vadd.f32 %v4103, %v4154
      %v4156 = vpop.f32.mrb[0].mxu0
      %v4157 = vpop.f32.mrb[0].mxu0
      %v4158 = vadd.f32 %v4103, %v4157
      %v4159 = vpop.f32.mrb[0].mxu0
      %4160 = vdwg.mxu0
      %v4161 = vmax.f32 %v4155, 0.0
      %v4162 = vmax.f32 %v4158, 0.0
      %v4163 = vpack.c.bf16 %v4162, %v4161
      %v4164 = vld [vmem:[%s9] sm:$0xf]
      %v4165 = vld [vmem:[%s9 + $0x4] sm:$0xf]
      %v4166 = vld [vmem:[%s9 + $0x8] sm:$0xf]
      %v4167 = vld [vmem:[%s9 + $0xc] sm:$0xf]
      %v4168 = vld [vmem:[%s9 + $0x10] sm:$0xf]
      %v4169 = vld [vmem:[%s9 + $0x14] sm:$0xf]
      %v4170 = vld [vmem:[%s9 + $0x18] sm:$0xf]
      %v4171 = vld [vmem:[%s9 + $0x1c] sm:$0xf]
      %v4180 = vunpack.c.l.b16 %v4164
      %v4181 = vunpack.c.l.b16 %v4165
      %v4182 = vunpack.c.l.b16 %v4166
      %v4183 = vunpack.c.l.b16 %v4167
      %v4184 = vunpack.c.l.b16 %v4168
      %v4185 = vunpack.c.l.b16 %v4169
      %v4186 = vunpack.c.l.b16 %v4170
      %v4187 = vunpack.c.l.b16 %v4171
      %v4188 = vpack.c.b16 %v4181, %v4180
      %v4189 = vpack.c.b16 %v4183, %v4182
      %v4190 = vpack.c.b16 %v4185, %v4184
      %v4191 = vpack.c.b16 %v4187, %v4186
      %v4197 = vsel %vm3518, %v4163, 0
      %4199 = vmatprep.subr.bf16.mxu0 0
      %4200 = vmatpush1.bf16.msra.mxu0 %v4188
      %4201 = vmatprep.subr.bf16.mxu0 0
      %4202 = vmatpush1.bf16.msra.mxu0 %v4189
      %4203 = vmatprep.subr.bf16.mxu0 0
      %4204 = vmatpush1.bf16.msra.mxu0 %v4190
      %4205 = vmatprep.subr.bf16.mxu0 0
      %4206 = vmatpush1.bf16.msra.mxu0 %v4191
      %4207 = vmatprep.subr.bf16.mxu0 0
      %4208 = vmatpush1.bf16.msra.mxu0 0
      %4209 = vmatprep.subr.bf16.mxu0 0
      %4210 = vmatpush1.bf16.msra.mxu0 0
      %4211 = vmatprep.subr.bf16.mxu0 0
      %4212 = vmatpush1.bf16.msra.mxu0 0
      %4213 = vmatprep.subr.bf16.mxu0 0
      %4214 = vmatpush1.bf16.msra.mxu0 0
      %4215 = vmatprep.subr.bf16.mxu0 0
      %4216 = vmatpush1.bf16.msra.mxu0 0
      %4217 = vmatprep.subr.bf16.mxu0 0
      %4218 = vmatpush1.bf16.msra.mxu0 0
      %4219 = vmatprep.subr.bf16.mxu0 0
      %4220 = vmatpush1.bf16.msra.mxu0 0
      %4221 = vmatprep.subr.bf16.mxu0 0
      %4222 = vmatpush1.bf16.msra.mxu0 0
      %4223 = vmatprep.subr.bf16.mxu0 0
      %4224 = vmatpush1.bf16.msra.mxu0 0
      %4225 = vmatprep.subr.bf16.mxu0 0
      %4226 = vmatpush1.bf16.msra.mxu0 0
      %4227 = vmatprep.subr.bf16.mxu0 0
      %4228 = vmatpush1.bf16.msra.mxu0 0
      %4229 = vmatprep.subr.bf16.mxu0 0
      %4230 = vmatpush1.bf16.msra.mxu0 0
      %4231 = vmatprep.mubr.bf16.mxu0 0
      %4232 = vmatmul.mubr.bf16.gmra.mrb[0].mxu0 %v4197
      %v4233 = vpop.f32.mrb[0].mxu0
      %v4234 = vadd.f32 0.0, %v4233
      %v4235 = vpop.f32.mrb[0].mxu0
      %v4236 = vpop.f32.mrb[0].mxu0
      %v4237 = vadd.f32 0.0, %v4236
      %v4238 = vpop.f32.mrb[0].mxu0
      %4239 = vdwg.mxu0
      %v4240 = vadd.f32 %v4091, %v4234
      %v4241 = vadd.f32 %v4092, %v4237
      %v4242 = vld [vmem:[%s10] sm:$0x1]
      %v4244 = vlaneseq
      %v4245 = vshrl.u32 %v4244, 7
      %v4246 = vsub.s32 0, %v4245
      %v4247 = vrot.slane %v4242, %v4246
      %v4249 = vadd.f32 %v4240, %v4247
      %v4250 = vadd.f32 %v4241, %v4247
      %4251 = vst.msk [vmem:[%s426] sm:$0xff] %vm464, %v4249
      %4252 = vst.msk [vmem:[%s426 + $0x8] sm:$0xff] %vm464, %v4250
      %p4253 = scmp.lt.s32.totalorder %s22, 1
      %s4254 = scalar_select %p4253, %s22, 1
      %s4255 = smul.addr %s4254, 2
      %s4256 = smul.addr %s4255, 8
      %s4257 = scalar_lea.vmem %s11, %s4256
      // Predicated region
      $region65: #{basic_attention_layer.2} parent=63 // pred_check
        %p4258 = pneg %p286
      $region66: #{basic_attention_layer.2} parent=63 // pred_check_branch
        %4260 = sbr.rel (%p4258) target = $region68
      $region67: #{basic_attention_layer.2} parent=63 // pred_region
        _
      $region68: #{basic_attention_layer.2} parent=63 // pred_fallthru
        _
    $region64: #{basic_attention_layer.2} parent=5 // pred_fallthru
      _
    %p4261 = scmp.le.s32.totalorder 2, %s17
    // Predicated region
    $region69: #{basic_attention_layer.2} parent=5 // pred_check
      %p4262 = pneg %p4261
    $region70: #{basic_attention_layer.2} parent=5 // pred_check_branch
      %4264 = sbr.rel (%p4262) target = $region72
    $region71: #{basic_attention_layer.2} parent=5 // pred_region
      %s4265 = ssub.s32 %s17, 2
      // Predicated region
      $region73: #{basic_attention_layer.2} parent=71 // pred_check
        %p4266 = pneg %p292
      $region74: #{basic_attention_layer.2} parent=71 // pred_check_branch
        %4268 = sbr.rel (%p4266) target = $region76
      $region75: #{basic_attention_layer.2} parent=71 // pred_region
        %p4269 = scmp.lt.s32.totalorder %s23, 1
        %s4270 = scalar_select %p4269, %s23, 1
        %s4271 = smul.addr %s4270, 2
        %s4272 = smul.addr %s4271, 8
        %s4273 = scalar_lea.vmem %s11, %s4272
      $region76: #{basic_attention_layer.2} parent=71 // pred_fallthru
        _
    $region72: #{basic_attention_layer.2} parent=5 // pred_fallthru
      _
  $region6: #{basic_attention_layer.2} parent=0 // loop_footer
    %s21 = sadd.s32 1, %s17
  $region7: #{basic_attention_layer.2} parent=0 // loop_footer_branch
    %16 = sbr.rel target = $region3
  $region8: #{basic_attention_layer.2} parent=0 // loop_exit
    _

// kernel: basic_attention_layer.3
$region0: #{basic_attention_layer.3}
  #allocation0 [shape = 'u32[]', space=smem, size = 0x4, offset = 0x4, fixed_abs, tag = 'smem constant byte address 0x4 - core index']
  #allocation1 [shape = 'u32[144,128]{1,0:T(1,128)}', space=vmem, size = 0x12000, scoped, tag = 'internal scratch']
  %s0 = inlined_call_operand.vmem [shape: f32[2,64,32], index: 0, kind: input, shape index: {}]
  %s1 = inlined_call_operand.vmem [shape: f32[2,64,32], index: 1, kind: input, shape index: {}]
  %s2 = inlined_call_operand.vmem [shape: f32[2,16,32], index: 2, kind: input, shape index: {}]
  %s3 = inlined_call_operand.vmem [shape: bf16[64,16], index: 3, kind: input, shape index: {}]
  %s4 = inlined_call_operand.vmem [shape: bf16[32,32], index: 4, kind: input, shape index: {}]
  %s5 = inlined_call_operand.vmem [shape: bf16[32,32], index: 5, kind: input, shape index: {}]
  %s6 = inlined_call_operand.vmem [shape: f32[1,32], index: 6, kind: input, shape index: {}]
  %s7 = inlined_call_operand.vmem [shape: f32[32,32], index: 7, kind: input, shape index: {}]
  %s8 = inlined_call_operand.vmem [shape: f32[1,32], index: 8, kind: input, shape index: {}]
  %s9 = inlined_call_operand.vmem [shape: f32[1,32], index: 9, kind: input, shape index: {}]
  %s10 = inlined_call_operand.vmem [shape: bf16[32,32], index: 10, kind: input, shape index: {}]
  %s11 = inlined_call_operand.vmem [shape: f32[1,32], index: 11, kind: input, shape index: {}]
  %s12 = inlined_call_operand.hbm [shape: f32[2,64,32], index: 12, kind: output, shape index: {}]
  %s13 = sld [smem:[#allocation0]]
  $region81: #{basic_attention_layer.3} parent=0
    _
  %s15 = ssub.s32 1, %s13
  %s16 = scalar_select 0, %s15, %s13
  $region1: #{basic_attention_layer.3} parent=0
    #allocation2 [shape = 'u8[65536]{0}', space=vmem, size = 0x10000, scoped, tag = 'output window, operand 0']
    #allocation3 [shape = 's32[2]{0}', space=sflag, size = 0x8, scoped, tag = 'scoped memory for basic_attention_layer.3']
    %17 = vsyncpa [#allocation3], 0
    %s18 = scalar_lea.sflag [#allocation3], 1
    %19 = vsyncpa %s18, 0
    loop: start=0, step=1, limit=4
    $region2: #{basic_attention_layer.3} parent=1 // loop_pre_header
      _
    $region3: #{basic_attention_layer.3} parent=1 // loop_header
      %s21 = sphi 0, %s25
      %p22 = scmp.ge.s32.totalorder %s21, 4
      %s31 = sphi 0, %s33
      %s34 = sphi 0, %s31
      %s35 = sphi 0, %s34
      %s51 = sphi 0, %s35
      %s57 = sphi 0, %s59
      %s60 = sphi 0, %s57
      %s61 = sphi 0, %s60
      %s77 = sphi 0, %s61
      %s83 = sphi 0, %s85
      %s86 = sphi 0, %s83
      %s87 = sphi 0, %s86
      %s103 = sphi 0, %s87
      %s107 = sphi 0, %s107
      %s109 = sphi 0, %s107
      %s110 = sphi 0, %s109
      %s124 = sphi 0, %s110
      %s128 = sphi 0, %s128
      %s130 = sphi 0, %s128
      %s131 = sphi 0, %s130
      %s145 = sphi 0, %s131
      %s149 = sphi 0, %s149
      %s151 = sphi 0, %s149
      %s152 = sphi 0, %s151
      %s166 = sphi 0, %s152
      %s170 = sphi 0, %s170
      %s172 = sphi 0, %s170
      %s173 = sphi 0, %s172
      %s187 = sphi 0, %s173
      %s191 = sphi 0, %s191
      %s193 = sphi 0, %s191
      %s194 = sphi 0, %s193
      %s208 = sphi 0, %s194
      %s212 = sphi 0, %s212
      %s214 = sphi 0, %s212
      %s215 = sphi 0, %s214
      %s229 = sphi 0, %s215
      %s233 = sphi 0, %s233
      %s235 = sphi 0, %s233
      %s236 = sphi 0, %s235
      %s250 = sphi 0, %s236
      %s254 = sphi 0, %s254
      %s256 = sphi 0, %s254
      %s257 = sphi 0, %s256
      %s271 = sphi 0, %s257
      %s275 = sphi 0, %s275
      %s277 = sphi 0, %s275
      %s278 = sphi 0, %s277
      %s292 = sphi 0, %s278
      %s298 = sphi 0, %s300
      %s301 = sphi 0, %s298
      %s302 = sphi 0, %s301
      %s318 = sphi 0, %s302
    $region4: #{basic_attention_layer.3} parent=1 // loop_header_branch
      %24 = sbr.rel (%p22) target = $region8
    $region5: #{basic_attention_layer.3} parent=1 // loop_body
      %s26 = ssub.s32 %s21, 1
      %s27 = ssub.s32 %s21, 2
      %s28 = sadd.s32 %s21, 1
      %s29 = ssub.s32 %s21, %s28
      %p30 = scmp.eq.s32.totalorder %s29, 0
      %s32 = sadd.s32 %s31, 1
      %s33 = scalar_select %p30, %s31, %s32
      %p36 = pneg %p30
      %p37 = scmp.eq.s32.totalorder %s21, 1
      %p38 = por %p36, %p37
      %p39 = scmp.ne.s32.totalorder %s31, %s34
      %p40 = scmp.eq.s32.totalorder %s21, 0
      %p41 = por %p39, %p40
      %p42 = scmp.ne.s32.totalorder %s31, %s34
      %p43 = scmp.eq.s32.totalorder %s26, 1
      %p44 = por %p42, %p43
      %p45 = scmp.ne.s32.totalorder %s34, %s35
      %p46 = scmp.eq.s32.totalorder %s26, 0
      %p47 = por %p45, %p46
      %p48 = scmp.ne.s32.totalorder %s34, %s35
      %p49 = scmp.eq.s32.totalorder %s27, 1
      %p50 = por %p48, %p49
      %p52 = scmp.ne.s32.totalorder %s35, %s51
      %p53 = scmp.eq.s32.totalorder %s27, 0
      %p54 = por %p52, %p53
      %s55 = ssub.s32 %s21, %s28
      %p56 = scmp.eq.s32.totalorder %s55, 0
      %s58 = sadd.s32 %s57, 1
      %s59 = scalar_select %p56, %s57, %s58
      %p62 = pneg %p56
      %p63 = scmp.eq.s32.totalorder %s21, 1
      %p64 = por %p62, %p63
      %p65 = scmp.ne.s32.totalorder %s57, %s60
      %p66 = scmp.eq.s32.totalorder %s21, 0
      %p67 = por %p65, %p66
      %p68 = scmp.ne.s32.totalorder %s57, %s60
      %p69 = scmp.eq.s32.totalorder %s26, 1
      %p70 = por %p68, %p69
      %p71 = scmp.ne.s32.totalorder %s60, %s61
      %p72 = scmp.eq.s32.totalorder %s26, 0
      %p73 = por %p71, %p72
      %p74 = scmp.ne.s32.totalorder %s60, %s61
      %p75 = scmp.eq.s32.totalorder %s27, 1
      %p76 = por %p74, %p75
      %p78 = scmp.ne.s32.totalorder %s61, %s77
      %p79 = scmp.eq.s32.totalorder %s27, 0
      %p80 = por %p78, %p79
      %s81 = ssub.s32 %s21, %s28
      %p82 = scmp.eq.s32.totalorder %s81, 0
      %s84 = sadd.s32 %s83, 1
      %s85 = scalar_select %p82, %s83, %s84
      %p88 = pneg %p82
      %p89 = scmp.eq.s32.totalorder %s21, 1
      %p90 = por %p88, %p89
      %p91 = scmp.ne.s32.totalorder %s83, %s86
      %p92 = scmp.eq.s32.totalorder %s21, 0
      %p93 = por %p91, %p92
      %p94 = scmp.ne.s32.totalorder %s83, %s86
      %p95 = scmp.eq.s32.totalorder %s26, 1
      %p96 = por %p94, %p95
      %p97 = scmp.ne.s32.totalorder %s86, %s87
      %p98 = scmp.eq.s32.totalorder %s26, 0
      %p99 = por %p97, %p98
      %p100 = scmp.ne.s32.totalorder %s86, %s87
      %p101 = scmp.eq.s32.totalorder %s27, 1
      %p102 = por %p100, %p101
      %p104 = scmp.ne.s32.totalorder %s87, %s103
      %p105 = scmp.eq.s32.totalorder %s27, 0
      %p106 = por %p104, %p105
      %s108 = sadd.s32 %s107, 1
      %p111 = scmp.eq.s32.totalorder %s21, 1
      %p112 = scmp.ne.s32.totalorder %s107, %s109
      %p113 = scmp.eq.s32.totalorder %s21, 0
      %p114 = por %p112, %p113
      %p115 = scmp.ne.s32.totalorder %s107, %s109
      %p116 = scmp.eq.s32.totalorder %s26, 1
      %p117 = por %p115, %p116
      %p118 = scmp.ne.s32.totalorder %s109, %s110
      %p119 = scmp.eq.s32.totalorder %s26, 0
      %p120 = por %p118, %p119
      %p121 = scmp.ne.s32.totalorder %s109, %s110
      %p122 = scmp.eq.s32.totalorder %s27, 1
      %p123 = por %p121, %p122
      %p125 = scmp.ne.s32.totalorder %s110, %s124
      %p126 = scmp.eq.s32.totalorder %s27, 0
      %p127 = por %p125, %p126
      %s129 = sadd.s32 %s128, 1
      %p132 = scmp.eq.s32.totalorder %s21, 1
      %p133 = scmp.ne.s32.totalorder %s128, %s130
      %p134 = scmp.eq.s32.totalorder %s21, 0
      %p135 = por %p133, %p134
      %p136 = scmp.ne.s32.totalorder %s128, %s130
      %p137 = scmp.eq.s32.totalorder %s26, 1
      %p138 = por %p136, %p137
      %p139 = scmp.ne.s32.totalorder %s130, %s131
      %p140 = scmp.eq.s32.totalorder %s26, 0
      %p141 = por %p139, %p140
      %p142 = scmp.ne.s32.totalorder %s130, %s131
      %p143 = scmp.eq.s32.totalorder %s27, 1
      %p144 = por %p142, %p143
      %p146 = scmp.ne.s32.totalorder %s131, %s145
      %p147 = scmp.eq.s32.totalorder %s27, 0
      %p148 = por %p146, %p147
      %s150 = sadd.s32 %s149, 1
      %p153 = scmp.eq.s32.totalorder %s21, 1
      %p154 = scmp.ne.s32.totalorder %s149, %s151
      %p155 = scmp.eq.s32.totalorder %s21, 0
      %p156 = por %p154, %p155
      %p157 = scmp.ne.s32.totalorder %s149, %s151
      %p158 = scmp.eq.s32.totalorder %s26, 1
      %p159 = por %p157, %p158
      %p160 = scmp.ne.s32.totalorder %s151, %s152
      %p161 = scmp.eq.s32.totalorder %s26, 0
      %p162 = por %p160, %p161
      %p163 = scmp.ne.s32.totalorder %s151, %s152
      %p164 = scmp.eq.s32.totalorder %s27, 1
      %p165 = por %p163, %p164
      %p167 = scmp.ne.s32.totalorder %s152, %s166
      %p168 = scmp.eq.s32.totalorder %s27, 0
      %p169 = por %p167, %p168
      %s171 = sadd.s32 %s170, 1
      %p174 = scmp.eq.s32.totalorder %s21, 1
      %p175 = scmp.ne.s32.totalorder %s170, %s172
      %p176 = scmp.eq.s32.totalorder %s21, 0
      %p177 = por %p175, %p176
      %p178 = scmp.ne.s32.totalorder %s170, %s172
      %p179 = scmp.eq.s32.totalorder %s26, 1
      %p180 = por %p178, %p179
      %p181 = scmp.ne.s32.totalorder %s172, %s173
      %p182 = scmp.eq.s32.totalorder %s26, 0
      %p183 = por %p181, %p182
      %p184 = scmp.ne.s32.totalorder %s172, %s173
      %p185 = scmp.eq.s32.totalorder %s27, 1
      %p186 = por %p184, %p185
      %p188 = scmp.ne.s32.totalorder %s173, %s187
      %p189 = scmp.eq.s32.totalorder %s27, 0
      %p190 = por %p188, %p189
      %s192 = sadd.s32 %s191, 1
      %p195 = scmp.eq.s32.totalorder %s21, 1
      %p196 = scmp.ne.s32.totalorder %s191, %s193
      %p197 = scmp.eq.s32.totalorder %s21, 0
      %p198 = por %p196, %p197
      %p199 = scmp.ne.s32.totalorder %s191, %s193
      %p200 = scmp.eq.s32.totalorder %s26, 1
      %p201 = por %p199, %p200
      %p202 = scmp.ne.s32.totalorder %s193, %s194
      %p203 = scmp.eq.s32.totalorder %s26, 0
      %p204 = por %p202, %p203
      %p205 = scmp.ne.s32.totalorder %s193, %s194
      %p206 = scmp.eq.s32.totalorder %s27, 1
      %p207 = por %p205, %p206
      %p209 = scmp.ne.s32.totalorder %s194, %s208
      %p210 = scmp.eq.s32.totalorder %s27, 0
      %p211 = por %p209, %p210
      %s213 = sadd.s32 %s212, 1
      %p216 = scmp.eq.s32.totalorder %s21, 1
      %p217 = scmp.ne.s32.totalorder %s212, %s214
      %p218 = scmp.eq.s32.totalorder %s21, 0
      %p219 = por %p217, %p218
      %p220 = scmp.ne.s32.totalorder %s212, %s214
      %p221 = scmp.eq.s32.totalorder %s26, 1
      %p222 = por %p220, %p221
      %p223 = scmp.ne.s32.totalorder %s214, %s215
      %p224 = scmp.eq.s32.totalorder %s26, 0
      %p225 = por %p223, %p224
      %p226 = scmp.ne.s32.totalorder %s214, %s215
      %p227 = scmp.eq.s32.totalorder %s27, 1
      %p228 = por %p226, %p227
      %p230 = scmp.ne.s32.totalorder %s215, %s229
      %p231 = scmp.eq.s32.totalorder %s27, 0
      %p232 = por %p230, %p231
      %s234 = sadd.s32 %s233, 1
      %p237 = scmp.eq.s32.totalorder %s21, 1
      %p238 = scmp.ne.s32.totalorder %s233, %s235
      %p239 = scmp.eq.s32.totalorder %s21, 0
      %p240 = por %p238, %p239
      %p241 = scmp.ne.s32.totalorder %s233, %s235
      %p242 = scmp.eq.s32.totalorder %s26, 1
      %p243 = por %p241, %p242
      %p244 = scmp.ne.s32.totalorder %s235, %s236
      %p245 = scmp.eq.s32.totalorder %s26, 0
      %p246 = por %p244, %p245
      %p247 = scmp.ne.s32.totalorder %s235, %s236
      %p248 = scmp.eq.s32.totalorder %s27, 1
      %p249 = por %p247, %p248
      %p251 = scmp.ne.s32.totalorder %s236, %s250
      %p252 = scmp.eq.s32.totalorder %s27, 0
      %p253 = por %p251, %p252
      %s255 = sadd.s32 %s254, 1
      %p258 = scmp.eq.s32.totalorder %s21, 1
      %p259 = scmp.ne.s32.totalorder %s254, %s256
      %p260 = scmp.eq.s32.totalorder %s21, 0
      %p261 = por %p259, %p260
      %p262 = scmp.ne.s32.totalorder %s254, %s256
      %p263 = scmp.eq.s32.totalorder %s26, 1
      %p264 = por %p262, %p263
      %p265 = scmp.ne.s32.totalorder %s256, %s257
      %p266 = scmp.eq.s32.totalorder %s26, 0
      %p267 = por %p265, %p266
      %p268 = scmp.ne.s32.totalorder %s256, %s257
      %p269 = scmp.eq.s32.totalorder %s27, 1
      %p270 = por %p268, %p269
      %p272 = scmp.ne.s32.totalorder %s257, %s271
      %p273 = scmp.eq.s32.totalorder %s27, 0
      %p274 = por %p272, %p273
      %s276 = sadd.s32 %s275, 1
      %p279 = scmp.eq.s32.totalorder %s21, 1
      %p280 = scmp.ne.s32.totalorder %s275, %s277
      %p281 = scmp.eq.s32.totalorder %s21, 0
      %p282 = por %p280, %p281
      %p283 = scmp.ne.s32.totalorder %s275, %s277
      %p284 = scmp.eq.s32.totalorder %s26, 1
      %p285 = por %p283, %p284
      %p286 = scmp.ne.s32.totalorder %s277, %s278
      %p287 = scmp.eq.s32.totalorder %s26, 0
      %p288 = por %p286, %p287
      %p289 = scmp.ne.s32.totalorder %s277, %s278
      %p290 = scmp.eq.s32.totalorder %s27, 1
      %p291 = por %p289, %p290
      %p293 = scmp.ne.s32.totalorder %s278, %s292
      %p294 = scmp.eq.s32.totalorder %s27, 0
      %p295 = por %p293, %p294
      %s296 = ssub.s32 %s21, %s28
      %p297 = scmp.eq.s32.totalorder %s296, 0
      %s299 = sadd.s32 %s298, 1
      %s300 = scalar_select %p297, %s298, %s299
      %p303 = pneg %p297
      %p304 = scmp.eq.s32.totalorder %s21, 1
      %p305 = por %p303, %p304
      %p306 = scmp.ne.s32.totalorder %s298, %s301
      %p307 = scmp.eq.s32.totalorder %s21, 0
      %p308 = por %p306, %p307
      %p309 = scmp.ne.s32.totalorder %s298, %s301
      %p310 = scmp.eq.s32.totalorder %s26, 1
      %p311 = por %p309, %p310
      %p312 = scmp.ne.s32.totalorder %s301, %s302
      %p313 = scmp.eq.s32.totalorder %s26, 0
      %p314 = por %p312, %p313
      %p315 = scmp.ne.s32.totalorder %s301, %s302
      %p316 = scmp.eq.s32.totalorder %s27, 1
      %p317 = por %p315, %p316
      %p319 = scmp.ne.s32.totalorder %s302, %s318
      %p320 = scmp.eq.s32.totalorder %s27, 0
      %p321 = por %p319, %p320
      %p322 = scmp.le.s32.totalorder 1, %s21
      %p323 = scmp.lt.s32.totalorder %s21, 3
      %p324 = pnand %p322, %p323
      %p325 = pneg %p324
      // Predicated region
      $region9: #{basic_attention_layer.3} parent=5 // pred_check
        _
      $region10: #{basic_attention_layer.3} parent=5 // pred_check_branch
        %327 = sbr.rel (%p324) target = $region12
      $region11: #{basic_attention_layer.3} parent=5 // pred_region
        %s328 = ssub.s32 %s21, 1
        // Predicated region
        $region13: #{basic_attention_layer.3} parent=11 // pred_check
          %p329 = pneg %p120
        $region14: #{basic_attention_layer.3} parent=11 // pred_check_branch
          %331 = sbr.rel (%p329) target = $region16
        $region15: #{basic_attention_layer.3} parent=11 // pred_region
          _
        $region16: #{basic_attention_layer.3} parent=11 // pred_fallthru
          _
        // Predicated region
        $region17: #{basic_attention_layer.3} parent=11 // pred_check
          %p332 = pneg %p141
        $region18: #{basic_attention_layer.3} parent=11 // pred_check_branch
          %334 = sbr.rel (%p332) target = $region20
        $region19: #{basic_attention_layer.3} parent=11 // pred_region
          _
        $region20: #{basic_attention_layer.3} parent=11 // pred_fallthru
          _
        // Predicated region
        $region21: #{basic_attention_layer.3} parent=11 // pred_check
          %p335 = pneg %p162
        $region22: #{basic_attention_layer.3} parent=11 // pred_check_branch
          %337 = sbr.rel (%p335) target = $region24
        $region23: #{basic_attention_layer.3} parent=11 // pred_region
          _
        $region24: #{basic_attention_layer.3} parent=11 // pred_fallthru
          _
        // Predicated region
        $region25: #{basic_attention_layer.3} parent=11 // pred_check
          %p338 = pneg %p183
        $region26: #{basic_attention_layer.3} parent=11 // pred_check_branch
          %340 = sbr.rel (%p338) target = $region28
        $region27: #{basic_attention_layer.3} parent=11 // pred_region
          _
        $region28: #{basic_attention_layer.3} parent=11 // pred_fallthru
          _
        // Predicated region
        $region29: #{basic_attention_layer.3} parent=11 // pred_check
          %p341 = pneg %p204
        $region30: #{basic_attention_layer.3} parent=11 // pred_check_branch
          %343 = sbr.rel (%p341) target = $region32
        $region31: #{basic_attention_layer.3} parent=11 // pred_region
          _
        $region32: #{basic_attention_layer.3} parent=11 // pred_fallthru
          _
        // Predicated region
        $region33: #{basic_attention_layer.3} parent=11 // pred_check
          %p344 = pneg %p225
        $region34: #{basic_attention_layer.3} parent=11 // pred_check_branch
          %346 = sbr.rel (%p344) target = $region36
        $region35: #{basic_attention_layer.3} parent=11 // pred_region
          _
        $region36: #{basic_attention_layer.3} parent=11 // pred_fallthru
          _
        // Predicated region
        $region37: #{basic_attention_layer.3} parent=11 // pred_check
          %p347 = pneg %p246
        $region38: #{basic_attention_layer.3} parent=11 // pred_check_branch
          %349 = sbr.rel (%p347) target = $region40
        $region39: #{basic_attention_layer.3} parent=11 // pred_region
          _
        $region40: #{basic_attention_layer.3} parent=11 // pred_fallthru
          _
        // Predicated region
        $region41: #{basic_attention_layer.3} parent=11 // pred_check
          %p350 = pneg %p267
        $region42: #{basic_attention_layer.3} parent=11 // pred_check_branch
          %352 = sbr.rel (%p350) target = $region44
        $region43: #{basic_attention_layer.3} parent=11 // pred_region
          _
        $region44: #{basic_attention_layer.3} parent=11 // pred_fallthru
          _
        // Predicated region
        $region45: #{basic_attention_layer.3} parent=11 // pred_check
          %p353 = pneg %p288
        $region46: #{basic_attention_layer.3} parent=11 // pred_check_branch
          %355 = sbr.rel (%p353) target = $region48
        $region47: #{basic_attention_layer.3} parent=11 // pred_region
          _
        $region48: #{basic_attention_layer.3} parent=11 // pred_fallthru
          _
      $region12: #{basic_attention_layer.3} parent=5 // pred_fallthru
        _
      %p356 = scmp.lt.s32.totalorder %s21, 2
      // Predicated region
      $region49: #{basic_attention_layer.3} parent=5 // pred_check
        %p357 = pneg %p356
      $region50: #{basic_attention_layer.3} parent=5 // pred_check_branch
        %359 = sbr.rel (%p357) target = $region52
      $region51: #{basic_attention_layer.3} parent=5 // pred_region
        // Predicated region
        $region53: #{basic_attention_layer.3} parent=51 // pred_check
          %p360 = pneg %p41
        $region54: #{basic_attention_layer.3} parent=51 // pred_check_branch
          %362 = sbr.rel (%p360) target = $region56
        $region55: #{basic_attention_layer.3} parent=51 // pred_region
          %p363 = scmp.lt.s32.totalorder %s21, 1
          %s364 = scalar_select %p363, %s21, 1
          %s365 = smul.addr %s364, 8
          %s366 = smul.addr %s365, 8
          %s367 = scalar_lea.vmem %s0, %s366
        $region56: #{basic_attention_layer.3} parent=51 // pred_fallthru
          _
        // Predicated region
        $region57: #{basic_attention_layer.3} parent=51 // pred_check
          %p368 = pneg %p67
        $region58: #{basic_attention_layer.3} parent=51 // pred_check_branch
          %370 = sbr.rel (%p368) target = $region60
        $region59: #{basic_attention_layer.3} parent=51 // pred_region
          %p371 = scmp.lt.s32.totalorder %s21, 1
          %s372 = scalar_select %p371, %s21, 1
          %s373 = smul.addr %s372, 8
          %s374 = smul.addr %s373, 8
          %s375 = scalar_lea.vmem %s1, %s374
        $region60: #{basic_attention_layer.3} parent=51 // pred_fallthru
          _
        // Predicated region
        $region61: #{basic_attention_layer.3} parent=51 // pred_check
          %p376 = pneg %p93
        $region62: #{basic_attention_layer.3} parent=51 // pred_check_branch
          %378 = sbr.rel (%p376) target = $region64
        $region63: #{basic_attention_layer.3} parent=51 // pred_region
          %p379 = scmp.lt.s32.totalorder %s21, 1
          %s380 = scalar_select %p379, %s21, 1
          %s381 = smul.addr %s380, 2
          %s382 = smul.addr %s381, 8
          %s383 = scalar_lea.vmem %s2, %s382
        $region64: #{basic_attention_layer.3} parent=51 // pred_fallthru
          _
      $region52: #{basic_attention_layer.3} parent=5 // pred_fallthru
        _
      %p384 = scmp.le.s32.totalorder 1, %s21
      %p385 = scmp.lt.s32.totalorder %s21, 3
      %p386 = pnand %p384, %p385
      %p387 = pneg %p386
      // Predicated region
      $region65: #{basic_attention_layer.3} parent=5 // pred_check
        _
      $region66: #{basic_attention_layer.3} parent=5 // pred_check_branch
        %389 = sbr.rel (%p386) target = $region68
      $region67: #{basic_attention_layer.3} parent=5 // pred_region
        %s390 = ssub.s32 %s21, 1
        %p391 = scmp.lt.s32.totalorder %s26, 1
        %s392 = scalar_select %p391, %s26, 1
        %s393 = smul.addr %s392, 8
        %s394 = smul.addr %s393, 8
        %s395 = scalar_lea.vmem %s0, %s394
        %p396 = pneg %p47
        %p397 = pneg %p44
        %p398 = scmp.lt.s32.totalorder %s26, 1
        %s399 = scalar_select %p398, %s26, 1
        %s400 = smul.addr %s399, 8
        %s401 = smul.addr %s400, 8
        %s402 = scalar_lea.vmem %s1, %s401
        %p403 = pneg %p73
        %p404 = pneg %p70
        %p405 = scmp.lt.s32.totalorder %s26, 1
        %s406 = scalar_select %p405, %s26, 1
        %s407 = smul.addr %s406, 2
        %s408 = smul.addr %s407, 8
        %s409 = scalar_lea.vmem %s2, %s408
        %p410 = pneg %p99
        %p411 = pneg %p96
        %p412 = pneg %p120
        %p413 = pneg %p117
        %p414 = pneg %p141
        %p415 = pneg %p138
        %p416 = pneg %p162
        %p417 = pneg %p159
        %p418 = pneg %p183
        %p419 = pneg %p180
        %p420 = pneg %p204
        %p421 = pneg %p201
        %p422 = pneg %p225
        %p423 = pneg %p222
        %p424 = pneg %p246
        %p425 = pneg %p243
        %p426 = pneg %p267
        %p427 = pneg %p264
        %p428 = pneg %p288
        %p429 = pneg %p285
        %p430 = pneg %p314
        %p431 = pneg %p311
        %s432 = sand.u32 %s301, 1
        %s433 = scalar_lea.sflag [#allocation3], %s432
        %s434 = sand.u32 %s301, 1
        %s435 = smul.addr %s434, 64
        %s436 = scalar_lea.vmem [#allocation2], %s435
        %p437 = scmp.lt.s32.totalorder %s26, 1
        %s438 = scalar_select %p437, %s26, 1
        %s439 = smul.addr %s438, 8
        %s440 = smul.addr %s439, 8
        %s441 = scalar_lea.vmem %s0, %s440
        %p442 = scmp.lt.s32.totalorder %s26, 1
        %s443 = scalar_select %p442, %s26, 1
        %s444 = smul.addr %s443, 8
        %s445 = smul.addr %s444, 8
        %s446 = scalar_lea.vmem %s1, %s445
        %p447 = scmp.lt.s32.totalorder %s26, 1
        %s448 = scalar_select %p447, %s26, 1
        %s449 = smul.addr %s448, 2
        %s450 = smul.addr %s449, 8
        %s451 = scalar_lea.vmem %s2, %s450
        %v453 = vld [vmem:[%s441] sm:$0xff]
        %v454 = vld [vmem:[%s441 + $0x8] sm:$0xff]
        %v455 = vld [vmem:[%s441 + $0x10] sm:$0xff]
        %v456 = vld [vmem:[%s441 + $0x18] sm:$0xff]
        %v457 = vld [vmem:[%s441 + $0x20] sm:$0xff]
        %v458 = vld [vmem:[%s441 + $0x28] sm:$0xff]
        %v459 = vld [vmem:[%s441 + $0x30] sm:$0xff]
        %v460 = vld [vmem:[%s441 + $0x38] sm:$0xff]
        %v461 = vld [vmem:[%s446] sm:$0xff]
        %v462 = vld [vmem:[%s446 + $0x8] sm:$0xff]
        %v463 = vld [vmem:[%s446 + $0x10] sm:$0xff]
        %v464 = vld [vmem:[%s446 + $0x18] sm:$0xff]
        %v465 = vld [vmem:[%s446 + $0x20] sm:$0xff]
        %v466 = vld [vmem:[%s446 + $0x28] sm:$0xff]
        %v467 = vld [vmem:[%s446 + $0x30] sm:$0xff]
        %v468 = vld [vmem:[%s446 + $0x38] sm:$0xff]
        %v469 = vpack.c.bf16 %v454, %v453
        %v470 = vpack.c.bf16 %v456, %v455
        %v471 = vpack.c.bf16 %v458, %v457
        %v472 = vpack.c.bf16 %v460, %v459
        %v473 = vld [vmem:[%s4] sm:$0xf]
        %v474 = vld [vmem:[%s4 + $0x4] sm:$0xf]
        %v475 = vld [vmem:[%s4 + $0x8] sm:$0xf]
        %v476 = vld [vmem:[%s4 + $0xc] sm:$0xf]
        %v481 = vunpack.c.l.b16 %v473
        %v482 = vunpack.c.l.b16 %v474
        %v483 = vunpack.c.l.b16 %v475
        %v484 = vunpack.c.l.b16 %v476
        %v485 = vpack.c.b16 %v482, %v481
        %v486 = vpack.c.b16 %v484, %v483
        %vm489 = vcmask 261120
        %v491 = vsel %vm489, %v469, 0
        %v494 = vsel %vm489, %v470, 0
        %v497 = vsel %vm489, %v471, 0
        %v500 = vsel %vm489, %v472, 0
        %502 = vmatprep.subr.bf16.mxu0 0
        %503 = vmatpush1.bf16.msra.mxu0 %v485
        %504 = vmatprep.subr.bf16.mxu0 0
        %505 = vmatpush1.bf16.msra.mxu0 %v486
        %506 = vmatprep.subr.bf16.mxu0 0
        %507 = vmatpush1.bf16.msra.mxu0 0
        %508 = vmatprep.subr.bf16.mxu0 0
        %509 = vmatpush1.bf16.msra.mxu0 0
        %510 = vmatprep.subr.bf16.mxu0 0
        %511 = vmatpush1.bf16.msra.mxu0 0
        %512 = vmatprep.subr.bf16.mxu0 0
        %513 = vmatpush1.bf16.msra.mxu0 0
        %514 = vmatprep.subr.bf16.mxu0 0
        %515 = vmatpush1.bf16.msra.mxu0 0
        %516 = vmatprep.subr.bf16.mxu0 0
        %517 = vmatpush1.bf16.msra.mxu0 0
        %518 = vmatprep.subr.bf16.mxu0 0
        %519 = vmatpush1.bf16.msra.mxu0 0
        %520 = vmatprep.subr.bf16.mxu0 0
        %521 = vmatpush1.bf16.msra.mxu0 0
        %522 = vmatprep.subr.bf16.mxu0 0
        %523 = vmatpush1.bf16.msra.mxu0 0
        %524 = vmatprep.subr.bf16.mxu0 0
        %525 = vmatpush1.bf16.msra.mxu0 0
        %526 = vmatprep.subr.bf16.mxu0 0
        %527 = vmatpush1.bf16.msra.mxu0 0
        %528 = vmatprep.subr.bf16.mxu0 0
        %529 = vmatpush1.bf16.msra.mxu0 0
        %530 = vmatprep.subr.bf16.mxu0 0
        %531 = vmatpush1.bf16.msra.mxu0 0
        %532 = vmatprep.subr.bf16.mxu0 0
        %533 = vmatpush1.bf16.msra.mxu0 0
        %534 = vmatprep.mubr.bf16.mxu0 0
        %535 = vmatmul.mubr.bf16.gmra.mrb[0].mxu0 %v491
        %v536 = vpop.f32.mrb[0].mxu0
        %v537 = vadd.f32 0.0, %v536
        %v538 = vpop.f32.mrb[0].mxu0
        %v539 = vpop.f32.mrb[0].mxu0
        %v540 = vadd.f32 0.0, %v539
        %v541 = vpop.f32.mrb[0].mxu0
        %542 = vmatprep.mubr.bf16.mxu0 0
        %543 = vmatmul.mubr.bf16.gmra.mrb[0].mxu0 %v494
        %v544 = vpop.f32.mrb[0].mxu0
        %v545 = vadd.f32 0.0, %v544
        %v546 = vpop.f32.mrb[0].mxu0
        %v547 = vpop.f32.mrb[0].mxu0
        %v548 = vadd.f32 0.0, %v547
        %v549 = vpop.f32.mrb[0].mxu0
        %550 = vmatprep.mubr.bf16.mxu0 0
        %551 = vmatmul.mubr.bf16.gmra.mrb[0].mxu0 %v497
        %v552 = vpop.f32.mrb[0].mxu0
        %v553 = vadd.f32 0.0, %v552
        %v554 = vpop.f32.mrb[0].mxu0
        %v555 = vpop.f32.mrb[0].mxu0
        %v556 = vadd.f32 0.0, %v555
        %v557 = vpop.f32.mrb[0].mxu0
        %558 = vmatprep.mubr.bf16.mxu0 0
        %559 = vmatmul.mubr.bf16.gmra.mrb[0].mxu0 %v500
        %v560 = vpop.f32.mrb[0].mxu0
        %v561 = vadd.f32 0.0, %v560
        %v562 = vpop.f32.mrb[0].mxu0
        %v563 = vpop.f32.mrb[0].mxu0
        %v564 = vadd.f32 0.0, %v563
        %v565 = vpop.f32.mrb[0].mxu0
        %566 = vdwg.mxu0
        %v567 = vadd.f32 %v461, %v537
        %v568 = vadd.f32 %v462, %v540
        %v569 = vadd.f32 %v463, %v545
        %v570 = vadd.f32 %v464, %v548
        %v571 = vadd.f32 %v465, %v553
        %v572 = vadd.f32 %v466, %v556
        %v573 = vadd.f32 %v467, %v561
        %v574 = vadd.f32 %v468, %v564
        %v575 = vpack.c.bf16 %v462, %v461
        %v576 = vpack.c.bf16 %v464, %v463
        %v577 = vpack.c.bf16 %v466, %v465
        %v578 = vpack.c.bf16 %v468, %v467
        %v579 = vld [vmem:[%s5] sm:$0xf]
        %v580 = vld [vmem:[%s5 + $0x4] sm:$0xf]
        %v581 = vld [vmem:[%s5 + $0x8] sm:$0xf]
        %v582 = vld [vmem:[%s5 + $0xc] sm:$0xf]
        %v587 = vunpack.c.l.b16 %v579
        %v588 = vunpack.c.l.b16 %v580
        %v589 = vunpack.c.l.b16 %v581
        %v590 = vunpack.c.l.b16 %v582
        %v591 = vpack.c.b16 %v588, %v587
        %v592 = vpack.c.b16 %v590, %v589
        %v596 = vsel %vm489, %v575, 0
        %v599 = vsel %vm489, %v576, 0
        %v602 = vsel %vm489, %v577, 0
        %v605 = vsel %vm489, %v578, 0
        %607 = vmatprep.subr.bf16.mxu0 0
        %608 = vmatpush1.bf16.msra.mxu0 %v591
        %609 = vmatprep.subr.bf16.mxu0 0
        %610 = vmatpush1.bf16.msra.mxu0 %v592
        %611 = vmatprep.subr.bf16.mxu0 0
        %612 = vmatpush1.bf16.msra.mxu0 0
        %613 = vmatprep.subr.bf16.mxu0 0
        %614 = vmatpush1.bf16.msra.mxu0 0
        %615 = vmatprep.subr.bf16.mxu0 0
        %616 = vmatpush1.bf16.msra.mxu0 0
        %617 = vmatprep.subr.bf16.mxu0 0
        %618 = vmatpush1.bf16.msra.mxu0 0
        %619 = vmatprep.subr.bf16.mxu0 0
        %620 = vmatpush1.bf16.msra.mxu0 0
        %621 = vmatprep.subr.bf16.mxu0 0
        %622 = vmatpush1.bf16.msra.mxu0 0
        %623 = vmatprep.subr.bf16.mxu0 0
        %624 = vmatpush1.bf16.msra.mxu0 0
        %625 = vmatprep.subr.bf16.mxu0 0
        %626 = vmatpush1.bf16.msra.mxu0 0
        %627 = vmatprep.subr.bf16.mxu0 0
        %628 = vmatpush1.bf16.msra.mxu0 0
        %629 = vmatprep.subr.bf16.mxu0 0
        %630 = vmatpush1.bf16.msra.mxu0 0
        %631 = vmatprep.subr.bf16.mxu0 0
        %632 = vmatpush1.bf16.msra.mxu0 0
        %633 = vmatprep.subr.bf16.mxu0 0
        %634 = vmatpush1.bf16.msra.mxu0 0
        %635 = vmatprep.subr.bf16.mxu0 0
        %636 = vmatpush1.bf16.msra.mxu0 0
        %637 = vmatprep.subr.bf16.mxu0 0
        %638 = vmatpush1.bf16.msra.mxu0 0
        %639 = vmatprep.mubr.bf16.mxu0 0
        %640 = vmatmul.mubr.bf16.gmra.mrb[0].mxu0 %v596
        %v641 = vpop.f32.mrb[0].mxu0
        %v642 = vadd.f32 0.0, %v641
        %v643 = vpop.f32.mrb[0].mxu0
        %v644 = vpop.f32.mrb[0].mxu0
        %v645 = vadd.f32 0.0, %v644
        %v646 = vpop.f32.mrb[0].mxu0
        %647 = vmatprep.mubr.bf16.mxu0 0
        %648 = vmatmul.mubr.bf16.gmra.mrb[0].mxu0 %v599
        %v649 = vpop.f32.mrb[0].mxu0
        %v650 = vadd.f32 0.0, %v649
        %v651 = vpop.f32.mrb[0].mxu0
        %v652 = vpop.f32.mrb[0].mxu0
        %v653 = vadd.f32 0.0, %v652
        %v654 = vpop.f32.mrb[0].mxu0
        %655 = vmatprep.mubr.bf16.mxu0 0
        %656 = vmatmul.mubr.bf16.gmra.mrb[0].mxu0 %v602
        %v657 = vpop.f32.mrb[0].mxu0
        %v658 = vadd.f32 0.0, %v657
        %v659 = vpop.f32.mrb[0].mxu0
        %v660 = vpop.f32.mrb[0].mxu0
        %v661 = vadd.f32 0.0, %v660
        %v662 = vpop.f32.mrb[0].mxu0
        %663 = vmatprep.mubr.bf16.mxu0 0
        %664 = vmatmul.mubr.bf16.gmra.mrb[0].mxu0 %v605
        %v665 = vpop.f32.mrb[0].mxu0
        %v666 = vadd.f32 0.0, %v665
        %v667 = vpop.f32.mrb[0].mxu0
        %v668 = vpop.f32.mrb[0].mxu0
        %v669 = vadd.f32 0.0, %v668
        %v670 = vpop.f32.mrb[0].mxu0
        %671 = vdwg.mxu0
        %v672 = vadd.f32 %v567, %v642
        %v673 = vadd.f32 %v568, %v645
        %v674 = vadd.f32 %v569, %v650
        %v675 = vadd.f32 %v570, %v653
        %v676 = vadd.f32 %v571, %v658
        %v677 = vadd.f32 %v572, %v661
        %v678 = vadd.f32 %v573, %v666
        %v679 = vadd.f32 %v574, %v669
        %v680 = vld [vmem:[%s6] sm:$0x1]
        %v682 = vlaneseq
        %v683 = vshrl.u32 %v682, 7
        %v684 = vsub.s32 0, %v683
        %v685 = vrot.slane %v680, %v684
        %v687 = vadd.f32 %v672, %v685
        %v688 = vadd.f32 %v673, %v685
        %v689 = vadd.f32 %v674, %v685
        %v690 = vadd.f32 %v675, %v685
        %v691 = vadd.f32 %v676, %v685
        %v692 = vadd.f32 %v677, %v685
        %v693 = vadd.f32 %v678, %v685
        %v694 = vadd.f32 %v679, %v685
        %v695 = vsel %vm489, %v687, 0.0
        %v696 = vsel %vm489, %v688, 0.0
        %v697 = vadd.f32 %v695, %v696
        %v698 = vsel %vm489, %v689, 0.0
        %v699 = vadd.f32 %v697, %v698
        %v700 = vsel %vm489, %v690, 0.0
        %v701 = vadd.f32 %v699, %v700
        %v702 = vsel %vm489, %v691, 0.0
        %v703 = vadd.f32 %v701, %v702
        %v704 = vsel %vm489, %v692, 0.0
        %v705 = vadd.f32 %v703, %v704
        %v706 = vsel %vm489, %v693, 0.0
        %v707 = vadd.f32 %v705, %v706
        %v708 = vsel %vm489, %v694, 0.0
        %v709 = vadd.f32 %v707, %v708
        %v710 = vrot.slane %v709, 4
        %v711 = vadd.f32 %v709, %v710
        %v712 = vrot.slane %v711, 2
        %v713 = vadd.f32 %v711, %v712
        %v714 = vrot.slane %v713, 1
        %v715 = vadd.f32 %v713, %v714
        %v716 = vld [vmem:[%s7] sm:$0xff]
        %v717 = vld [vmem:[%s7 + $0x8] sm:$0xff]
        %v718 = vld [vmem:[%s7 + $0x10] sm:$0xff]
        %v719 = vld [vmem:[%s7 + $0x18] sm:$0xff]
        %v721 = vsel %vm489, %v715, 0
        %723 = vmatprep.subr.mxu0 0.0
        %724 = vmatpush1.msra.mxu0 %v716
        %725 = vmatprep.subr.mxu0 0.0
        %726 = vmatpush1.msra.mxu0 %v717
        %727 = vmatprep.subr.mxu0 0.0
        %728 = vmatpush1.msra.mxu0 %v718
        %729 = vmatprep.subr.mxu0 0.0
        %730 = vmatpush1.msra.mxu0 %v719
        %731 = vmatprep.subr.mxu0 0.0
        %732 = vmatpush1.msra.mxu0 0.0
        %733 = vmatprep.subr.mxu0 0.0
        %734 = vmatpush1.msra.mxu0 0.0
        %735 = vmatprep.subr.mxu0 0.0
        %736 = vmatpush1.msra.mxu0 0.0
        %737 = vmatprep.subr.mxu0 0.0
        %738 = vmatpush1.msra.mxu0 0.0
        %739 = vmatprep.subr.mxu0 0.0
        %740 = vmatpush1.msra.mxu0 0.0
        %741 = vmatprep.subr.mxu0 0.0
        %742 = vmatpush1.msra.mxu0 0.0
        %743 = vmatprep.subr.mxu0 0.0
        %744 = vmatpush1.msra.mxu0 0.0
        %745 = vmatprep.subr.mxu0 0.0
        %746 = vmatpush1.msra.mxu0 0.0
        %747 = vmatprep.subr.mxu0 0.0
        %748 = vmatpush1.msra.mxu0 0.0
        %749 = vmatprep.subr.mxu0 0.0
        %750 = vmatpush1.msra.mxu0 0.0
        %751 = vmatprep.subr.mxu0 0.0
        %752 = vmatpush1.msra.mxu0 0.0
        %753 = vmatprep.subr.mxu0 0.0
        %754 = vmatpush1.msra.mxu0 0.0
        %755 = vmatprep.subr.mxu0 0.0
        %756 = vmatpush1.msra.mxu0 0.0
        %757 = vmatprep.subr.mxu0 0.0
        %758 = vmatpush1.msra.mxu0 0.0
        %759 = vmatprep.subr.mxu0 0.0
        %760 = vmatpush1.msra.mxu0 0.0
        %761 = vmatprep.subr.mxu0 0.0
        %762 = vmatpush1.msra.mxu0 0.0
        %763 = vmatprep.subr.mxu0 0.0
        %764 = vmatpush1.msra.mxu0 0.0
        %765 = vmatprep.subr.mxu0 0.0
        %766 = vmatpush1.msra.mxu0 0.0
        %767 = vmatprep.subr.mxu0 0.0
        %768 = vmatpush1.msra.mxu0 0.0
        %769 = vmatprep.subr.mxu0 0.0
        %770 = vmatpush1.msra.mxu0 0.0
        %771 = vmatprep.subr.mxu0 0.0
        %772 = vmatpush1.msra.mxu0 0.0
        %773 = vmatprep.subr.mxu0 0.0
        %774 = vmatpush1.msra.mxu0 0.0
        %775 = vmatprep.subr.mxu0 0.0
        %776 = vmatpush1.msra.mxu0 0.0
        %777 = vmatprep.subr.mxu0 0.0
        %778 = vmatpush1.msra.mxu0 0.0
        %779 = vmatprep.subr.mxu0 0.0
        %780 = vmatpush1.msra.mxu0 0.0
        %781 = vmatprep.subr.mxu0 0.0
        %782 = vmatpush1.msra.mxu0 0.0
        %783 = vmatprep.subr.mxu0 0.0
        %784 = vmatpush1.msra.mxu0 0.0
        %785 = vmatprep.subr.mxu0 0.0
        %786 = vmatpush1.msra.mxu0 0.0
        %787 = vmatprep.mubr.f32.mxu0 0.0
        %788 = vmatmul.mubr.f32.gmra.mrb[0].mxu0 %v721
        %v789 = vpop.f32.mrb[0].mxu0
        %v790 = vadd.f32 0.0, %v789
        %v791 = vpop.f32.mrb[0].mxu0
        %792 = vdwg.mxu0
        %v793 = vlaneseq
        %v794 = vshrl.u32 %v793, 7
        %v795 = vsub.s32 0, %v794
        %v796 = vrot.slane %v790, %v795
        %v797 = vsub.f32 %v687, %v796
        %v798 = vsub.f32 %v688, %v796
        %v799 = vsub.f32 %v689, %v796
        %v800 = vsub.f32 %v690, %v796
        %v801 = vsub.f32 %v691, %v796
        %v802 = vsub.f32 %v692, %v796
        %v803 = vsub.f32 %v693, %v796
        %v804 = vsub.f32 %v694, %v796
        %v805 = vmul.f32 %v797, %v797
        %v806 = vmul.f32 %v798, %v798
        %v807 = vmul.f32 %v799, %v799
        %v808 = vmul.f32 %v800, %v800
        %v809 = vmul.f32 %v801, %v801
        %v810 = vmul.f32 %v802, %v802
        %v811 = vmul.f32 %v803, %v803
        %v812 = vmul.f32 %v804, %v804
        %v813 = vsel %vm489, %v805, 0.0
        %v814 = vsel %vm489, %v806, 0.0
        %v815 = vadd.f32 %v813, %v814
        %v816 = vsel %vm489, %v807, 0.0
        %v817 = vadd.f32 %v815, %v816
        %v818 = vsel %vm489, %v808, 0.0
        %v819 = vadd.f32 %v817, %v818
        %v820 = vsel %vm489, %v809, 0.0
        %v821 = vadd.f32 %v819, %v820
        %v822 = vsel %vm489, %v810, 0.0
        %v823 = vadd.f32 %v821, %v822
        %v824 = vsel %vm489, %v811, 0.0
        %v825 = vadd.f32 %v823, %v824
        %v826 = vsel %vm489, %v812, 0.0
        %v827 = vadd.f32 %v825, %v826
        %v828 = vrot.slane %v827, 4
        %v829 = vadd.f32 %v827, %v828
        %v830 = vrot.slane %v829, 2
        %v831 = vadd.f32 %v829, %v830
        %v832 = vrot.slane %v831, 1
        %v833 = vadd.f32 %v831, %v832
        %v835 = vsel %vm489, %v833, 0
        %837 = vmatprep.subr.mxu0 0.0
        %838 = vmatpush1.msra.mxu0 %v716
        %839 = vmatprep.subr.mxu0 0.0
        %840 = vmatpush1.msra.mxu0 %v717
        %841 = vmatprep.subr.mxu0 0.0
        %842 = vmatpush1.msra.mxu0 %v718
        %843 = vmatprep.subr.mxu0 0.0
        %844 = vmatpush1.msra.mxu0 %v719
        %845 = vmatprep.subr.mxu0 0.0
        %846 = vmatpush1.msra.mxu0 0.0
        %847 = vmatprep.subr.mxu0 0.0
        %848 = vmatpush1.msra.mxu0 0.0
        %849 = vmatprep.subr.mxu0 0.0
        %850 = vmatpush1.msra.mxu0 0.0
        %851 = vmatprep.subr.mxu0 0.0
        %852 = vmatpush1.msra.mxu0 0.0
        %853 = vmatprep.subr.mxu0 0.0
        %854 = vmatpush1.msra.mxu0 0.0
        %855 = vmatprep.subr.mxu0 0.0
        %856 = vmatpush1.msra.mxu0 0.0
        %857 = vmatprep.subr.mxu0 0.0
        %858 = vmatpush1.msra.mxu0 0.0
        %859 = vmatprep.subr.mxu0 0.0
        %860 = vmatpush1.msra.mxu0 0.0
        %861 = vmatprep.subr.mxu0 0.0
        %862 = vmatpush1.msra.mxu0 0.0
        %863 = vmatprep.subr.mxu0 0.0
        %864 = vmatpush1.msra.mxu0 0.0
        %865 = vmatprep.subr.mxu0 0.0
        %866 = vmatpush1.msra.mxu0 0.0
        %867 = vmatprep.subr.mxu0 0.0
        %868 = vmatpush1.msra.mxu0 0.0
        %869 = vmatprep.subr.mxu0 0.0
        %870 = vmatpush1.msra.mxu0 0.0
        %871 = vmatprep.subr.mxu0 0.0
        %872 = vmatpush1.msra.mxu0 0.0
        %873 = vmatprep.subr.mxu0 0.0
        %874 = vmatpush1.msra.mxu0 0.0
        %875 = vmatprep.subr.mxu0 0.0
        %876 = vmatpush1.msra.mxu0 0.0
        %877 = vmatprep.subr.mxu0 0.0
        %878 = vmatpush1.msra.mxu0 0.0
        %879 = vmatprep.subr.mxu0 0.0
        %880 = vmatpush1.msra.mxu0 0.0
        %881 = vmatprep.subr.mxu0 0.0
        %882 = vmatpush1.msra.mxu0 0.0
        %883 = vmatprep.subr.mxu0 0.0
        %884 = vmatpush1.msra.mxu0 0.0
        %885 = vmatprep.subr.mxu0 0.0
        %886 = vmatpush1.msra.mxu0 0.0
        %887 = vmatprep.subr.mxu0 0.0
        %888 = vmatpush1.msra.mxu0 0.0
        %889 = vmatprep.subr.mxu0 0.0
        %890 = vmatpush1.msra.mxu0 0.0
        %891 = vmatprep.subr.mxu0 0.0
        %892 = vmatpush1.msra.mxu0 0.0
        %893 = vmatprep.subr.mxu0 0.0
        %894 = vmatpush1.msra.mxu0 0.0
        %895 = vmatprep.subr.mxu0 0.0
        %896 = vmatpush1.msra.mxu0 0.0
        %897 = vmatprep.subr.mxu0 0.0
        %898 = vmatpush1.msra.mxu0 0.0
        %899 = vmatprep.subr.mxu0 0.0
        %900 = vmatpush1.msra.mxu0 0.0
        %901 = vmatprep.mubr.f32.mxu0 0.0
        %902 = vmatmul.mubr.f32.gmra.mrb[0].mxu0 %v835
        %v903 = vpop.f32.mrb[0].mxu0
        %v904 = vadd.f32 1e-05, %v903
        %v905 = vpop.f32.mrb[0].mxu0
        %906 = vdwg.mxu0
        %v907 = vrsqrt.pop %v904
        %v908 = vlaneseq
        %v909 = vshrl.u32 %v908, 7
        %v910 = vsub.s32 0, %v909
        %v911 = vrot.slane %v907, %v910
        %v912 = vmul.f32 %v797, %v911
        %v913 = vmul.f32 %v798, %v911
        %v914 = vmul.f32 %v799, %v911
        %v915 = vmul.f32 %v800, %v911
        %v916 = vmul.f32 %v801, %v911
        %v917 = vmul.f32 %v802, %v911
        %v918 = vmul.f32 %v803, %v911
        %v919 = vmul.f32 %v804, %v911
        %v920 = vld [vmem:[%s8] sm:$0x1]
        %v922 = vlaneseq
        %v923 = vshrl.u32 %v922, 7
        %v924 = vsub.s32 0, %v923
        %v925 = vrot.slane %v920, %v924
        %v927 = vmul.f32 %v912, %v925
        %v928 = vmul.f32 %v913, %v925
        %v929 = vmul.f32 %v914, %v925
        %v930 = vmul.f32 %v915, %v925
        %v931 = vmul.f32 %v916, %v925
        %v932 = vmul.f32 %v917, %v925
        %v933 = vmul.f32 %v918, %v925
        %v934 = vmul.f32 %v919, %v925
        %v935 = vld [vmem:[%s9] sm:$0x1]
        %v937 = vlaneseq
        %v938 = vshrl.u32 %v937, 7
        %v939 = vsub.s32 0, %v938
        %v940 = vrot.slane %v935, %v939
        %v942 = vadd.f32 %v927, %v940
        %v943 = vadd.f32 %v928, %v940
        %v944 = vadd.f32 %v929, %v940
        %v945 = vadd.f32 %v930, %v940
        %v946 = vadd.f32 %v931, %v940
        %v947 = vadd.f32 %v932, %v940
        %v948 = vadd.f32 %v933, %v940
        %v949 = vadd.f32 %v934, %v940
        %v950 = vld [vmem:[%s3] sm:$0xf]
        %v951 = vld [vmem:[%s3 + $0x4] sm:$0xf]
        %v952 = vld [vmem:[%s3 + $0x8] sm:$0xf]
        %v953 = vld [vmem:[%s3 + $0xc] sm:$0xf]
        %v954 = vld [vmem:[%s3 + $0x10] sm:$0xf]
        %v955 = vld [vmem:[%s3 + $0x14] sm:$0xf]
        %v956 = vld [vmem:[%s3 + $0x18] sm:$0xf]
        %v957 = vld [vmem:[%s3 + $0x1c] sm:$0xf]
        %v958 = vld [vmem:[%s451] sm:$0xff]
        %v959 = vld [vmem:[%s451 + $0x8] sm:$0xff]
        %v960 = vpack.c.bf16 %v959, %v958
        %v969 = vunpack.c.l.b16 %v950
        %v970 = vunpack.c.l.b16 %v951
        %v971 = vunpack.c.l.b16 %v952
        %v972 = vunpack.c.l.b16 %v953
        %v973 = vunpack.c.l.b16 %v954
        %v974 = vunpack.c.l.b16 %v955
        %v975 = vunpack.c.l.b16 %v956
        %v976 = vunpack.c.l.b16 %v957
        %v977 = vpack.c.b16 %v970, %v969
        %v978 = vpack.c.b16 %v972, %v971
        %v979 = vpack.c.b16 %v974, %v973
        %v980 = vpack.c.b16 %v976, %v975
        %vm981 = vcmask 130048
        %v983 = vsel %vm981, %v977, 0
        %v986 = vsel %vm981, %v978, 0
        %v989 = vsel %vm981, %v979, 0
        %v992 = vsel %vm981, %v980, 0
        %994 = vmatprep.subr.bf16.mxu0 0
        %995 = vmatpush1.bf16.msra.mxu0 %v960
        %996 = vmatprep.subr.bf16.mxu0 0
        %997 = vmatpush1.bf16.msra.mxu0 0
        %998 = vmatprep.subr.bf16.mxu0 0
        %999 = vmatpush1.bf16.msra.mxu0 0
        %1000 = vmatprep.subr.bf16.mxu0 0
        %1001 = vmatpush1.bf16.msra.mxu0 0
        %1002 = vmatprep.subr.bf16.mxu0 0
        %1003 = vmatpush1.bf16.msra.mxu0 0
        %1004 = vmatprep.subr.bf16.mxu0 0
        %1005 = vmatpush1.bf16.msra.mxu0 0
        %1006 = vmatprep.subr.bf16.mxu0 0
        %1007 = vmatpush1.bf16.msra.mxu0 0
        %1008 = vmatprep.subr.bf16.mxu0 0
        %1009 = vmatpush1.bf16.msra.mxu0 0
        %1010 = vmatprep.subr.bf16.mxu0 0
        %1011 = vmatpush1.bf16.msra.mxu0 0
        %1012 = vmatprep.subr.bf16.mxu0 0
        %1013 = vmatpush1.bf16.msra.mxu0 0
        %1014 = vmatprep.subr.bf16.mxu0 0
        %1015 = vmatpush1.bf16.msra.mxu0 0
        %1016 = vmatprep.subr.bf16.mxu0 0
        %1017 = vmatpush1.bf16.msra.mxu0 0
        %1018 = vmatprep.subr.bf16.mxu0 0
        %1019 = vmatpush1.bf16.msra.mxu0 0
        %1020 = vmatprep.subr.bf16.mxu0 0
        %1021 = vmatpush1.bf16.msra.mxu0 0
        %1022 = vmatprep.subr.bf16.mxu0 0
        %1023 = vmatpush1.bf16.msra.mxu0 0
        %1024 = vmatprep.subr.bf16.mxu0 0
        %1025 = vmatpush1.bf16.msra.mxu0 0
        %1026 = vmatprep.mubr.bf16.mxu0 0
        %1027 = vmatmul.mubr.bf16.gmra.mrb[0].mxu0 %v983
        %v1028 = vpop.f32.mrb[0].mxu0
        %v1029 = vadd.f32 0.0, %v1028
        %v1030 = vpop.f32.mrb[0].mxu0
        %v1031 = vpop.f32.mrb[0].mxu0
        %v1032 = vadd.f32 0.0, %v1031
        %v1033 = vpop.f32.mrb[0].mxu0
        %1034 = vmatprep.mubr.bf16.mxu0 0
        %1035 = vmatmul.mubr.bf16.gmra.mrb[0].mxu0 %v986
        %v1036 = vpop.f32.mrb[0].mxu0
        %v1037 = vadd.f32 0.0, %v1036
        %v1038 = vpop.f32.mrb[0].mxu0
        %v1039 = vpop.f32.mrb[0].mxu0
        %v1040 = vadd.f32 0.0, %v1039
        %v1041 = vpop.f32.mrb[0].mxu0
        %1042 = vmatprep.mubr.bf16.mxu0 0
        %1043 = vmatmul.mubr.bf16.gmra.mrb[0].mxu0 %v989
        %v1044 = vpop.f32.mrb[0].mxu0
        %v1045 = vadd.f32 0.0, %v1044
        %v1046 = vpop.f32.mrb[0].mxu0
        %v1047 = vpop.f32.mrb[0].mxu0
        %v1048 = vadd.f32 0.0, %v1047
        %v1049 = vpop.f32.mrb[0].mxu0
        %1050 = vmatprep.mubr.bf16.mxu0 0
        %1051 = vmatmul.mubr.bf16.gmra.mrb[0].mxu0 %v992
        %v1052 = vpop.f32.mrb[0].mxu0
        %v1053 = vadd.f32 0.0, %v1052
        %v1054 = vpop.f32.mrb[0].mxu0
        %v1055 = vpop.f32.mrb[0].mxu0
        %v1056 = vadd.f32 0.0, %v1055
        %v1057 = vpop.f32.mrb[0].mxu0
        %1058 = vdwg.mxu0
        %v1059 = vpack.c.bf16 %v1032, %v1029
        %v1060 = vpack.c.bf16 %v1040, %v1037
        %v1061 = vpack.c.bf16 %v1048, %v1045
        %v1062 = vpack.c.bf16 %v1056, %v1053
        %v1063 = vld [vmem:[%s10] sm:$0xf]
        %v1064 = vld [vmem:[%s10 + $0x4] sm:$0xf]
        %v1065 = vld [vmem:[%s10 + $0x8] sm:$0xf]
        %v1066 = vld [vmem:[%s10 + $0xc] sm:$0xf]
        %v1071 = vunpack.c.l.b16 %v1063
        %v1072 = vunpack.c.l.b16 %v1064
        %v1073 = vunpack.c.l.b16 %v1065
        %v1074 = vunpack.c.l.b16 %v1066
        %v1075 = vpack.c.b16 %v1072, %v1071
        %v1076 = vpack.c.b16 %v1074, %v1073
        %v1080 = vsel %vm489, %v1059, 0
        %v1083 = vsel %vm489, %v1060, 0
        %v1086 = vsel %vm489, %v1061, 0
        %v1089 = vsel %vm489, %v1062, 0
        %1091 = vmatprep.subr.bf16.mxu0 0
        %1092 = vmatpush1.bf16.msra.mxu0 %v1075
        %1093 = vmatprep.subr.bf16.mxu0 0
        %1094 = vmatpush1.bf16.msra.mxu0 %v1076
        %1095 = vmatprep.subr.bf16.mxu0 0
        %1096 = vmatpush1.bf16.msra.mxu0 0
        %1097 = vmatprep.subr.bf16.mxu0 0
        %1098 = vmatpush1.bf16.msra.mxu0 0
        %1099 = vmatprep.subr.bf16.mxu0 0
        %1100 = vmatpush1.bf16.msra.mxu0 0
        %1101 = vmatprep.subr.bf16.mxu0 0
        %1102 = vmatpush1.bf16.msra.mxu0 0
        %1103 = vmatprep.subr.bf16.mxu0 0
        %1104 = vmatpush1.bf16.msra.mxu0 0
        %1105 = vmatprep.subr.bf16.mxu0 0
        %1106 = vmatpush1.bf16.msra.mxu0 0
        %1107 = vmatprep.subr.bf16.mxu0 0
        %1108 = vmatpush1.bf16.msra.mxu0 0
        %1109 = vmatprep.subr.bf16.mxu0 0
        %1110 = vmatpush1.bf16.msra.mxu0 0
        %1111 = vmatprep.subr.bf16.mxu0 0
        %1112 = vmatpush1.bf16.msra.mxu0 0
        %1113 = vmatprep.subr.bf16.mxu0 0
        %1114 = vmatpush1.bf16.msra.mxu0 0
        %1115 = vmatprep.subr.bf16.mxu0 0
        %1116 = vmatpush1.bf16.msra.mxu0 0
        %1117 = vmatprep.subr.bf16.mxu0 0
        %1118 = vmatpush1.bf16.msra.mxu0 0
        %1119 = vmatprep.subr.bf16.mxu0 0
        %1120 = vmatpush1.bf16.msra.mxu0 0
        %1121 = vmatprep.subr.bf16.mxu0 0
        %1122 = vmatpush1.bf16.msra.mxu0 0
        %1123 = vmatprep.mubr.bf16.mxu0 0
        %1124 = vmatmul.mubr.bf16.gmra.mrb[0].mxu0 %v1080
        %v1125 = vpop.f32.mrb[0].mxu0
        %v1126 = vadd.f32 0.0, %v1125
        %v1127 = vpop.f32.mrb[0].mxu0
        %v1128 = vpop.f32.mrb[0].mxu0
        %v1129 = vadd.f32 0.0, %v1128
        %v1130 = vpop.f32.mrb[0].mxu0
        %1131 = vmatprep.mubr.bf16.mxu0 0
        %1132 = vmatmul.mubr.bf16.gmra.mrb[0].mxu0 %v1083
        %v1133 = vpop.f32.mrb[0].mxu0
        %v1134 = vadd.f32 0.0, %v1133
        %v1135 = vpop.f32.mrb[0].mxu0
        %v1136 = vpop.f32.mrb[0].mxu0
        %v1137 = vadd.f32 0.0, %v1136
        %v1138 = vpop.f32.mrb[0].mxu0
        %1139 = vmatprep.mubr.bf16.mxu0 0
        %1140 = vmatmul.mubr.bf16.gmra.mrb[0].mxu0 %v1086
        %v1141 = vpop.f32.mrb[0].mxu0
        %v1142 = vadd.f32 0.0, %v1141
        %v1143 = vpop.f32.mrb[0].mxu0
        %v1144 = vpop.f32.mrb[0].mxu0
        %v1145 = vadd.f32 0.0, %v1144
        %v1146 = vpop.f32.mrb[0].mxu0
        %1147 = vmatprep.mubr.bf16.mxu0 0
        %1148 = vmatmul.mubr.bf16.gmra.mrb[0].mxu0 %v1089
        %v1149 = vpop.f32.mrb[0].mxu0
        %v1150 = vadd.f32 0.0, %v1149
        %v1151 = vpop.f32.mrb[0].mxu0
        %v1152 = vpop.f32.mrb[0].mxu0
        %v1153 = vadd.f32 0.0, %v1152
        %v1154 = vpop.f32.mrb[0].mxu0
        %1155 = vdwg.mxu0
        %v1156 = vadd.f32 %v942, %v1126
        %v1157 = vadd.f32 %v943, %v1129
        %v1158 = vadd.f32 %v944, %v1134
        %v1159 = vadd.f32 %v945, %v1137
        %v1160 = vadd.f32 %v946, %v1142
        %v1161 = vadd.f32 %v947, %v1145
        %v1162 = vadd.f32 %v948, %v1150
        %v1163 = vadd.f32 %v949, %v1153
        %v1164 = vld [vmem:[%s11] sm:$0x1]
        %v1166 = vlaneseq
        %v1167 = vshrl.u32 %v1166, 7
        %v1168 = vsub.s32 0, %v1167
        %v1169 = vrot.slane %v1164, %v1168
        %v1171 = vadd.f32 %v1156, %v1169
        %v1172 = vadd.f32 %v1157, %v1169
        %v1173 = vadd.f32 %v1158, %v1169
        %v1174 = vadd.f32 %v1159, %v1169
        %v1175 = vadd.f32 %v1160, %v1169
        %v1176 = vadd.f32 %v1161, %v1169
        %v1177 = vadd.f32 %v1162, %v1169
        %v1178 = vadd.f32 %v1163, %v1169
        %1179 = vst.msk [vmem:[%s436] sm:$0xff] %vm489, %v1171
        %1180 = vst.msk [vmem:[%s436 + $0x8] sm:$0xff] %vm489, %v1172
        %1181 = vst.msk [vmem:[%s436 + $0x10] sm:$0xff] %vm489, %v1173
        %1182 = vst.msk [vmem:[%s436 + $0x18] sm:$0xff] %vm489, %v1174
        %1183 = vst.msk [vmem:[%s436 + $0x20] sm:$0xff] %vm489, %v1175
        %1184 = vst.msk [vmem:[%s436 + $0x28] sm:$0xff] %vm489, %v1176
        %1185 = vst.msk [vmem:[%s436 + $0x30] sm:$0xff] %vm489, %v1177
        %1186 = vst.msk [vmem:[%s436 + $0x38] sm:$0xff] %vm489, %v1178
        %s1187 = sand.u32 %s301, 1
        %s1188 = scalar_lea.sflag [#allocation3], %s1187
        %s1189 = sand.u32 %s301, 1
        %s1190 = smul.addr %s1189, 64
        %s1191 = scalar_lea.vmem [#allocation2], %s1190
        // Predicated region
        $region69: #{basic_attention_layer.3} parent=67 // pred_check
          %p1192 = pneg %p311
        $region70: #{basic_attention_layer.3} parent=67 // pred_check_branch
          %1194 = sbr.rel (%p1192) target = $region72
        $region71: #{basic_attention_layer.3} parent=67 // pred_region
          %s1196 = ssub.s32 1024, 1024
          %1197 = vsyncadd %s1188, %s1196
          %s1198 = smul.addr %s26, 8
          %s1199 = smul.addr %s1198, 128
          %s1200 = scalar_lea.hbm %s12, %s1199
          %s1201 = sshll.u32 %s1191, 4
          %s1202 = int_to_ptr.vmem [resolvable:$true] %s1201
          %1207 = dma.vmem_to_hbm [thread:$0]  %s1202, 1024, %s1200, %s1188, 128, 128, 8
        $region72: #{basic_attention_layer.3} parent=67 // pred_fallthru
          _
      $region68: #{basic_attention_layer.3} parent=5 // pred_fallthru
        _
      %p1208 = scmp.le.s32.totalorder 2, %s21
      // Predicated region
      $region73: #{basic_attention_layer.3} parent=5 // pred_check
        %p1209 = pneg %p1208
      $region74: #{basic_attention_layer.3} parent=5 // pred_check_branch
        %1211 = sbr.rel (%p1209) target = $region76
      $region75: #{basic_attention_layer.3} parent=5 // pred_region
        %s1212 = ssub.s32 %s21, 2
        // Predicated region
        $region77: #{basic_attention_layer.3} parent=75 // pred_check
          %p1213 = pneg %p317
        $region78: #{basic_attention_layer.3} parent=75 // pred_check_branch
          %1215 = sbr.rel (%p1213) target = $region80
        $region79: #{basic_attention_layer.3} parent=75 // pred_region
          %s1216 = sand.u32 %s302, 1
          %s1217 = scalar_lea.sflag [#allocation3], %s1216
          %s1218 = sand.u32 %s302, 1
          %s1219 = smul.addr %s1218, 64
          %s1220 = scalar_lea.vmem [#allocation2], %s1219
          %1221 = dma.done %s1217, 1024
        $region80: #{basic_attention_layer.3} parent=75 // pred_fallthru
          _
      $region76: #{basic_attention_layer.3} parent=5 // pred_fallthru
        _
    $region6: #{basic_attention_layer.3} parent=1 // loop_footer
      %s25 = sadd.s32 1, %s21
    $region7: #{basic_attention_layer.3} parent=1 // loop_footer_branch
      %20 = sbr.rel target = $region3
    $region8: #{basic_attention_layer.3} parent=1 // loop_exit
      _
    %1222 = vsyncpa [#allocation3], 1
    %s1223 = scalar_lea.sflag [#allocation3], 1
    %1224 = vsyncpa %s1223, 1

</llo_original>
